<compile_context>
chip_gen: v7x
topology: tpu7x:2x2x1
jax: 0.10.0
libtpu: 0.0.40
codegen_flags: <defaults>
</compile_context>

<pallas_src>
import jax
import jax.numpy as jnp
from jax import lax
from jax.experimental import pallas as pl
from jax.experimental.pallas import tpu as pltpu

PRELU_ALPHA = 0.25  # nn.PReLU() default init (fixed; not a learnable param here)


def _prelu(x):
    return jnp.where(x > 0, x, PRELU_ALPHA * x)


def _sinkhorn_2d(o1, a1, o2, a2, iters, lamb, n):
    """Reference Sinkhorn for one (direction, batch) instance.

    o1, o2: (N, D) graph reps; a1, a2: (1, D) node reps.  Returns (1, 1).
    Column vectors (r, v) are (N, 1); row vectors (c, u) are (1, N) so no
    transposes are needed inside the iteration.
    """
    n1 = o1 / jnp.maximum(jnp.sqrt(jnp.sum(o1 * o1, axis=1, keepdims=True)), 1e-12)
    n2 = o2 / jnp.maximum(jnp.sqrt(jnp.sum(o2 * o2, axis=1, keepdims=True)), 1e-12)
    # sim[i, j] = <n1_i, n2_j> -- contract the lane dim of both operands.
    sim = lax.dot_general(n1, n2, (((1,), (1,)), ((), ())),
                          preferred_element_type=jnp.float32)          # (N, N)
    cost = 1.0 - sim
    # r = out1 @ avg_out2^T  -> column (N, 1)
    r = jnp.sum(o1 * a2, axis=1, keepdims=True)
    r = jnp.where(r <= 0.0, 1e-8, r)
    r = r / jnp.sum(r, axis=0, keepdims=True)
    # c = out2 @ avg_out1^T, kept as a row (1, N)
    c = lax.dot_general(a1, o2, (((1,), (1,)), ((), ())),
                        preferred_element_type=jnp.float32)            # (1, N)
    c = jnp.where(c <= 0.0, 1e-8, c)
    c = c / jnp.sum(c, axis=1, keepdims=True)
    P = jnp.exp(-lamb * cost)
    u = jnp.full((1, n), 1.0 / n, jnp.float32)                          # row
    v = jnp.zeros((n, 1), jnp.float32)                                  # column
    for _ in range(iters):
        Pu = jnp.sum(P * u, axis=1, keepdims=True)    # (N,1) = P @ u
        v = r / Pu
        PTv = jnp.sum(P * v, axis=0, keepdims=True)   # (1,N) = (P^T @ v)^T
        u = c / PTv
    t = v * (P * (1.0 - cost)) * u                    # transport * (1 - cost)
    return jnp.sum(jnp.sum(t, axis=1, keepdims=True), axis=0, keepdims=True)  # (1,1)


def _make_fused_kernel(B, S, n_in, n_h, hidden, negsamp_round,
                       temperature, sink_iters, lamb):
    N = S - 1
    inv_T = 1.0 / float(temperature)

    def kernel(f1_ref, a1_ref, r1_ref, f2_ref, a2_ref, r2_ref,
               wg_ref, bg_ref,
               w1_ref, b1_ref, w2_ref, b2_ref, w3_ref, b3_ref,
               wd_ref, bd_ref,
               recon1_ref, recon2_ref, disc1_ref, disc2_ref,
               loss1_ref, loss2_ref, sim1_ref, sim2_ref):
        # ---------------- GCN (shared weight loaded once) ----------------
        Wg = wg_ref[...]                     # (n_in, n_h)
        bg = bg_ref[...]                     # (1, n_h)

        def gcn(seq_ref, adj_ref, b):
            fts = jnp.dot(seq_ref[b], Wg, preferred_element_type=jnp.float32)
            out = jnp.dot(adj_ref[b], fts, preferred_element_type=jnp.float32) + bg
            return _prelu(out)               # (S, n_h)

        h1 = [gcn(f1_ref, a1_ref, b) for b in range(B)]
        h2 = [gcn(f2_ref, a2_ref, b) for b in range(B)]
        hr1 = [gcn(r1_ref, a1_ref, b) for b in range(B)]
        hr2 = [gcn(r2_ref, a2_ref, b) for b in range(B)]

        # -------- Decoder: both views batched as (2B, .) rows ------------
        # First Linear expressed as sum over s of row_s @ W1[s*n_h:(s+1)*n_h]
        # (equivalent to the torch reshape-then-Linear, no in-kernel reshape).
        hr_all = hr1 + hr2                   # 2B entries, each (S, n_h)
        acc = None
        for s in range(S - 2):
            rows_s = jnp.concatenate([h[s:s + 1, :] for h in hr_all], axis=0)  # (2B, n_h)
            term = jnp.dot(rows_s, w1_ref[s * n_h:(s + 1) * n_h, :],
                           preferred_element_type=jnp.float32)
            acc = term if acc is None else acc + term
        z = _prelu(acc + b1_ref[...])
        z = _prelu(jnp.dot(z, w2_ref[...], preferred_element_type=jnp.float32) + b2_ref[...])
        z = _prelu(jnp.dot(z, w3_ref[...], preferred_element_type=jnp.float32) + b3_ref[...])
        recon1_ref[...] = z[:B, :]
        recon2_ref[...] = z[B:, :]

        # -------- avg readout + Bilinear discriminator (per view) --------
        Wd = wd_ref[...]                     # (n_h, n_h)
        bd = bd_ref[...]                     # (1, 1)

        def disc(h_list, out_ref):
            h_node = jnp.concatenate([h[S - 1:S, :] for h in h_list], axis=0)   # (B, n_h)
            c = jnp.concatenate(
                [jnp.mean(h[:S - 1, :], axis=0, keepdims=True) for h in h_list],
                axis=0)                                                          # (B, n_h)
            m = jnp.dot(h_node, Wd, preferred_element_type=jnp.float32)          # hoisted once
            scs = [jnp.sum(m * c, axis=1, keepdims=True)]                         # positive
            c_cur = c
            for _ in range(negsamp_round):
                c_cur = jnp.concatenate([c_cur[B - 2:B - 1, :], c_cur[:B - 1, :]], axis=0)
                scs.append(jnp.sum(m * c_cur, axis=1, keepdims=True))
            out_ref[...] = jnp.concatenate(scs, axis=0) + bd                      # (R1*B, 1)

        disc(h1, disc1_ref)
        disc(h2, disc2_ref)

        # -------- InterViewLoss (have_neg=False): Sinkhorn both ways ------
        def split_graph_node(h):
            # swap last two rows; graph = first S-1 rows, node = last row
            hg = jnp.concatenate([h[:S - 2, :], h[S - 1:S, :]], axis=0)   # (S-1, n_h)
            hn = h[S - 2:S - 1, :]                                        # (1, n_h)
            return hg, hn

        sims1, sims2 = [], []
        for b in range(B):
            hg1, hn1 = split_graph_node(h1[b])
            hg2, hn2 = split_graph_node(h2[b])
            sims1.append(_sinkhorn_2d(hg1, hn1, hg2, hn2, sink_iters, lamb, N))
            sims2.append(_sinkhorn_2d(hg2, hn2, hg1, hn1, sink_iters, lamb, N))
        sim1 = jnp.concatenate(sims1, axis=0)          # (B, 1)
        sim2 = jnp.concatenate(sims2, axis=0)          # (B, 1)
        sim1_ref[...] = sim1
        sim2_ref[...] = sim2
        loss1_ref[...] = -jnp.log(jnp.exp(sim1 * inv_T))
        loss2_ref[...] = -jnp.log(jnp.exp(sim2 * inv_T))

    return kernel


# --------------------------------------------------------------------------
# Full model forward: ONE pallas_call, all intermediates stay in VMEM.
# --------------------------------------------------------------------------
def model_forward(params, feature1, adj1, raw1, size1, feature2, adj2, raw2, size2,
                  negsamp_round=1, temperature=0.4, sinkhorn_iters=5, lamb=20.0):
    if size1 != size2:
        # TODO(synk): different decoder networks per view would need a second
        # parameter set in the fused kernel; not required by this configuration.
        raise NotImplementedError("fused kernel assumes size1 == size2")

    B, S, n_in = feature1.shape
    gcn_p = params["gcn"]
    dec_p = params["decoder"][size1]
    disc_p = params["disc"]
    n_h = gcn_p["W"].shape[1]
    hidden = dec_p["W1"].shape[1]
    R1 = negsamp_round + 1

    kernel = _make_fused_kernel(B, S, n_in, n_h, hidden, negsamp_round,
                                float(temperature), int(sinkhorn_iters), float(lamb))

    def full_spec(shape):
        nd = len(shape)
        return pl.BlockSpec(tuple(shape), lambda i: (0,) * nd)

    in_arrays = (feature1, adj1, raw1, feature2, adj2, raw2,
                 gcn_p["W"], gcn_p["b"],
                 dec_p["W1"], dec_p["b1"], dec_p["W2"], dec_p["b2"],
                 dec_p["W3"], dec_p["b3"],
                 disc_p["W"], disc_p["bias"])

    out_shapes = (
        jax.ShapeDtypeStruct((B, n_in), jnp.float32),     # node_recons_1
        jax.ShapeDtypeStruct((B, n_in), jnp.float32),     # node_recons_2
        jax.ShapeDtypeStruct((R1 * B, 1), jnp.float32),   # disc_1
        jax.ShapeDtypeStruct((R1 * B, 1), jnp.float32),   # disc_2
        jax.ShapeDtypeStruct((B, 1), jnp.float32),        # inter_loss_1
        jax.ShapeDtypeStruct((B, 1), jnp.float32),        # inter_loss_2
        jax.ShapeDtypeStruct((B, 1), jnp.float32),        # sim_pos_1
        jax.ShapeDtypeStruct((B, 1), jnp.float32),        # sim_pos_2
    )

    outs = pl.pallas_call(
        kernel,
        out_shape=out_shapes,
        grid=(1,),
        in_specs=[full_spec(x.shape) for x in in_arrays],
        out_specs=tuple(full_spec(s.shape) for s in out_shapes),
        compiler_params=pltpu.CompilerParams(dimension_semantics=("arbitrary",)),
    )(*in_arrays)

    recon1, recon2, disc1, disc2, loss1, loss2, sim1, sim2 = outs
    # have_neg=False => sim_all == sim_pos in the reference.
    return (recon1, recon2, disc1, disc2, loss1, loss2, sim1, sim2, sim1, sim2)


# --------------------------------------------------------------------------
# Deterministic parameter init
# --------------------------------------------------------------------------
def _xavier_uniform(key, shape):
    fan_in, fan_out = shape
    limit = (6.0 / (fan_in + fan_out)) ** 0.5
    return jax.random.uniform(key, shape, jnp.float32, -limit, limit)


def init_params(key, n_in, n_h, hidden_size, subgraph_size):
    keys = jax.random.split(key, 8)
    gcn = {"W": _xavier_uniform(keys[0], (n_in, n_h)),
           "b": jnp.zeros((1, n_h), jnp.float32)}
    din = n_h * subgraph_size
    dec = {
        "W1": _xavier_uniform(keys[1], (din, hidden_size)),
        "b1": jnp.zeros((1, hidden_size), jnp.float32),
        "W2": _xavier_uniform(keys[2], (hidden_size, hidden_size)),
        "b2": jnp.zeros((1, hidden_size), jnp.float32),
        "W3": _xavier_uniform(keys[3], (hidden_size, n_in)),
        "b3": jnp.zeros((1, n_in), jnp.float32),
    }
    disc = {"W": _xavier_uniform(keys[4], (n_h, n_h)),
            "bias": jnp.zeros((1, 1), jnp.float32)}
    return {"gcn": gcn, "decoder": {subgraph_size: dec}, "disc": disc}


if __name__ == "__main__":
    B, n_in, n_h, hidden_size = 2, 16, 32, 128
    subgraph_size = 4
    S = subgraph_size + 2          # decoder expects n_h * subgraph_size inputs
    negsamp_round = 1

    key = jax.random.PRNGKey(0)
    kp, k1, k2, k3, k4, k5, k6 = jax.random.split(key, 7)
    params = init_params(kp, n_in, n_h, hidden_size, subgraph_size)

    feature1 = jax.random.normal(k1, (B, S, n_in), jnp.float32)
    feature2 = jax.random.normal(k2, (B, S, n_in), jnp.float32)
    raw1 = jax.random.normal(k3, (B, S, n_in), jnp.float32)
    raw2 = jax.random.normal(k4, (B, S, n_in), jnp.float32)
    adj1 = jax.nn.softmax(jax.random.normal(k5, (B, S, S), jnp.float32), axis=-1)
    adj2 = jax.nn.softmax(jax.random.normal(k6, (B, S, S), jnp.float32), axis=-1)

    outs = model_forward(params, feature1, adj1, raw1, subgraph_size,
                         feature2, adj2, raw2, subgraph_size,
                         negsamp_round=negsamp_round)
    jax.block_until_ready(outs)
    print("KERNEL_OK")
</pallas_src>

<mosaic_0001>
module attributes {stable_mosaic.version = 11 : i64} {
  func.func @kernel(%arg0: i32, %arg1: memref<2x6x16xf32, #tpu.memory_space<vmem>>, %arg2: memref<2x6x6xf32, #tpu.memory_space<vmem>>, %arg3: memref<2x6x16xf32, #tpu.memory_space<vmem>>, %arg4: memref<2x6x16xf32, #tpu.memory_space<vmem>>, %arg5: memref<2x6x6xf32, #tpu.memory_space<vmem>>, %arg6: memref<2x6x16xf32, #tpu.memory_space<vmem>>, %arg7: memref<16x32xf32, #tpu.memory_space<vmem>>, %arg8: memref<1x32xf32, #tpu.memory_space<vmem>>, %arg9: memref<128x128xf32, #tpu.memory_space<vmem>>, %arg10: memref<1x128xf32, #tpu.memory_space<vmem>>, %arg11: memref<128x128xf32, #tpu.memory_space<vmem>>, %arg12: memref<1x128xf32, #tpu.memory_space<vmem>>, %arg13: memref<128x16xf32, #tpu.memory_space<vmem>>, %arg14: memref<1x16xf32, #tpu.memory_space<vmem>>, %arg15: memref<32x32xf32, #tpu.memory_space<vmem>>, %arg16: memref<1x1xf32, #tpu.memory_space<vmem>>, %arg17: memref<2x16xf32, #tpu.memory_space<vmem>>, %arg18: memref<2x16xf32, #tpu.memory_space<vmem>>, %arg19: memref<4x1xf32, #tpu.memory_space<vmem>>, %arg20: memref<4x1xf32, #tpu.memory_space<vmem>>, %arg21: memref<2x1xf32, #tpu.memory_space<vmem>>, %arg22: memref<2x1xf32, #tpu.memory_space<vmem>>, %arg23: memref<2x1xf32, #tpu.memory_space<vmem>>, %arg24: memref<2x1xf32, #tpu.memory_space<vmem>>) attributes {dimension_semantics = [#tpu.dimension_semantics<arbitrary>], iteration_bounds = array<i64: 1>, scalar_prefetch = 0 : i64, scratch_operands = 0 : i64, tpu.core_type = #tpu.core_type<tc>, window_params = [{pipeline_mode = #tpu.pipeline_mode<synchronous>, transform_indices = @transform_0, window_bounds = array<i64: 2, 6, 16>}, {pipeline_mode = #tpu.pipeline_mode<synchronous>, transform_indices = @transform_1, window_bounds = array<i64: 2, 6, 6>}, {pipeline_mode = #tpu.pipeline_mode<synchronous>, transform_indices = @transform_2, window_bounds = array<i64: 2, 6, 16>}, {pipeline_mode = #tpu.pipeline_mode<synchronous>, transform_indices = @transform_3, window_bounds = array<i64: 2, 6, 16>}, {pipeline_mode = #tpu.pipeline_mode<synchronous>, transform_indices = @transform_4, window_bounds = array<i64: 2, 6, 6>}, {pipeline_mode = #tpu.pipeline_mode<synchronous>, transform_indices = @transform_5, window_bounds = array<i64: 2, 6, 16>}, {pipeline_mode = #tpu.pipeline_mode<synchronous>, transform_indices = @transform_6, window_bounds = array<i64: 16, 32>}, {pipeline_mode = #tpu.pipeline_mode<synchronous>, transform_indices = @transform_7, window_bounds = array<i64: 1, 32>}, {pipeline_mode = #tpu.pipeline_mode<synchronous>, transform_indices = @transform_8, window_bounds = array<i64: 128, 128>}, {pipeline_mode = #tpu.pipeline_mode<synchronous>, transform_indices = @transform_9, window_bounds = array<i64: 1, 128>}, {pipeline_mode = #tpu.pipeline_mode<synchronous>, transform_indices = @transform_10, window_bounds = array<i64: 128, 128>}, {pipeline_mode = #tpu.pipeline_mode<synchronous>, transform_indices = @transform_11, window_bounds = array<i64: 1, 128>}, {pipeline_mode = #tpu.pipeline_mode<synchronous>, transform_indices = @transform_12, window_bounds = array<i64: 128, 16>}, {pipeline_mode = #tpu.pipeline_mode<synchronous>, transform_indices = @transform_13, window_bounds = array<i64: 1, 16>}, {pipeline_mode = #tpu.pipeline_mode<synchronous>, transform_indices = @transform_14, window_bounds = array<i64: 32, 32>}, {pipeline_mode = #tpu.pipeline_mode<synchronous>, transform_indices = @transform_15, window_bounds = array<i64: 1, 1>}, {pipeline_mode = #tpu.pipeline_mode<synchronous>, transform_indices = @transform_16, window_bounds = array<i64: 2, 16>}, {pipeline_mode = #tpu.pipeline_mode<synchronous>, transform_indices = @transform_17, window_bounds = array<i64: 2, 16>}, {pipeline_mode = #tpu.pipeline_mode<synchronous>, transform_indices = @transform_18, window_bounds = array<i64: 4, 1>}, {pipeline_mode = #tpu.pipeline_mode<synchronous>, transform_indices = @transform_19, window_bounds = array<i64: 4, 1>}, {pipeline_mode = #tpu.pipeline_mode<synchronous>, transform_indices = @transform_20, window_bounds = array<i64: 2, 1>}, {pipeline_mode = #tpu.pipeline_mode<synchronous>, transform_indices = @transform_21, window_bounds = array<i64: 2, 1>}, {pipeline_mode = #tpu.pipeline_mode<synchronous>, transform_indices = @transform_22, window_bounds = array<i64: 2, 1>}, {pipeline_mode = #tpu.pipeline_mode<synchronous>, transform_indices = @transform_23, window_bounds = array<i64: 2, 1>}]} {
    %c0 = arith.constant 0 : index
    %c0_0 = arith.constant 0 : index
    %0 = vector.load %arg7[%c0, %c0_0] : memref<16x32xf32, #tpu.memory_space<vmem>>, vector<16x32xf32>
    %c0_1 = arith.constant 0 : index
    %c0_2 = arith.constant 0 : index
    %1 = vector.load %arg8[%c0_1, %c0_2] : memref<1x32xf32, #tpu.memory_space<vmem>>, vector<1x32xf32>
    %c0_3 = arith.constant 0 : index
    %c0_4 = arith.constant 0 : index
    %c0_5 = arith.constant 0 : index
    %2 = vector.load %arg1[%c0_3, %c0_4, %c0_5] : memref<2x6x16xf32, #tpu.memory_space<vmem>>, vector<1x6x16xf32>
    %3 = vector.shape_cast %2 : vector<1x6x16xf32> to vector<6x16xf32>
    %cst = arith.constant dense<0.000000e+00> : vector<6x32xf32>
    %4 = tpu.matmul %3, %0, %cst {dimension_numbers = #tpu.dot_dimension_numbers<[1], [0], [0], [1], [0, 0, 1, 1], [], []>} : vector<6x16xf32>, vector<16x32xf32>, vector<6x32xf32> -> vector<6x32xf32>
    %c0_6 = arith.constant 0 : index
    %c0_7 = arith.constant 0 : index
    %c0_8 = arith.constant 0 : index
    %5 = vector.load %arg2[%c0_6, %c0_7, %c0_8] : memref<2x6x6xf32, #tpu.memory_space<vmem>>, vector<1x6x6xf32>
    %6 = vector.shape_cast %5 : vector<1x6x6xf32> to vector<6x6xf32>
    %cst_9 = arith.constant dense<0.000000e+00> : vector<6x32xf32>
    %7 = tpu.matmul %6, %4, %cst_9 {dimension_numbers = #tpu.dot_dimension_numbers<[1], [0], [0], [1], [0, 0, 1, 1], [], []>} : vector<6x6xf32>, vector<6x32xf32>, vector<6x32xf32> -> vector<6x32xf32>
    %8 = vector.broadcast %1 : vector<1x32xf32> to vector<6x32xf32>
    %9 = arith.addf %7, %8 : vector<6x32xf32>
    %cst_10 = arith.constant 0.000000e+00 : f32
    %10 = vector.broadcast %cst_10 : f32 to vector<6x32xf32>
    %11 = arith.cmpf ogt, %9, %10 : vector<6x32xf32>
    %cst_11 = arith.constant 2.500000e-01 : f32
    %12 = vector.broadcast %cst_11 : f32 to vector<6x32xf32>
    %13 = arith.mulf %12, %9 : vector<6x32xf32>
    %14 = arith.select %11, %9, %13 : vector<6x32xi1>, vector<6x32xf32>
    %c1 = arith.constant 1 : index
    %c0_12 = arith.constant 0 : index
    %c0_13 = arith.constant 0 : index
    %15 = vector.load %arg1[%c1, %c0_12, %c0_13] : memref<2x6x16xf32, #tpu.memory_space<vmem>>, vector<1x6x16xf32>
    %16 = vector.shape_cast %15 : vector<1x6x16xf32> to vector<6x16xf32>
    %cst_14 = arith.constant dense<0.000000e+00> : vector<6x32xf32>
    %17 = tpu.matmul %16, %0, %cst_14 {dimension_numbers = #tpu.dot_dimension_numbers<[1], [0], [0], [1], [0, 0, 1, 1], [], []>} : vector<6x16xf32>, vector<16x32xf32>, vector<6x32xf32> -> vector<6x32xf32>
    %c1_15 = arith.constant 1 : index
    %c0_16 = arith.constant 0 : index
    %c0_17 = arith.constant 0 : index
    %18 = vector.load %arg2[%c1_15, %c0_16, %c0_17] : memref<2x6x6xf32, #tpu.memory_space<vmem>>, vector<1x6x6xf32>
    %19 = vector.shape_cast %18 : vector<1x6x6xf32> to vector<6x6xf32>
    %cst_18 = arith.constant dense<0.000000e+00> : vector<6x32xf32>
    %20 = tpu.matmul %19, %17, %cst_18 {dimension_numbers = #tpu.dot_dimension_numbers<[1], [0], [0], [1], [0, 0, 1, 1], [], []>} : vector<6x6xf32>, vector<6x32xf32>, vector<6x32xf32> -> vector<6x32xf32>
    %21 = vector.broadcast %1 : vector<1x32xf32> to vector<6x32xf32>
    %22 = arith.addf %20, %21 : vector<6x32xf32>
    %cst_19 = arith.constant 0.000000e+00 : f32
    %23 = vector.broadcast %cst_19 : f32 to vector<6x32xf32>
    %24 = arith.cmpf ogt, %22, %23 : vector<6x32xf32>
    %cst_20 = arith.constant 2.500000e-01 : f32
    %25 = vector.broadcast %cst_20 : f32 to vector<6x32xf32>
    %26 = arith.mulf %25, %22 : vector<6x32xf32>
    %27 = arith.select %24, %22, %26 : vector<6x32xi1>, vector<6x32xf32>
    %c0_21 = arith.constant 0 : index
    %c0_22 = arith.constant 0 : index
    %c0_23 = arith.constant 0 : index
    %28 = vector.load %arg4[%c0_21, %c0_22, %c0_23] : memref<2x6x16xf32, #tpu.memory_space<vmem>>, vector<1x6x16xf32>
    %29 = vector.shape_cast %28 : vector<1x6x16xf32> to vector<6x16xf32>
    %cst_24 = arith.constant dense<0.000000e+00> : vector<6x32xf32>
    %30 = tpu.matmul %29, %0, %cst_24 {dimension_numbers = #tpu.dot_dimension_numbers<[1], [0], [0], [1], [0, 0, 1, 1], [], []>} : vector<6x16xf32>, vector<16x32xf32>, vector<6x32xf32> -> vector<6x32xf32>
    %c0_25 = arith.constant 0 : index
    %c0_26 = arith.constant 0 : index
    %c0_27 = arith.constant 0 : index
    %31 = vector.load %arg5[%c0_25, %c0_26, %c0_27] : memref<2x6x6xf32, #tpu.memory_space<vmem>>, vector<1x6x6xf32>
    %32 = vector.shape_cast %31 : vector<1x6x6xf32> to vector<6x6xf32>
    %cst_28 = arith.constant dense<0.000000e+00> : vector<6x32xf32>
    %33 = tpu.matmul %32, %30, %cst_28 {dimension_numbers = #tpu.dot_dimension_numbers<[1], [0], [0], [1], [0, 0, 1, 1], [], []>} : vector<6x6xf32>, vector<6x32xf32>, vector<6x32xf32> -> vector<6x32xf32>
    %34 = vector.broadcast %1 : vector<1x32xf32> to vector<6x32xf32>
    %35 = arith.addf %33, %34 : vector<6x32xf32>
    %cst_29 = arith.constant 0.000000e+00 : f32
    %36 = vector.broadcast %cst_29 : f32 to vector<6x32xf32>
    %37 = arith.cmpf ogt, %35, %36 : vector<6x32xf32>
    %cst_30 = arith.constant 2.500000e-01 : f32
    %38 = vector.broadcast %cst_30 : f32 to vector<6x32xf32>
    %39 = arith.mulf %38, %35 : vector<6x32xf32>
    %40 = arith.select %37, %35, %39 : vector<6x32xi1>, vector<6x32xf32>
    %c1_31 = arith.constant 1 : index
    %c0_32 = arith.constant 0 : index
    %c0_33 = arith.constant 0 : index
    %41 = vector.load %arg4[%c1_31, %c0_32, %c0_33] : memref<2x6x16xf32, #tpu.memory_space<vmem>>, vector<1x6x16xf32>
    %42 = vector.shape_cast %41 : vector<1x6x16xf32> to vector<6x16xf32>
    %cst_34 = arith.constant dense<0.000000e+00> : vector<6x32xf32>
    %43 = tpu.matmul %42, %0, %cst_34 {dimension_numbers = #tpu.dot_dimension_numbers<[1], [0], [0], [1], [0, 0, 1, 1], [], []>} : vector<6x16xf32>, vector<16x32xf32>, vector<6x32xf32> -> vector<6x32xf32>
    %c1_35 = arith.constant 1 : index
    %c0_36 = arith.constant 0 : index
    %c0_37 = arith.constant 0 : index
    %44 = vector.load %arg5[%c1_35, %c0_36, %c0_37] : memref<2x6x6xf32, #tpu.memory_space<vmem>>, vector<1x6x6xf32>
    %45 = vector.shape_cast %44 : vector<1x6x6xf32> to vector<6x6xf32>
    %cst_38 = arith.constant dense<0.000000e+00> : vector<6x32xf32>
    %46 = tpu.matmul %45, %43, %cst_38 {dimension_numbers = #tpu.dot_dimension_numbers<[1], [0], [0], [1], [0, 0, 1, 1], [], []>} : vector<6x6xf32>, vector<6x32xf32>, vector<6x32xf32> -> vector<6x32xf32>
    %47 = vector.broadcast %1 : vector<1x32xf32> to vector<6x32xf32>
    %48 = arith.addf %46, %47 : vector<6x32xf32>
    %cst_39 = arith.constant 0.000000e+00 : f32
    %49 = vector.broadcast %cst_39 : f32 to vector<6x32xf32>
    %50 = arith.cmpf ogt, %48, %49 : vector<6x32xf32>
    %cst_40 = arith.constant 2.500000e-01 : f32
    %51 = vector.broadcast %cst_40 : f32 to vector<6x32xf32>
    %52 = arith.mulf %51, %48 : vector<6x32xf32>
    %53 = arith.select %50, %48, %52 : vector<6x32xi1>, vector<6x32xf32>
    %c0_41 = arith.constant 0 : index
    %c0_42 = arith.constant 0 : index
    %c0_43 = arith.constant 0 : index
    %54 = vector.load %arg3[%c0_41, %c0_42, %c0_43] : memref<2x6x16xf32, #tpu.memory_space<vmem>>, vector<1x6x16xf32>
    %55 = vector.shape_cast %54 : vector<1x6x16xf32> to vector<6x16xf32>
    %cst_44 = arith.constant dense<0.000000e+00> : vector<6x32xf32>
    %56 = tpu.matmul %55, %0, %cst_44 {dimension_numbers = #tpu.dot_dimension_numbers<[1], [0], [0], [1], [0, 0, 1, 1], [], []>} : vector<6x16xf32>, vector<16x32xf32>, vector<6x32xf32> -> vector<6x32xf32>
    %c0_45 = arith.constant 0 : index
    %c0_46 = arith.constant 0 : index
    %c0_47 = arith.constant 0 : index
    %57 = vector.load %arg2[%c0_45, %c0_46, %c0_47] : memref<2x6x6xf32, #tpu.memory_space<vmem>>, vector<1x6x6xf32>
    %58 = vector.shape_cast %57 : vector<1x6x6xf32> to vector<6x6xf32>
    %cst_48 = arith.constant dense<0.000000e+00> : vector<6x32xf32>
    %59 = tpu.matmul %58, %56, %cst_48 {dimension_numbers = #tpu.dot_dimension_numbers<[1], [0], [0], [1], [0, 0, 1, 1], [], []>} : vector<6x6xf32>, vector<6x32xf32>, vector<6x32xf32> -> vector<6x32xf32>
    %60 = vector.broadcast %1 : vector<1x32xf32> to vector<6x32xf32>
    %61 = arith.addf %59, %60 : vector<6x32xf32>
    %cst_49 = arith.constant 0.000000e+00 : f32
    %62 = vector.broadcast %cst_49 : f32 to vector<6x32xf32>
    %63 = arith.cmpf ogt, %61, %62 : vector<6x32xf32>
    %cst_50 = arith.constant 2.500000e-01 : f32
    %64 = vector.broadcast %cst_50 : f32 to vector<6x32xf32>
    %65 = arith.mulf %64, %61 : vector<6x32xf32>
    %66 = arith.select %63, %61, %65 : vector<6x32xi1>, vector<6x32xf32>
    %c1_51 = arith.constant 1 : index
    %c0_52 = arith.constant 0 : index
    %c0_53 = arith.constant 0 : index
    %67 = vector.load %arg3[%c1_51, %c0_52, %c0_53] : memref<2x6x16xf32, #tpu.memory_space<vmem>>, vector<1x6x16xf32>
    %68 = vector.shape_cast %67 : vector<1x6x16xf32> to vector<6x16xf32>
    %cst_54 = arith.constant dense<0.000000e+00> : vector<6x32xf32>
    %69 = tpu.matmul %68, %0, %cst_54 {dimension_numbers = #tpu.dot_dimension_numbers<[1], [0], [0], [1], [0, 0, 1, 1], [], []>} : vector<6x16xf32>, vector<16x32xf32>, vector<6x32xf32> -> vector<6x32xf32>
    %c1_55 = arith.constant 1 : index
    %c0_56 = arith.constant 0 : index
    %c0_57 = arith.constant 0 : index
    %70 = vector.load %arg2[%c1_55, %c0_56, %c0_57] : memref<2x6x6xf32, #tpu.memory_space<vmem>>, vector<1x6x6xf32>
    %71 = vector.shape_cast %70 : vector<1x6x6xf32> to vector<6x6xf32>
    %cst_58 = arith.constant dense<0.000000e+00> : vector<6x32xf32>
    %72 = tpu.matmul %71, %69, %cst_58 {dimension_numbers = #tpu.dot_dimension_numbers<[1], [0], [0], [1], [0, 0, 1, 1], [], []>} : vector<6x6xf32>, vector<6x32xf32>, vector<6x32xf32> -> vector<6x32xf32>
    %73 = vector.broadcast %1 : vector<1x32xf32> to vector<6x32xf32>
    %74 = arith.addf %72, %73 : vector<6x32xf32>
    %cst_59 = arith.constant 0.000000e+00 : f32
    %75 = vector.broadcast %cst_59 : f32 to vector<6x32xf32>
    %76 = arith.cmpf ogt, %74, %75 : vector<6x32xf32>
    %cst_60 = arith.constant 2.500000e-01 : f32
    %77 = vector.broadcast %cst_60 : f32 to vector<6x32xf32>
    %78 = arith.mulf %77, %74 : vector<6x32xf32>
    %79 = arith.select %76, %74, %78 : vector<6x32xi1>, vector<6x32xf32>
    %c0_61 = arith.constant 0 : index
    %c0_62 = arith.constant 0 : index
    %c0_63 = arith.constant 0 : index
    %80 = vector.load %arg6[%c0_61, %c0_62, %c0_63] : memref<2x6x16xf32, #tpu.memory_space<vmem>>, vector<1x6x16xf32>
    %81 = vector.shape_cast %80 : vector<1x6x16xf32> to vector<6x16xf32>
    %cst_64 = arith.constant dense<0.000000e+00> : vector<6x32xf32>
    %82 = tpu.matmul %81, %0, %cst_64 {dimension_numbers = #tpu.dot_dimension_numbers<[1], [0], [0], [1], [0, 0, 1, 1], [], []>} : vector<6x16xf32>, vector<16x32xf32>, vector<6x32xf32> -> vector<6x32xf32>
    %c0_65 = arith.constant 0 : index
    %c0_66 = arith.constant 0 : index
    %c0_67 = arith.constant 0 : index
    %83 = vector.load %arg5[%c0_65, %c0_66, %c0_67] : memref<2x6x6xf32, #tpu.memory_space<vmem>>, vector<1x6x6xf32>
    %84 = vector.shape_cast %83 : vector<1x6x6xf32> to vector<6x6xf32>
    %cst_68 = arith.constant dense<0.000000e+00> : vector<6x32xf32>
    %85 = tpu.matmul %84, %82, %cst_68 {dimension_numbers = #tpu.dot_dimension_numbers<[1], [0], [0], [1], [0, 0, 1, 1], [], []>} : vector<6x6xf32>, vector<6x32xf32>, vector<6x32xf32> -> vector<6x32xf32>
    %86 = vector.broadcast %1 : vector<1x32xf32> to vector<6x32xf32>
    %87 = arith.addf %85, %86 : vector<6x32xf32>
    %cst_69 = arith.constant 0.000000e+00 : f32
    %88 = vector.broadcast %cst_69 : f32 to vector<6x32xf32>
    %89 = arith.cmpf ogt, %87, %88 : vector<6x32xf32>
    %cst_70 = arith.constant 2.500000e-01 : f32
    %90 = vector.broadcast %cst_70 : f32 to vector<6x32xf32>
    %91 = arith.mulf %90, %87 : vector<6x32xf32>
    %92 = arith.select %89, %87, %91 : vector<6x32xi1>, vector<6x32xf32>
    %c1_71 = arith.constant 1 : index
    %c0_72 = arith.constant 0 : index
    %c0_73 = arith.constant 0 : index
    %93 = vector.load %arg6[%c1_71, %c0_72, %c0_73] : memref<2x6x16xf32, #tpu.memory_space<vmem>>, vector<1x6x16xf32>
    %94 = vector.shape_cast %93 : vector<1x6x16xf32> to vector<6x16xf32>
    %cst_74 = arith.constant dense<0.000000e+00> : vector<6x32xf32>
    %95 = tpu.matmul %94, %0, %cst_74 {dimension_numbers = #tpu.dot_dimension_numbers<[1], [0], [0], [1], [0, 0, 1, 1], [], []>} : vector<6x16xf32>, vector<16x32xf32>, vector<6x32xf32> -> vector<6x32xf32>
    %c1_75 = arith.constant 1 : index
    %c0_76 = arith.constant 0 : index
    %c0_77 = arith.constant 0 : index
    %96 = vector.load %arg5[%c1_75, %c0_76, %c0_77] : memref<2x6x6xf32, #tpu.memory_space<vmem>>, vector<1x6x6xf32>
    %97 = vector.shape_cast %96 : vector<1x6x6xf32> to vector<6x6xf32>
    %cst_78 = arith.constant dense<0.000000e+00> : vector<6x32xf32>
    %98 = tpu.matmul %97, %95, %cst_78 {dimension_numbers = #tpu.dot_dimension_numbers<[1], [0], [0], [1], [0, 0, 1, 1], [], []>} : vector<6x6xf32>, vector<6x32xf32>, vector<6x32xf32> -> vector<6x32xf32>
    %99 = vector.broadcast %1 : vector<1x32xf32> to vector<6x32xf32>
    %100 = arith.addf %98, %99 : vector<6x32xf32>
    %cst_79 = arith.constant 0.000000e+00 : f32
    %101 = vector.broadcast %cst_79 : f32 to vector<6x32xf32>
    %102 = arith.cmpf ogt, %100, %101 : vector<6x32xf32>
    %cst_80 = arith.constant 2.500000e-01 : f32
    %103 = vector.broadcast %cst_80 : f32 to vector<6x32xf32>
    %104 = arith.mulf %103, %100 : vector<6x32xf32>
    %105 = arith.select %102, %100, %104 : vector<6x32xi1>, vector<6x32xf32>
    %106 = vector.extract_strided_slice %66 {offsets = [0, 0], sizes = [1, 32], strides = [1, 1]} : vector<6x32xf32> to vector<1x32xf32>
    %107 = vector.extract_strided_slice %79 {offsets = [0, 0], sizes = [1, 32], strides = [1, 1]} : vector<6x32xf32> to vector<1x32xf32>
    %108 = vector.extract_strided_slice %92 {offsets = [0, 0], sizes = [1, 32], strides = [1, 1]} : vector<6x32xf32> to vector<1x32xf32>
    %109 = vector.extract_strided_slice %105 {offsets = [0, 0], sizes = [1, 32], strides = [1, 1]} : vector<6x32xf32> to vector<1x32xf32>
    %110 = tpu.concatenate %106, %107, %108, %109 in 0 : vector<1x32xf32>, vector<1x32xf32>, vector<1x32xf32>, vector<1x32xf32> -> vector<4x32xf32>
    %c0_81 = arith.constant 0 : index
    %c0_82 = arith.constant 0 : index
    %111 = vector.load %arg9[%c0_81, %c0_82] : memref<128x128xf32, #tpu.memory_space<vmem>>, vector<32x128xf32>
    %cst_83 = arith.constant dense<0.000000e+00> : vector<4x128xf32>
    %112 = tpu.matmul %110, %111, %cst_83 {dimension_numbers = #tpu.dot_dimension_numbers<[1], [0], [0], [1], [0, 0, 1, 1], [], []>} : vector<4x32xf32>, vector<32x128xf32>, vector<4x128xf32> -> vector<4x128xf32>
    %113 = vector.extract_strided_slice %66 {offsets = [1, 0], sizes = [1, 32], strides = [1, 1]} : vector<6x32xf32> to vector<1x32xf32>
    %114 = vector.extract_strided_slice %79 {offsets = [1, 0], sizes = [1, 32], strides = [1, 1]} : vector<6x32xf32> to vector<1x32xf32>
    %115 = vector.extract_strided_slice %92 {offsets = [1, 0], sizes = [1, 32], strides = [1, 1]} : vector<6x32xf32> to vector<1x32xf32>
    %116 = vector.extract_strided_slice %105 {offsets = [1, 0], sizes = [1, 32], strides = [1, 1]} : vector<6x32xf32> to vector<1x32xf32>
    %117 = tpu.concatenate %113, %114, %115, %116 in 0 : vector<1x32xf32>, vector<1x32xf32>, vector<1x32xf32>, vector<1x32xf32> -> vector<4x32xf32>
    %c32 = arith.constant 32 : index
    %c0_84 = arith.constant 0 : index
    %118 = vector.load %arg9[%c32, %c0_84] : memref<128x128xf32, #tpu.memory_space<vmem>>, vector<32x128xf32>
    %cst_85 = arith.constant dense<0.000000e+00> : vector<4x128xf32>
    %119 = tpu.matmul %117, %118, %cst_85 {dimension_numbers = #tpu.dot_dimension_numbers<[1], [0], [0], [1], [0, 0, 1, 1], [], []>} : vector<4x32xf32>, vector<32x128xf32>, vector<4x128xf32> -> vector<4x128xf32>
    %120 = arith.addf %112, %119 : vector<4x128xf32>
    %121 = vector.extract_strided_slice %66 {offsets = [2, 0], sizes = [1, 32], strides = [1, 1]} : vector<6x32xf32> to vector<1x32xf32>
    %122 = vector.extract_strided_slice %79 {offsets = [2, 0], sizes = [1, 32], strides = [1, 1]} : vector<6x32xf32> to vector<1x32xf32>
    %123 = vector.extract_strided_slice %92 {offsets = [2, 0], sizes = [1, 32], strides = [1, 1]} : vector<6x32xf32> to vector<1x32xf32>
    %124 = vector.extract_strided_slice %105 {offsets = [2, 0], sizes = [1, 32], strides = [1, 1]} : vector<6x32xf32> to vector<1x32xf32>
    %125 = tpu.concatenate %121, %122, %123, %124 in 0 : vector<1x32xf32>, vector<1x32xf32>, vector<1x32xf32>, vector<1x32xf32> -> vector<4x32xf32>
    %c64 = arith.constant 64 : index
    %c0_86 = arith.constant 0 : index
    %126 = vector.load %arg9[%c64, %c0_86] : memref<128x128xf32, #tpu.memory_space<vmem>>, vector<32x128xf32>
    %cst_87 = arith.constant dense<0.000000e+00> : vector<4x128xf32>
    %127 = tpu.matmul %125, %126, %cst_87 {dimension_numbers = #tpu.dot_dimension_numbers<[1], [0], [0], [1], [0, 0, 1, 1], [], []>} : vector<4x32xf32>, vector<32x128xf32>, vector<4x128xf32> -> vector<4x128xf32>
    %128 = arith.addf %120, %127 : vector<4x128xf32>
    %129 = vector.extract_strided_slice %66 {offsets = [3, 0], sizes = [1, 32], strides = [1, 1]} : vector<6x32xf32> to vector<1x32xf32>
    %130 = vector.extract_strided_slice %79 {offsets = [3, 0], sizes = [1, 32], strides = [1, 1]} : vector<6x32xf32> to vector<1x32xf32>
    %131 = vector.extract_strided_slice %92 {offsets = [3, 0], sizes = [1, 32], strides = [1, 1]} : vector<6x32xf32> to vector<1x32xf32>
    %132 = vector.extract_strided_slice %105 {offsets = [3, 0], sizes = [1, 32], strides = [1, 1]} : vector<6x32xf32> to vector<1x32xf32>
    %133 = tpu.concatenate %129, %130, %131, %132 in 0 : vector<1x32xf32>, vector<1x32xf32>, vector<1x32xf32>, vector<1x32xf32> -> vector<4x32xf32>
    %c96 = arith.constant 96 : index
    %c0_88 = arith.constant 0 : index
    %134 = vector.load %arg9[%c96, %c0_88] : memref<128x128xf32, #tpu.memory_space<vmem>>, vector<32x128xf32>
    %cst_89 = arith.constant dense<0.000000e+00> : vector<4x128xf32>
    %135 = tpu.matmul %133, %134, %cst_89 {dimension_numbers = #tpu.dot_dimension_numbers<[1], [0], [0], [1], [0, 0, 1, 1], [], []>} : vector<4x32xf32>, vector<32x128xf32>, vector<4x128xf32> -> vector<4x128xf32>
    %136 = arith.addf %128, %135 : vector<4x128xf32>
    %c0_90 = arith.constant 0 : index
    %c0_91 = arith.constant 0 : index
    %137 = vector.load %arg10[%c0_90, %c0_91] : memref<1x128xf32, #tpu.memory_space<vmem>>, vector<1x128xf32>
    %138 = vector.broadcast %137 : vector<1x128xf32> to vector<4x128xf32>
    %139 = arith.addf %136, %138 : vector<4x128xf32>
    %cst_92 = arith.constant 0.000000e+00 : f32
    %140 = vector.broadcast %cst_92 : f32 to vector<4x128xf32>
    %141 = arith.cmpf ogt, %139, %140 : vector<4x128xf32>
    %cst_93 = arith.constant 2.500000e-01 : f32
    %142 = vector.broadcast %cst_93 : f32 to vector<4x128xf32>
    %143 = arith.mulf %142, %139 : vector<4x128xf32>
    %144 = arith.select %141, %139, %143 : vector<4x128xi1>, vector<4x128xf32>
    %c0_94 = arith.constant 0 : index
    %c0_95 = arith.constant 0 : index
    %145 = vector.load %arg11[%c0_94, %c0_95] : memref<128x128xf32, #tpu.memory_space<vmem>>, vector<128x128xf32>
    %cst_96 = arith.constant dense<0.000000e+00> : vector<4x128xf32>
    %146 = tpu.matmul %144, %145, %cst_96 {dimension_numbers = #tpu.dot_dimension_numbers<[1], [0], [0], [1], [0, 0, 1, 1], [], []>} : vector<4x128xf32>, vector<128x128xf32>, vector<4x128xf32> -> vector<4x128xf32>
    %c0_97 = arith.constant 0 : index
    %c0_98 = arith.constant 0 : index
    %147 = vector.load %arg12[%c0_97, %c0_98] : memref<1x128xf32, #tpu.memory_space<vmem>>, vector<1x128xf32>
    %148 = vector.broadcast %147 : vector<1x128xf32> to vector<4x128xf32>
    %149 = arith.addf %146, %148 : vector<4x128xf32>
    %cst_99 = arith.constant 0.000000e+00 : f32
    %150 = vector.broadcast %cst_99 : f32 to vector<4x128xf32>
    %151 = arith.cmpf ogt, %149, %150 : vector<4x128xf32>
    %cst_100 = arith.constant 2.500000e-01 : f32
    %152 = vector.broadcast %cst_100 : f32 to vector<4x128xf32>
    %153 = arith.mulf %152, %149 : vector<4x128xf32>
    %154 = arith.select %151, %149, %153 : vector<4x128xi1>, vector<4x128xf32>
    %c0_101 = arith.constant 0 : index
    %c0_102 = arith.constant 0 : index
    %155 = vector.load %arg13[%c0_101, %c0_102] : memref<128x16xf32, #tpu.memory_space<vmem>>, vector<128x16xf32>
    %cst_103 = arith.constant dense<0.000000e+00> : vector<4x16xf32>
    %156 = tpu.matmul %154, %155, %cst_103 {dimension_numbers = #tpu.dot_dimension_numbers<[1], [0], [0], [1], [0, 0, 1, 1], [], []>} : vector<4x128xf32>, vector<128x16xf32>, vector<4x16xf32> -> vector<4x16xf32>
    %c0_104 = arith.constant 0 : index
    %c0_105 = arith.constant 0 : index
    %157 = vector.load %arg14[%c0_104, %c0_105] : memref<1x16xf32, #tpu.memory_space<vmem>>, vector<1x16xf32>
    %158 = vector.broadcast %157 : vector<1x16xf32> to vector<4x16xf32>
    %159 = arith.addf %156, %158 : vector<4x16xf32>
    %cst_106 = arith.constant 0.000000e+00 : f32
    %160 = vector.broadcast %cst_106 : f32 to vector<4x16xf32>
    %161 = arith.cmpf ogt, %159, %160 : vector<4x16xf32>
    %cst_107 = arith.constant 2.500000e-01 : f32
    %162 = vector.broadcast %cst_107 : f32 to vector<4x16xf32>
    %163 = arith.mulf %162, %159 : vector<4x16xf32>
    %164 = arith.select %161, %159, %163 : vector<4x16xi1>, vector<4x16xf32>
    %165 = vector.extract_strided_slice %164 {offsets = [0, 0], sizes = [2, 16], strides = [1, 1]} : vector<4x16xf32> to vector<2x16xf32>
    %c0_108 = arith.constant 0 : index
    %c0_109 = arith.constant 0 : index
    %166 = vector.load %arg17[%c0_108, %c0_109] : memref<2x16xf32, #tpu.memory_space<vmem>>, vector<2x16xf32>
    tpu.vector_store %arg17[%c0_108, %c0_109], %165 {strides = array<i32>} : memref<2x16xf32, #tpu.memory_space<vmem>>, vector<2x16xf32>,
    %167 = vector.extract_strided_slice %164 {offsets = [2, 0], sizes = [2, 16], strides = [1, 1]} : vector<4x16xf32> to vector<2x16xf32>
    %c0_110 = arith.constant 0 : index
    %c0_111 = arith.constant 0 : index
    %168 = vector.load %arg18[%c0_110, %c0_111] : memref<2x16xf32, #tpu.memory_space<vmem>>, vector<2x16xf32>
    tpu.vector_store %arg18[%c0_110, %c0_111], %167 {strides = array<i32>} : memref<2x16xf32, #tpu.memory_space<vmem>>, vector<2x16xf32>,
    %c0_112 = arith.constant 0 : index
    %c0_113 = arith.constant 0 : index
    %169 = vector.load %arg15[%c0_112, %c0_113] : memref<32x32xf32, #tpu.memory_space<vmem>>, vector<32x32xf32>
    %c0_114 = arith.constant 0 : index
    %c0_115 = arith.constant 0 : index
    %170 = vector.load %arg16[%c0_114, %c0_115] : memref<1x1xf32, #tpu.memory_space<vmem>>, vector<1x1xf32>
    %171 = vector.extract_strided_slice %14 {offsets = [5, 0], sizes = [1, 32], strides = [1, 1]} : vector<6x32xf32> to vector<1x32xf32>
    %172 = vector.extract_strided_slice %27 {offsets = [5, 0], sizes = [1, 32], strides = [1, 1]} : vector<6x32xf32> to vector<1x32xf32>
    %173 = tpu.concatenate %171, %172 in 0 : vector<1x32xf32>, vector<1x32xf32> -> vector<2x32xf32>
    %174 = vector.extract_strided_slice %14 {offsets = [0, 0], sizes = [5, 32], strides = [1, 1]} : vector<6x32xf32> to vector<5x32xf32>
    %cst_116 = arith.constant dense<0.000000e+00> : vector<32xf32>
    %175 = vector.multi_reduction <add>, %174, %cst_116 [0] : vector<5x32xf32> to vector<32xf32>
    %176 = vector.shape_cast %175 : vector<32xf32> to vector<1x32xf32>
    %cst_117 = arith.constant 5.000000e+00 : f32
    %177 = vector.broadcast %cst_117 : f32 to vector<1x32xf32>
    %178 = arith.divf %176, %177 : vector<1x32xf32>
    %179 = vector.extract_strided_slice %27 {offsets = [0, 0], sizes = [5, 32], strides = [1, 1]} : vector<6x32xf32> to vector<5x32xf32>
    %cst_118 = arith.constant dense<0.000000e+00> : vector<32xf32>
    %180 = vector.multi_reduction <add>, %179, %cst_118 [0] : vector<5x32xf32> to vector<32xf32>
    %181 = vector.shape_cast %180 : vector<32xf32> to vector<1x32xf32>
    %cst_119 = arith.constant 5.000000e+00 : f32
    %182 = vector.broadcast %cst_119 : f32 to vector<1x32xf32>
    %183 = arith.divf %181, %182 : vector<1x32xf32>
    %184 = tpu.concatenate %178, %183 in 0 : vector<1x32xf32>, vector<1x32xf32> -> vector<2x32xf32>
    %cst_120 = arith.constant dense<0.000000e+00> : vector<2x32xf32>
    %185 = tpu.matmul %173, %169, %cst_120 {dimension_numbers = #tpu.dot_dimension_numbers<[1], [0], [0], [1], [0, 0, 1, 1], [], []>} : vector<2x32xf32>, vector<32x32xf32>, vector<2x32xf32> -> vector<2x32xf32>
    %186 = arith.mulf %185, %184 : vector<2x32xf32>
    %cst_121 = arith.constant dense<0.000000e+00> : vector<2xf32>
    %187 = vector.multi_reduction <add>, %186, %cst_121 [1] : vector<2x32xf32> to vector<2xf32>
    %188 = vector.shape_cast %187 : vector<2xf32> to vector<2x1xf32>
    %189 = vector.extract_strided_slice %184 {offsets = [0, 0], sizes = [1, 32], strides = [1, 1]} : vector<2x32xf32> to vector<1x32xf32>
    %190 = vector.extract_strided_slice %184 {offsets = [0, 0], sizes = [1, 32], strides = [1, 1]} : vector<2x32xf32> to vector<1x32xf32>
    %191 = tpu.concatenate %189, %190 in 0 : vector<1x32xf32>, vector<1x32xf32> -> vector<2x32xf32>
    %192 = arith.mulf %185, %191 : vector<2x32xf32>
    %cst_122 = arith.constant dense<0.000000e+00> : vector<2xf32>
    %193 = vector.multi_reduction <add>, %192, %cst_122 [1] : vector<2x32xf32> to vector<2xf32>
    %194 = vector.shape_cast %193 : vector<2xf32> to vector<2x1xf32>
    %195 = tpu.concatenate %188, %194 in 0 : vector<2x1xf32>, vector<2x1xf32> -> vector<4x1xf32>
    %196 = vector.broadcast %170 : vector<1x1xf32> to vector<4x1xf32>
    %197 = arith.addf %195, %196 : vector<4x1xf32>
    %c0_123 = arith.constant 0 : index
    %c0_124 = arith.constant 0 : index
    %198 = vector.load %arg19[%c0_123, %c0_124] : memref<4x1xf32, #tpu.memory_space<vmem>>, vector<4x1xf32>
    tpu.vector_store %arg19[%c0_123, %c0_124], %197 {strides = array<i32>} : memref<4x1xf32, #tpu.memory_space<vmem>>, vector<4x1xf32>,
    %199 = vector.extract_strided_slice %40 {offsets = [5, 0], sizes = [1, 32], strides = [1, 1]} : vector<6x32xf32> to vector<1x32xf32>
    %200 = vector.extract_strided_slice %53 {offsets = [5, 0], sizes = [1, 32], strides = [1, 1]} : vector<6x32xf32> to vector<1x32xf32>
    %201 = tpu.concatenate %199, %200 in 0 : vector<1x32xf32>, vector<1x32xf32> -> vector<2x32xf32>
    %202 = vector.extract_strided_slice %40 {offsets = [0, 0], sizes = [5, 32], strides = [1, 1]} : vector<6x32xf32> to vector<5x32xf32>
    %cst_125 = arith.constant dense<0.000000e+00> : vector<32xf32>
    %203 = vector.multi_reduction <add>, %202, %cst_125 [0] : vector<5x32xf32> to vector<32xf32>
    %204 = vector.shape_cast %203 : vector<32xf32> to vector<1x32xf32>
    %cst_126 = arith.constant 5.000000e+00 : f32
    %205 = vector.broadcast %cst_126 : f32 to vector<1x32xf32>
    %206 = arith.divf %204, %205 : vector<1x32xf32>
    %207 = vector.extract_strided_slice %53 {offsets = [0, 0], sizes = [5, 32], strides = [1, 1]} : vector<6x32xf32> to vector<5x32xf32>
    %cst_127 = arith.constant dense<0.000000e+00> : vector<32xf32>
    %208 = vector.multi_reduction <add>, %207, %cst_127 [0] : vector<5x32xf32> to vector<32xf32>
    %209 = vector.shape_cast %208 : vector<32xf32> to vector<1x32xf32>
    %cst_128 = arith.constant 5.000000e+00 : f32
    %210 = vector.broadcast %cst_128 : f32 to vector<1x32xf32>
    %211 = arith.divf %209, %210 : vector<1x32xf32>
    %212 = tpu.concatenate %206, %211 in 0 : vector<1x32xf32>, vector<1x32xf32> -> vector<2x32xf32>
    %cst_129 = arith.constant dense<0.000000e+00> : vector<2x32xf32>
    %213 = tpu.matmul %201, %169, %cst_129 {dimension_numbers = #tpu.dot_dimension_numbers<[1], [0], [0], [1], [0, 0, 1, 1], [], []>} : vector<2x32xf32>, vector<32x32xf32>, vector<2x32xf32> -> vector<2x32xf32>
    %214 = arith.mulf %213, %212 : vector<2x32xf32>
    %cst_130 = arith.constant dense<0.000000e+00> : vector<2xf32>
    %215 = vector.multi_reduction <add>, %214, %cst_130 [1] : vector<2x32xf32> to vector<2xf32>
    %216 = vector.shape_cast %215 : vector<2xf32> to vector<2x1xf32>
    %217 = vector.extract_strided_slice %212 {offsets = [0, 0], sizes = [1, 32], strides = [1, 1]} : vector<2x32xf32> to vector<1x32xf32>
    %218 = vector.extract_strided_slice %212 {offsets = [0, 0], sizes = [1, 32], strides = [1, 1]} : vector<2x32xf32> to vector<1x32xf32>
    %219 = tpu.concatenate %217, %218 in 0 : vector<1x32xf32>, vector<1x32xf32> -> vector<2x32xf32>
    %220 = arith.mulf %213, %219 : vector<2x32xf32>
    %cst_131 = arith.constant dense<0.000000e+00> : vector<2xf32>
    %221 = vector.multi_reduction <add>, %220, %cst_131 [1] : vector<2x32xf32> to vector<2xf32>
    %222 = vector.shape_cast %221 : vector<2xf32> to vector<2x1xf32>
    %223 = tpu.concatenate %216, %222 in 0 : vector<2x1xf32>, vector<2x1xf32> -> vector<4x1xf32>
    %224 = vector.broadcast %170 : vector<1x1xf32> to vector<4x1xf32>
    %225 = arith.addf %223, %224 : vector<4x1xf32>
    %c0_132 = arith.constant 0 : index
    %c0_133 = arith.constant 0 : index
    %226 = vector.load %arg20[%c0_132, %c0_133] : memref<4x1xf32, #tpu.memory_space<vmem>>, vector<4x1xf32>
    tpu.vector_store %arg20[%c0_132, %c0_133], %225 {strides = array<i32>} : memref<4x1xf32, #tpu.memory_space<vmem>>, vector<4x1xf32>,
    %227 = vector.extract_strided_slice %14 {offsets = [0, 0], sizes = [4, 32], strides = [1, 1]} : vector<6x32xf32> to vector<4x32xf32>
    %228 = vector.extract_strided_slice %14 {offsets = [5, 0], sizes = [1, 32], strides = [1, 1]} : vector<6x32xf32> to vector<1x32xf32>
    %229 = tpu.concatenate %227, %228 in 0 : vector<4x32xf32>, vector<1x32xf32> -> vector<5x32xf32>
    %230 = vector.extract_strided_slice %14 {offsets = [4, 0], sizes = [1, 32], strides = [1, 1]} : vector<6x32xf32> to vector<1x32xf32>
    %231 = vector.extract_strided_slice %40 {offsets = [0, 0], sizes = [4, 32], strides = [1, 1]} : vector<6x32xf32> to vector<4x32xf32>
    %232 = vector.extract_strided_slice %40 {offsets = [5, 0], sizes = [1, 32], strides = [1, 1]} : vector<6x32xf32> to vector<1x32xf32>
    %233 = tpu.concatenate %231, %232 in 0 : vector<4x32xf32>, vector<1x32xf32> -> vector<5x32xf32>
    %234 = vector.extract_strided_slice %40 {offsets = [4, 0], sizes = [1, 32], strides = [1, 1]} : vector<6x32xf32> to vector<1x32xf32>
    %235 = arith.mulf %229, %229 : vector<5x32xf32>
    %cst_134 = arith.constant dense<0.000000e+00> : vector<5xf32>
    %236 = vector.multi_reduction <add>, %235, %cst_134 [1] : vector<5x32xf32> to vector<5xf32>
    %237 = vector.shape_cast %236 : vector<5xf32> to vector<5x1xf32>
    %238 = math.sqrt %237 : vector<5x1xf32>
    %cst_135 = arith.constant 9.99999996E-13 : f32
    %239 = vector.broadcast %cst_135 : f32 to vector<5x1xf32>
    %240 = arith.maximumf %238, %239 : vector<5x1xf32>
    %241 = vector.broadcast %240 : vector<5x1xf32> to vector<5x32xf32>
    %242 = arith.divf %229, %241 : vector<5x32xf32>
    %243 = arith.mulf %233, %233 : vector<5x32xf32>
    %cst_136 = arith.constant dense<0.000000e+00> : vector<5xf32>
    %244 = vector.multi_reduction <add>, %243, %cst_136 [1] : vector<5x32xf32> to vector<5xf32>
    %245 = vector.shape_cast %244 : vector<5xf32> to vector<5x1xf32>
    %246 = math.sqrt %245 : vector<5x1xf32>
    %cst_137 = arith.constant 9.99999996E-13 : f32
    %247 = vector.broadcast %cst_137 : f32 to vector<5x1xf32>
    %248 = arith.maximumf %246, %247 : vector<5x1xf32>
    %249 = vector.broadcast %248 : vector<5x1xf32> to vector<5x32xf32>
    %250 = arith.divf %233, %249 : vector<5x32xf32>
    %cst_138 = arith.constant dense<0.000000e+00> : vector<5x5xf32>
    %251 = tpu.matmul %242, %250, %cst_138 {dimension_numbers = #tpu.dot_dimension_numbers<[1], [1], [0], [0], [0, 0, 1, 0], [], []>} : vector<5x32xf32>, vector<5x32xf32>, vector<5x5xf32> -> vector<5x5xf32>
    %cst_139 = arith.constant 1.000000e+00 : f32
    %252 = vector.broadcast %cst_139 : f32 to vector<5x5xf32>
    %253 = arith.subf %252, %251 : vector<5x5xf32>
    %254 = vector.broadcast %234 : vector<1x32xf32> to vector<5x32xf32>
    %255 = arith.mulf %229, %254 : vector<5x32xf32>
    %cst_140 = arith.constant dense<0.000000e+00> : vector<5xf32>
    %256 = vector.multi_reduction <add>, %255, %cst_140 [1] : vector<5x32xf32> to vector<5xf32>
    %257 = vector.shape_cast %256 : vector<5xf32> to vector<5x1xf32>
    %cst_141 = arith.constant 0.000000e+00 : f32
    %258 = vector.broadcast %cst_141 : f32 to vector<5x1xf32>
    %259 = arith.cmpf ole, %257, %258 : vector<5x1xf32>
    %cst_142 = arith.constant 9.99999993E-9 : f32
    %260 = vector.broadcast %cst_142 : f32 to vector<5x1xf32>
    %261 = arith.select %259, %260, %257 : vector<5x1xi1>, vector<5x1xf32>
    %cst_143 = arith.constant dense<0.000000e+00> : vector<1xf32>
    %262 = vector.multi_reduction <add>, %261, %cst_143 [0] : vector<5x1xf32> to vector<1xf32>
    %263 = vector.shape_cast %262 : vector<1xf32> to vector<1x1xf32>
    %264 = vector.broadcast %263 : vector<1x1xf32> to vector<5x1xf32>
    %265 = arith.divf %261, %264 : vector<5x1xf32>
    %cst_144 = arith.constant dense<0.000000e+00> : vector<1x5xf32>
    %266 = tpu.matmul %230, %233, %cst_144 {dimension_numbers = #tpu.dot_dimension_numbers<[1], [1], [0], [0], [0, 0, 1, 0], [], []>} : vector<1x32xf32>, vector<5x32xf32>, vector<1x5xf32> -> vector<1x5xf32>
    %cst_145 = arith.constant 0.000000e+00 : f32
    %267 = vector.broadcast %cst_145 : f32 to vector<1x5xf32>
    %268 = arith.cmpf ole, %266, %267 : vector<1x5xf32>
    %cst_146 = arith.constant 9.99999993E-9 : f32
    %269 = vector.broadcast %cst_146 : f32 to vector<1x5xf32>
    %270 = arith.select %268, %269, %266 : vector<1x5xi1>, vector<1x5xf32>
    %cst_147 = arith.constant dense<0.000000e+00> : vector<1xf32>
    %271 = vector.multi_reduction <add>, %270, %cst_147 [1] : vector<1x5xf32> to vector<1xf32>
    %272 = vector.shape_cast %271 : vector<1xf32> to vector<1x1xf32>
    %273 = vector.broadcast %272 : vector<1x1xf32> to vector<1x5xf32>
    %274 = arith.divf %270, %273 : vector<1x5xf32>
    %cst_148 = arith.constant -2.000000e+01 : f32
    %275 = vector.broadcast %cst_148 : f32 to vector<5x5xf32>
    %276 = arith.mulf %275, %253 : vector<5x5xf32>
    %277 = math.exp %276 : vector<5x5xf32>
    %cst_149 = arith.constant 2.000000e-01 : f32
    %278 = vector.broadcast %cst_149 : f32 to vector<1x5xf32>
    %279 = vector.broadcast %278 : vector<1x5xf32> to vector<5x5xf32>
    %280 = arith.mulf %277, %279 : vector<5x5xf32>
    %cst_150 = arith.constant dense<0.000000e+00> : vector<5xf32>
    %281 = vector.multi_reduction <add>, %280, %cst_150 [1] : vector<5x5xf32> to vector<5xf32>
    %282 = vector.shape_cast %281 : vector<5xf32> to vector<5x1xf32>
    %283 = arith.divf %265, %282 : vector<5x1xf32>
    %284 = vector.broadcast %283 : vector<5x1xf32> to vector<5x5xf32>
    %285 = arith.mulf %277, %284 : vector<5x5xf32>
    %cst_151 = arith.constant dense<0.000000e+00> : vector<5xf32>
    %286 = vector.multi_reduction <add>, %285, %cst_151 [0] : vector<5x5xf32> to vector<5xf32>
    %287 = vector.shape_cast %286 : vector<5xf32> to vector<1x5xf32>
    %288 = arith.divf %274, %287 : vector<1x5xf32>
    %289 = vector.broadcast %288 : vector<1x5xf32> to vector<5x5xf32>
    %290 = arith.mulf %277, %289 : vector<5x5xf32>
    %cst_152 = arith.constant dense<0.000000e+00> : vector<5xf32>
    %291 = vector.multi_reduction <add>, %290, %cst_152 [1] : vector<5x5xf32> to vector<5xf32>
    %292 = vector.shape_cast %291 : vector<5xf32> to vector<5x1xf32>
    %293 = arith.divf %265, %292 : vector<5x1xf32>
    %294 = vector.broadcast %293 : vector<5x1xf32> to vector<5x5xf32>
    %295 = arith.mulf %277, %294 : vector<5x5xf32>
    %cst_153 = arith.constant dense<0.000000e+00> : vector<5xf32>
    %296 = vector.multi_reduction <add>, %295, %cst_153 [0] : vector<5x5xf32> to vector<5xf32>
    %297 = vector.shape_cast %296 : vector<5xf32> to vector<1x5xf32>
    %298 = arith.divf %274, %297 : vector<1x5xf32>
    %299 = vector.broadcast %298 : vector<1x5xf32> to vector<5x5xf32>
    %300 = arith.mulf %277, %299 : vector<5x5xf32>
    %cst_154 = arith.constant dense<0.000000e+00> : vector<5xf32>
    %301 = vector.multi_reduction <add>, %300, %cst_154 [1] : vector<5x5xf32> to vector<5xf32>
    %302 = vector.shape_cast %301 : vector<5xf32> to vector<5x1xf32>
    %303 = arith.divf %265, %302 : vector<5x1xf32>
    %304 = vector.broadcast %303 : vector<5x1xf32> to vector<5x5xf32>
    %305 = arith.mulf %277, %304 : vector<5x5xf32>
    %cst_155 = arith.constant dense<0.000000e+00> : vector<5xf32>
    %306 = vector.multi_reduction <add>, %305, %cst_155 [0] : vector<5x5xf32> to vector<5xf32>
    %307 = vector.shape_cast %306 : vector<5xf32> to vector<1x5xf32>
    %308 = arith.divf %274, %307 : vector<1x5xf32>
    %309 = vector.broadcast %308 : vector<1x5xf32> to vector<5x5xf32>
    %310 = arith.mulf %277, %309 : vector<5x5xf32>
    %cst_156 = arith.constant dense<0.000000e+00> : vector<5xf32>
    %311 = vector.multi_reduction <add>, %310, %cst_156 [1] : vector<5x5xf32> to vector<5xf32>
    %312 = vector.shape_cast %311 : vector<5xf32> to vector<5x1xf32>
    %313 = arith.divf %265, %312 : vector<5x1xf32>
    %314 = vector.broadcast %313 : vector<5x1xf32> to vector<5x5xf32>
    %315 = arith.mulf %277, %314 : vector<5x5xf32>
    %cst_157 = arith.constant dense<0.000000e+00> : vector<5xf32>
    %316 = vector.multi_reduction <add>, %315, %cst_157 [0] : vector<5x5xf32> to vector<5xf32>
    %317 = vector.shape_cast %316 : vector<5xf32> to vector<1x5xf32>
    %318 = arith.divf %274, %317 : vector<1x5xf32>
    %319 = vector.broadcast %318 : vector<1x5xf32> to vector<5x5xf32>
    %320 = arith.mulf %277, %319 : vector<5x5xf32>
    %cst_158 = arith.constant dense<0.000000e+00> : vector<5xf32>
    %321 = vector.multi_reduction <add>, %320, %cst_158 [1] : vector<5x5xf32> to vector<5xf32>
    %322 = vector.shape_cast %321 : vector<5xf32> to vector<5x1xf32>
    %323 = arith.divf %265, %322 : vector<5x1xf32>
    %324 = vector.broadcast %323 : vector<5x1xf32> to vector<5x5xf32>
    %325 = arith.mulf %277, %324 : vector<5x5xf32>
    %cst_159 = arith.constant dense<0.000000e+00> : vector<5xf32>
    %326 = vector.multi_reduction <add>, %325, %cst_159 [0] : vector<5x5xf32> to vector<5xf32>
    %327 = vector.shape_cast %326 : vector<5xf32> to vector<1x5xf32>
    %328 = arith.divf %274, %327 : vector<1x5xf32>
    %cst_160 = arith.constant 1.000000e+00 : f32
    %329 = vector.broadcast %cst_160 : f32 to vector<5x5xf32>
    %330 = arith.subf %329, %253 : vector<5x5xf32>
    %331 = arith.mulf %277, %330 : vector<5x5xf32>
    %332 = vector.broadcast %323 : vector<5x1xf32> to vector<5x5xf32>
    %333 = arith.mulf %332, %331 : vector<5x5xf32>
    %334 = vector.broadcast %328 : vector<1x5xf32> to vector<5x5xf32>
    %335 = arith.mulf %333, %334 : vector<5x5xf32>
    %cst_161 = arith.constant dense<0.000000e+00> : vector<5xf32>
    %336 = vector.multi_reduction <add>, %335, %cst_161 [1] : vector<5x5xf32> to vector<5xf32>
    %337 = vector.shape_cast %336 : vector<5xf32> to vector<5x1xf32>
    %cst_162 = arith.constant dense<0.000000e+00> : vector<1xf32>
    %338 = vector.multi_reduction <add>, %337, %cst_162 [0] : vector<5x1xf32> to vector<1xf32>
    %339 = vector.shape_cast %338 : vector<1xf32> to vector<1x1xf32>
    %340 = arith.mulf %233, %233 : vector<5x32xf32>
    %cst_163 = arith.constant dense<0.000000e+00> : vector<5xf32>
    %341 = vector.multi_reduction <add>, %340, %cst_163 [1] : vector<5x32xf32> to vector<5xf32>
    %342 = vector.shape_cast %341 : vector<5xf32> to vector<5x1xf32>
    %343 = math.sqrt %342 : vector<5x1xf32>
    %cst_164 = arith.constant 9.99999996E-13 : f32
    %344 = vector.broadcast %cst_164 : f32 to vector<5x1xf32>
    %345 = arith.maximumf %343, %344 : vector<5x1xf32>
    %346 = vector.broadcast %345 : vector<5x1xf32> to vector<5x32xf32>
    %347 = arith.divf %233, %346 : vector<5x32xf32>
    %348 = arith.mulf %229, %229 : vector<5x32xf32>
    %cst_165 = arith.constant dense<0.000000e+00> : vector<5xf32>
    %349 = vector.multi_reduction <add>, %348, %cst_165 [1] : vector<5x32xf32> to vector<5xf32>
    %350 = vector.shape_cast %349 : vector<5xf32> to vector<5x1xf32>
    %351 = math.sqrt %350 : vector<5x1xf32>
    %cst_166 = arith.constant 9.99999996E-13 : f32
    %352 = vector.broadcast %cst_166 : f32 to vector<5x1xf32>
    %353 = arith.maximumf %351, %352 : vector<5x1xf32>
    %354 = vector.broadcast %353 : vector<5x1xf32> to vector<5x32xf32>
    %355 = arith.divf %229, %354 : vector<5x32xf32>
    %cst_167 = arith.constant dense<0.000000e+00> : vector<5x5xf32>
    %356 = tpu.matmul %347, %355, %cst_167 {dimension_numbers = #tpu.dot_dimension_numbers<[1], [1], [0], [0], [0, 0, 1, 0], [], []>} : vector<5x32xf32>, vector<5x32xf32>, vector<5x5xf32> -> vector<5x5xf32>
    %cst_168 = arith.constant 1.000000e+00 : f32
    %357 = vector.broadcast %cst_168 : f32 to vector<5x5xf32>
    %358 = arith.subf %357, %356 : vector<5x5xf32>
    %359 = vector.broadcast %230 : vector<1x32xf32> to vector<5x32xf32>
    %360 = arith.mulf %233, %359 : vector<5x32xf32>
    %cst_169 = arith.constant dense<0.000000e+00> : vector<5xf32>
    %361 = vector.multi_reduction <add>, %360, %cst_169 [1] : vector<5x32xf32> to vector<5xf32>
    %362 = vector.shape_cast %361 : vector<5xf32> to vector<5x1xf32>
    %cst_170 = arith.constant 0.000000e+00 : f32
    %363 = vector.broadcast %cst_170 : f32 to vector<5x1xf32>
    %364 = arith.cmpf ole, %362, %363 : vector<5x1xf32>
    %cst_171 = arith.constant 9.99999993E-9 : f32
    %365 = vector.broadcast %cst_171 : f32 to vector<5x1xf32>
    %366 = arith.select %364, %365, %362 : vector<5x1xi1>, vector<5x1xf32>
    %cst_172 = arith.constant dense<0.000000e+00> : vector<1xf32>
    %367 = vector.multi_reduction <add>, %366, %cst_172 [0] : vector<5x1xf32> to vector<1xf32>
    %368 = vector.shape_cast %367 : vector<1xf32> to vector<1x1xf32>
    %369 = vector.broadcast %368 : vector<1x1xf32> to vector<5x1xf32>
    %370 = arith.divf %366, %369 : vector<5x1xf32>
    %cst_173 = arith.constant dense<0.000000e+00> : vector<1x5xf32>
    %371 = tpu.matmul %234, %229, %cst_173 {dimension_numbers = #tpu.dot_dimension_numbers<[1], [1], [0], [0], [0, 0, 1, 0], [], []>} : vector<1x32xf32>, vector<5x32xf32>, vector<1x5xf32> -> vector<1x5xf32>
    %cst_174 = arith.constant 0.000000e+00 : f32
    %372 = vector.broadcast %cst_174 : f32 to vector<1x5xf32>
    %373 = arith.cmpf ole, %371, %372 : vector<1x5xf32>
    %cst_175 = arith.constant 9.99999993E-9 : f32
    %374 = vector.broadcast %cst_175 : f32 to vector<1x5xf32>
    %375 = arith.select %373, %374, %371 : vector<1x5xi1>, vector<1x5xf32>
    %cst_176 = arith.constant dense<0.000000e+00> : vector<1xf32>
    %376 = vector.multi_reduction <add>, %375, %cst_176 [1] : vector<1x5xf32> to vector<1xf32>
    %377 = vector.shape_cast %376 : vector<1xf32> to vector<1x1xf32>
    %378 = vector.broadcast %377 : vector<1x1xf32> to vector<1x5xf32>
    %379 = arith.divf %375, %378 : vector<1x5xf32>
    %cst_177 = arith.constant -2.000000e+01 : f32
    %380 = vector.broadcast %cst_177 : f32 to vector<5x5xf32>
    %381 = arith.mulf %380, %358 : vector<5x5xf32>
    %382 = math.exp %381 : vector<5x5xf32>
    %cst_178 = arith.constant 2.000000e-01 : f32
    %383 = vector.broadcast %cst_178 : f32 to vector<1x5xf32>
    %384 = vector.broadcast %383 : vector<1x5xf32> to vector<5x5xf32>
    %385 = arith.mulf %382, %384 : vector<5x5xf32>
    %cst_179 = arith.constant dense<0.000000e+00> : vector<5xf32>
    %386 = vector.multi_reduction <add>, %385, %cst_179 [1] : vector<5x5xf32> to vector<5xf32>
    %387 = vector.shape_cast %386 : vector<5xf32> to vector<5x1xf32>
    %388 = arith.divf %370, %387 : vector<5x1xf32>
    %389 = vector.broadcast %388 : vector<5x1xf32> to vector<5x5xf32>
    %390 = arith.mulf %382, %389 : vector<5x5xf32>
    %cst_180 = arith.constant dense<0.000000e+00> : vector<5xf32>
    %391 = vector.multi_reduction <add>, %390, %cst_180 [0] : vector<5x5xf32> to vector<5xf32>
    %392 = vector.shape_cast %391 : vector<5xf32> to vector<1x5xf32>
    %393 = arith.divf %379, %392 : vector<1x5xf32>
    %394 = vector.broadcast %393 : vector<1x5xf32> to vector<5x5xf32>
    %395 = arith.mulf %382, %394 : vector<5x5xf32>
    %cst_181 = arith.constant dense<0.000000e+00> : vector<5xf32>
    %396 = vector.multi_reduction <add>, %395, %cst_181 [1] : vector<5x5xf32> to vector<5xf32>
    %397 = vector.shape_cast %396 : vector<5xf32> to vector<5x1xf32>
    %398 = arith.divf %370, %397 : vector<5x1xf32>
    %399 = vector.broadcast %398 : vector<5x1xf32> to vector<5x5xf32>
    %400 = arith.mulf %382, %399 : vector<5x5xf32>
    %cst_182 = arith.constant dense<0.000000e+00> : vector<5xf32>
    %401 = vector.multi_reduction <add>, %400, %cst_182 [0] : vector<5x5xf32> to vector<5xf32>
    %402 = vector.shape_cast %401 : vector<5xf32> to vector<1x5xf32>
    %403 = arith.divf %379, %402 : vector<1x5xf32>
    %404 = vector.broadcast %403 : vector<1x5xf32> to vector<5x5xf32>
    %405 = arith.mulf %382, %404 : vector<5x5xf32>
    %cst_183 = arith.constant dense<0.000000e+00> : vector<5xf32>
    %406 = vector.multi_reduction <add>, %405, %cst_183 [1] : vector<5x5xf32> to vector<5xf32>
    %407 = vector.shape_cast %406 : vector<5xf32> to vector<5x1xf32>
    %408 = arith.divf %370, %407 : vector<5x1xf32>
    %409 = vector.broadcast %408 : vector<5x1xf32> to vector<5x5xf32>
    %410 = arith.mulf %382, %409 : vector<5x5xf32>
    %cst_184 = arith.constant dense<0.000000e+00> : vector<5xf32>
    %411 = vector.multi_reduction <add>, %410, %cst_184 [0] : vector<5x5xf32> to vector<5xf32>
    %412 = vector.shape_cast %411 : vector<5xf32> to vector<1x5xf32>
    %413 = arith.divf %379, %412 : vector<1x5xf32>
    %414 = vector.broadcast %413 : vector<1x5xf32> to vector<5x5xf32>
    %415 = arith.mulf %382, %414 : vector<5x5xf32>
    %cst_185 = arith.constant dense<0.000000e+00> : vector<5xf32>
    %416 = vector.multi_reduction <add>, %415, %cst_185 [1] : vector<5x5xf32> to vector<5xf32>
    %417 = vector.shape_cast %416 : vector<5xf32> to vector<5x1xf32>
    %418 = arith.divf %370, %417 : vector<5x1xf32>
    %419 = vector.broadcast %418 : vector<5x1xf32> to vector<5x5xf32>
    %420 = arith.mulf %382, %419 : vector<5x5xf32>
    %cst_186 = arith.constant dense<0.000000e+00> : vector<5xf32>
    %421 = vector.multi_reduction <add>, %420, %cst_186 [0] : vector<5x5xf32> to vector<5xf32>
    %422 = vector.shape_cast %421 : vector<5xf32> to vector<1x5xf32>
    %423 = arith.divf %379, %422 : vector<1x5xf32>
    %424 = vector.broadcast %423 : vector<1x5xf32> to vector<5x5xf32>
    %425 = arith.mulf %382, %424 : vector<5x5xf32>
    %cst_187 = arith.constant dense<0.000000e+00> : vector<5xf32>
    %426 = vector.multi_reduction <add>, %425, %cst_187 [1] : vector<5x5xf32> to vector<5xf32>
    %427 = vector.shape_cast %426 : vector<5xf32> to vector<5x1xf32>
    %428 = arith.divf %370, %427 : vector<5x1xf32>
    %429 = vector.broadcast %428 : vector<5x1xf32> to vector<5x5xf32>
    %430 = arith.mulf %382, %429 : vector<5x5xf32>
    %cst_188 = arith.constant dense<0.000000e+00> : vector<5xf32>
    %431 = vector.multi_reduction <add>, %430, %cst_188 [0] : vector<5x5xf32> to vector<5xf32>
    %432 = vector.shape_cast %431 : vector<5xf32> to vector<1x5xf32>
    %433 = arith.divf %379, %432 : vector<1x5xf32>
    %cst_189 = arith.constant 1.000000e+00 : f32
    %434 = vector.broadcast %cst_189 : f32 to vector<5x5xf32>
    %435 = arith.subf %434, %358 : vector<5x5xf32>
    %436 = arith.mulf %382, %435 : vector<5x5xf32>
    %437 = vector.broadcast %428 : vector<5x1xf32> to vector<5x5xf32>
    %438 = arith.mulf %437, %436 : vector<5x5xf32>
    %439 = vector.broadcast %433 : vector<1x5xf32> to vector<5x5xf32>
    %440 = arith.mulf %438, %439 : vector<5x5xf32>
    %cst_190 = arith.constant dense<0.000000e+00> : vector<5xf32>
    %441 = vector.multi_reduction <add>, %440, %cst_190 [1] : vector<5x5xf32> to vector<5xf32>
    %442 = vector.shape_cast %441 : vector<5xf32> to vector<5x1xf32>
    %cst_191 = arith.constant dense<0.000000e+00> : vector<1xf32>
    %443 = vector.multi_reduction <add>, %442, %cst_191 [0] : vector<5x1xf32> to vector<1xf32>
    %444 = vector.shape_cast %443 : vector<1xf32> to vector<1x1xf32>
    %445 = vector.extract_strided_slice %27 {offsets = [0, 0], sizes = [4, 32], strides = [1, 1]} : vector<6x32xf32> to vector<4x32xf32>
    %446 = vector.extract_strided_slice %27 {offsets = [5, 0], sizes = [1, 32], strides = [1, 1]} : vector<6x32xf32> to vector<1x32xf32>
    %447 = tpu.concatenate %445, %446 in 0 : vector<4x32xf32>, vector<1x32xf32> -> vector<5x32xf32>
    %448 = vector.extract_strided_slice %27 {offsets = [4, 0], sizes = [1, 32], strides = [1, 1]} : vector<6x32xf32> to vector<1x32xf32>
    %449 = vector.extract_strided_slice %53 {offsets = [0, 0], sizes = [4, 32], strides = [1, 1]} : vector<6x32xf32> to vector<4x32xf32>
    %450 = vector.extract_strided_slice %53 {offsets = [5, 0], sizes = [1, 32], strides = [1, 1]} : vector<6x32xf32> to vector<1x32xf32>
    %451 = tpu.concatenate %449, %450 in 0 : vector<4x32xf32>, vector<1x32xf32> -> vector<5x32xf32>
    %452 = vector.extract_strided_slice %53 {offsets = [4, 0], sizes = [1, 32], strides = [1, 1]} : vector<6x32xf32> to vector<1x32xf32>
    %453 = arith.mulf %447, %447 : vector<5x32xf32>
    %cst_192 = arith.constant dense<0.000000e+00> : vector<5xf32>
    %454 = vector.multi_reduction <add>, %453, %cst_192 [1] : vector<5x32xf32> to vector<5xf32>
    %455 = vector.shape_cast %454 : vector<5xf32> to vector<5x1xf32>
    %456 = math.sqrt %455 : vector<5x1xf32>
    %cst_193 = arith.constant 9.99999996E-13 : f32
    %457 = vector.broadcast %cst_193 : f32 to vector<5x1xf32>
    %458 = arith.maximumf %456, %457 : vector<5x1xf32>
    %459 = vector.broadcast %458 : vector<5x1xf32> to vector<5x32xf32>
    %460 = arith.divf %447, %459 : vector<5x32xf32>
    %461 = arith.mulf %451, %451 : vector<5x32xf32>
    %cst_194 = arith.constant dense<0.000000e+00> : vector<5xf32>
    %462 = vector.multi_reduction <add>, %461, %cst_194 [1] : vector<5x32xf32> to vector<5xf32>
    %463 = vector.shape_cast %462 : vector<5xf32> to vector<5x1xf32>
    %464 = math.sqrt %463 : vector<5x1xf32>
    %cst_195 = arith.constant 9.99999996E-13 : f32
    %465 = vector.broadcast %cst_195 : f32 to vector<5x1xf32>
    %466 = arith.maximumf %464, %465 : vector<5x1xf32>
    %467 = vector.broadcast %466 : vector<5x1xf32> to vector<5x32xf32>
    %468 = arith.divf %451, %467 : vector<5x32xf32>
    %cst_196 = arith.constant dense<0.000000e+00> : vector<5x5xf32>
    %469 = tpu.matmul %460, %468, %cst_196 {dimension_numbers = #tpu.dot_dimension_numbers<[1], [1], [0], [0], [0, 0, 1, 0], [], []>} : vector<5x32xf32>, vector<5x32xf32>, vector<5x5xf32> -> vector<5x5xf32>
    %cst_197 = arith.constant 1.000000e+00 : f32
    %470 = vector.broadcast %cst_197 : f32 to vector<5x5xf32>
    %471 = arith.subf %470, %469 : vector<5x5xf32>
    %472 = vector.broadcast %452 : vector<1x32xf32> to vector<5x32xf32>
    %473 = arith.mulf %447, %472 : vector<5x32xf32>
    %cst_198 = arith.constant dense<0.000000e+00> : vector<5xf32>
    %474 = vector.multi_reduction <add>, %473, %cst_198 [1] : vector<5x32xf32> to vector<5xf32>
    %475 = vector.shape_cast %474 : vector<5xf32> to vector<5x1xf32>
    %cst_199 = arith.constant 0.000000e+00 : f32
    %476 = vector.broadcast %cst_199 : f32 to vector<5x1xf32>
    %477 = arith.cmpf ole, %475, %476 : vector<5x1xf32>
    %cst_200 = arith.constant 9.99999993E-9 : f32
    %478 = vector.broadcast %cst_200 : f32 to vector<5x1xf32>
    %479 = arith.select %477, %478, %475 : vector<5x1xi1>, vector<5x1xf32>
    %cst_201 = arith.constant dense<0.000000e+00> : vector<1xf32>
    %480 = vector.multi_reduction <add>, %479, %cst_201 [0] : vector<5x1xf32> to vector<1xf32>
    %481 = vector.shape_cast %480 : vector<1xf32> to vector<1x1xf32>
    %482 = vector.broadcast %481 : vector<1x1xf32> to vector<5x1xf32>
    %483 = arith.divf %479, %482 : vector<5x1xf32>
    %cst_202 = arith.constant dense<0.000000e+00> : vector<1x5xf32>
    %484 = tpu.matmul %448, %451, %cst_202 {dimension_numbers = #tpu.dot_dimension_numbers<[1], [1], [0], [0], [0, 0, 1, 0], [], []>} : vector<1x32xf32>, vector<5x32xf32>, vector<1x5xf32> -> vector<1x5xf32>
    %cst_203 = arith.constant 0.000000e+00 : f32
    %485 = vector.broadcast %cst_203 : f32 to vector<1x5xf32>
    %486 = arith.cmpf ole, %484, %485 : vector<1x5xf32>
    %cst_204 = arith.constant 9.99999993E-9 : f32
    %487 = vector.broadcast %cst_204 : f32 to vector<1x5xf32>
    %488 = arith.select %486, %487, %484 : vector<1x5xi1>, vector<1x5xf32>
    %cst_205 = arith.constant dense<0.000000e+00> : vector<1xf32>
    %489 = vector.multi_reduction <add>, %488, %cst_205 [1] : vector<1x5xf32> to vector<1xf32>
    %490 = vector.shape_cast %489 : vector<1xf32> to vector<1x1xf32>
    %491 = vector.broadcast %490 : vector<1x1xf32> to vector<1x5xf32>
    %492 = arith.divf %488, %491 : vector<1x5xf32>
    %cst_206 = arith.constant -2.000000e+01 : f32
    %493 = vector.broadcast %cst_206 : f32 to vector<5x5xf32>
    %494 = arith.mulf %493, %471 : vector<5x5xf32>
    %495 = math.exp %494 : vector<5x5xf32>
    %cst_207 = arith.constant 2.000000e-01 : f32
    %496 = vector.broadcast %cst_207 : f32 to vector<1x5xf32>
    %497 = vector.broadcast %496 : vector<1x5xf32> to vector<5x5xf32>
    %498 = arith.mulf %495, %497 : vector<5x5xf32>
    %cst_208 = arith.constant dense<0.000000e+00> : vector<5xf32>
    %499 = vector.multi_reduction <add>, %498, %cst_208 [1] : vector<5x5xf32> to vector<5xf32>
    %500 = vector.shape_cast %499 : vector<5xf32> to vector<5x1xf32>
    %501 = arith.divf %483, %500 : vector<5x1xf32>
    %502 = vector.broadcast %501 : vector<5x1xf32> to vector<5x5xf32>
    %503 = arith.mulf %495, %502 : vector<5x5xf32>
    %cst_209 = arith.constant dense<0.000000e+00> : vector<5xf32>
    %504 = vector.multi_reduction <add>, %503, %cst_209 [0] : vector<5x5xf32> to vector<5xf32>
    %505 = vector.shape_cast %504 : vector<5xf32> to vector<1x5xf32>
    %506 = arith.divf %492, %505 : vector<1x5xf32>
    %507 = vector.broadcast %506 : vector<1x5xf32> to vector<5x5xf32>
    %508 = arith.mulf %495, %507 : vector<5x5xf32>
    %cst_210 = arith.constant dense<0.000000e+00> : vector<5xf32>
    %509 = vector.multi_reduction <add>, %508, %cst_210 [1] : vector<5x5xf32> to vector<5xf32>
    %510 = vector.shape_cast %509 : vector<5xf32> to vector<5x1xf32>
    %511 = arith.divf %483, %510 : vector<5x1xf32>
    %512 = vector.broadcast %511 : vector<5x1xf32> to vector<5x5xf32>
    %513 = arith.mulf %495, %512 : vector<5x5xf32>
    %cst_211 = arith.constant dense<0.000000e+00> : vector<5xf32>
    %514 = vector.multi_reduction <add>, %513, %cst_211 [0] : vector<5x5xf32> to vector<5xf32>
    %515 = vector.shape_cast %514 : vector<5xf32> to vector<1x5xf32>
    %516 = arith.divf %492, %515 : vector<1x5xf32>
    %517 = vector.broadcast %516 : vector<1x5xf32> to vector<5x5xf32>
    %518 = arith.mulf %495, %517 : vector<5x5xf32>
    %cst_212 = arith.constant dense<0.000000e+00> : vector<5xf32>
    %519 = vector.multi_reduction <add>, %518, %cst_212 [1] : vector<5x5xf32> to vector<5xf32>
    %520 = vector.shape_cast %519 : vector<5xf32> to vector<5x1xf32>
    %521 = arith.divf %483, %520 : vector<5x1xf32>
    %522 = vector.broadcast %521 : vector<5x1xf32> to vector<5x5xf32>
    %523 = arith.mulf %495, %522 : vector<5x5xf32>
    %cst_213 = arith.constant dense<0.000000e+00> : vector<5xf32>
    %524 = vector.multi_reduction <add>, %523, %cst_213 [0] : vector<5x5xf32> to vector<5xf32>
    %525 = vector.shape_cast %524 : vector<5xf32> to vector<1x5xf32>
    %526 = arith.divf %492, %525 : vector<1x5xf32>
    %527 = vector.broadcast %526 : vector<1x5xf32> to vector<5x5xf32>
    %528 = arith.mulf %495, %527 : vector<5x5xf32>
    %cst_214 = arith.constant dense<0.000000e+00> : vector<5xf32>
    %529 = vector.multi_reduction <add>, %528, %cst_214 [1] : vector<5x5xf32> to vector<5xf32>
    %530 = vector.shape_cast %529 : vector<5xf32> to vector<5x1xf32>
    %531 = arith.divf %483, %530 : vector<5x1xf32>
    %532 = vector.broadcast %531 : vector<5x1xf32> to vector<5x5xf32>
    %533 = arith.mulf %495, %532 : vector<5x5xf32>
    %cst_215 = arith.constant dense<0.000000e+00> : vector<5xf32>
    %534 = vector.multi_reduction <add>, %533, %cst_215 [0] : vector<5x5xf32> to vector<5xf32>
    %535 = vector.shape_cast %534 : vector<5xf32> to vector<1x5xf32>
    %536 = arith.divf %492, %535 : vector<1x5xf32>
    %537 = vector.broadcast %536 : vector<1x5xf32> to vector<5x5xf32>
    %538 = arith.mulf %495, %537 : vector<5x5xf32>
    %cst_216 = arith.constant dense<0.000000e+00> : vector<5xf32>
    %539 = vector.multi_reduction <add>, %538, %cst_216 [1] : vector<5x5xf32> to vector<5xf32>
    %540 = vector.shape_cast %539 : vector<5xf32> to vector<5x1xf32>
    %541 = arith.divf %483, %540 : vector<5x1xf32>
    %542 = vector.broadcast %541 : vector<5x1xf32> to vector<5x5xf32>
    %543 = arith.mulf %495, %542 : vector<5x5xf32>
    %cst_217 = arith.constant dense<0.000000e+00> : vector<5xf32>
    %544 = vector.multi_reduction <add>, %543, %cst_217 [0] : vector<5x5xf32> to vector<5xf32>
    %545 = vector.shape_cast %544 : vector<5xf32> to vector<1x5xf32>
    %546 = arith.divf %492, %545 : vector<1x5xf32>
    %cst_218 = arith.constant 1.000000e+00 : f32
    %547 = vector.broadcast %cst_218 : f32 to vector<5x5xf32>
    %548 = arith.subf %547, %471 : vector<5x5xf32>
    %549 = arith.mulf %495, %548 : vector<5x5xf32>
    %550 = vector.broadcast %541 : vector<5x1xf32> to vector<5x5xf32>
    %551 = arith.mulf %550, %549 : vector<5x5xf32>
    %552 = vector.broadcast %546 : vector<1x5xf32> to vector<5x5xf32>
    %553 = arith.mulf %551, %552 : vector<5x5xf32>
    %cst_219 = arith.constant dense<0.000000e+00> : vector<5xf32>
    %554 = vector.multi_reduction <add>, %553, %cst_219 [1] : vector<5x5xf32> to vector<5xf32>
    %555 = vector.shape_cast %554 : vector<5xf32> to vector<5x1xf32>
    %cst_220 = arith.constant dense<0.000000e+00> : vector<1xf32>
    %556 = vector.multi_reduction <add>, %555, %cst_220 [0] : vector<5x1xf32> to vector<1xf32>
    %557 = vector.shape_cast %556 : vector<1xf32> to vector<1x1xf32>
    %558 = arith.mulf %451, %451 : vector<5x32xf32>
    %cst_221 = arith.constant dense<0.000000e+00> : vector<5xf32>
    %559 = vector.multi_reduction <add>, %558, %cst_221 [1] : vector<5x32xf32> to vector<5xf32>
    %560 = vector.shape_cast %559 : vector<5xf32> to vector<5x1xf32>
    %561 = math.sqrt %560 : vector<5x1xf32>
    %cst_222 = arith.constant 9.99999996E-13 : f32
    %562 = vector.broadcast %cst_222 : f32 to vector<5x1xf32>
    %563 = arith.maximumf %561, %562 : vector<5x1xf32>
    %564 = vector.broadcast %563 : vector<5x1xf32> to vector<5x32xf32>
    %565 = arith.divf %451, %564 : vector<5x32xf32>
    %566 = arith.mulf %447, %447 : vector<5x32xf32>
    %cst_223 = arith.constant dense<0.000000e+00> : vector<5xf32>
    %567 = vector.multi_reduction <add>, %566, %cst_223 [1] : vector<5x32xf32> to vector<5xf32>
    %568 = vector.shape_cast %567 : vector<5xf32> to vector<5x1xf32>
    %569 = math.sqrt %568 : vector<5x1xf32>
    %cst_224 = arith.constant 9.99999996E-13 : f32
    %570 = vector.broadcast %cst_224 : f32 to vector<5x1xf32>
    %571 = arith.maximumf %569, %570 : vector<5x1xf32>
    %572 = vector.broadcast %571 : vector<5x1xf32> to vector<5x32xf32>
    %573 = arith.divf %447, %572 : vector<5x32xf32>
    %cst_225 = arith.constant dense<0.000000e+00> : vector<5x5xf32>
    %574 = tpu.matmul %565, %573, %cst_225 {dimension_numbers = #tpu.dot_dimension_numbers<[1], [1], [0], [0], [0, 0, 1, 0], [], []>} : vector<5x32xf32>, vector<5x32xf32>, vector<5x5xf32> -> vector<5x5xf32>
    %cst_226 = arith.constant 1.000000e+00 : f32
    %575 = vector.broadcast %cst_226 : f32 to vector<5x5xf32>
    %576 = arith.subf %575, %574 : vector<5x5xf32>
    %577 = vector.broadcast %448 : vector<1x32xf32> to vector<5x32xf32>
    %578 = arith.mulf %451, %577 : vector<5x32xf32>
    %cst_227 = arith.constant dense<0.000000e+00> : vector<5xf32>
    %579 = vector.multi_reduction <add>, %578, %cst_227 [1] : vector<5x32xf32> to vector<5xf32>
    %580 = vector.shape_cast %579 : vector<5xf32> to vector<5x1xf32>
    %cst_228 = arith.constant 0.000000e+00 : f32
    %581 = vector.broadcast %cst_228 : f32 to vector<5x1xf32>
    %582 = arith.cmpf ole, %580, %581 : vector<5x1xf32>
    %cst_229 = arith.constant 9.99999993E-9 : f32
    %583 = vector.broadcast %cst_229 : f32 to vector<5x1xf32>
    %584 = arith.select %582, %583, %580 : vector<5x1xi1>, vector<5x1xf32>
    %cst_230 = arith.constant dense<0.000000e+00> : vector<1xf32>
    %585 = vector.multi_reduction <add>, %584, %cst_230 [0] : vector<5x1xf32> to vector<1xf32>
    %586 = vector.shape_cast %585 : vector<1xf32> to vector<1x1xf32>
    %587 = vector.broadcast %586 : vector<1x1xf32> to vector<5x1xf32>
    %588 = arith.divf %584, %587 : vector<5x1xf32>
    %cst_231 = arith.constant dense<0.000000e+00> : vector<1x5xf32>
    %589 = tpu.matmul %452, %447, %cst_231 {dimension_numbers = #tpu.dot_dimension_numbers<[1], [1], [0], [0], [0, 0, 1, 0], [], []>} : vector<1x32xf32>, vector<5x32xf32>, vector<1x5xf32> -> vector<1x5xf32>
    %cst_232 = arith.constant 0.000000e+00 : f32
    %590 = vector.broadcast %cst_232 : f32 to vector<1x5xf32>
    %591 = arith.cmpf ole, %589, %590 : vector<1x5xf32>
    %cst_233 = arith.constant 9.99999993E-9 : f32
    %592 = vector.broadcast %cst_233 : f32 to vector<1x5xf32>
    %593 = arith.select %591, %592, %589 : vector<1x5xi1>, vector<1x5xf32>
    %cst_234 = arith.constant dense<0.000000e+00> : vector<1xf32>
    %594 = vector.multi_reduction <add>, %593, %cst_234 [1] : vector<1x5xf32> to vector<1xf32>
    %595 = vector.shape_cast %594 : vector<1xf32> to vector<1x1xf32>
    %596 = vector.broadcast %595 : vector<1x1xf32> to vector<1x5xf32>
    %597 = arith.divf %593, %596 : vector<1x5xf32>
    %cst_235 = arith.constant -2.000000e+01 : f32
    %598 = vector.broadcast %cst_235 : f32 to vector<5x5xf32>
    %599 = arith.mulf %598, %576 : vector<5x5xf32>
    %600 = math.exp %599 : vector<5x5xf32>
    %cst_236 = arith.constant 2.000000e-01 : f32
    %601 = vector.broadcast %cst_236 : f32 to vector<1x5xf32>
    %602 = vector.broadcast %601 : vector<1x5xf32> to vector<5x5xf32>
    %603 = arith.mulf %600, %602 : vector<5x5xf32>
    %cst_237 = arith.constant dense<0.000000e+00> : vector<5xf32>
    %604 = vector.multi_reduction <add>, %603, %cst_237 [1] : vector<5x5xf32> to vector<5xf32>
    %605 = vector.shape_cast %604 : vector<5xf32> to vector<5x1xf32>
    %606 = arith.divf %588, %605 : vector<5x1xf32>
    %607 = vector.broadcast %606 : vector<5x1xf32> to vector<5x5xf32>
    %608 = arith.mulf %600, %607 : vector<5x5xf32>
    %cst_238 = arith.constant dense<0.000000e+00> : vector<5xf32>
    %609 = vector.multi_reduction <add>, %608, %cst_238 [0] : vector<5x5xf32> to vector<5xf32>
    %610 = vector.shape_cast %609 : vector<5xf32> to vector<1x5xf32>
    %611 = arith.divf %597, %610 : vector<1x5xf32>
    %612 = vector.broadcast %611 : vector<1x5xf32> to vector<5x5xf32>
    %613 = arith.mulf %600, %612 : vector<5x5xf32>
    %cst_239 = arith.constant dense<0.000000e+00> : vector<5xf32>
    %614 = vector.multi_reduction <add>, %613, %cst_239 [1] : vector<5x5xf32> to vector<5xf32>
    %615 = vector.shape_cast %614 : vector<5xf32> to vector<5x1xf32>
    %616 = arith.divf %588, %615 : vector<5x1xf32>
    %617 = vector.broadcast %616 : vector<5x1xf32> to vector<5x5xf32>
    %618 = arith.mulf %600, %617 : vector<5x5xf32>
    %cst_240 = arith.constant dense<0.000000e+00> : vector<5xf32>
    %619 = vector.multi_reduction <add>, %618, %cst_240 [0] : vector<5x5xf32> to vector<5xf32>
    %620 = vector.shape_cast %619 : vector<5xf32> to vector<1x5xf32>
    %621 = arith.divf %597, %620 : vector<1x5xf32>
    %622 = vector.broadcast %621 : vector<1x5xf32> to vector<5x5xf32>
    %623 = arith.mulf %600, %622 : vector<5x5xf32>
    %cst_241 = arith.constant dense<0.000000e+00> : vector<5xf32>
    %624 = vector.multi_reduction <add>, %623, %cst_241 [1] : vector<5x5xf32> to vector<5xf32>
    %625 = vector.shape_cast %624 : vector<5xf32> to vector<5x1xf32>
    %626 = arith.divf %588, %625 : vector<5x1xf32>
    %627 = vector.broadcast %626 : vector<5x1xf32> to vector<5x5xf32>
    %628 = arith.mulf %600, %627 : vector<5x5xf32>
    %cst_242 = arith.constant dense<0.000000e+00> : vector<5xf32>
    %629 = vector.multi_reduction <add>, %628, %cst_242 [0] : vector<5x5xf32> to vector<5xf32>
    %630 = vector.shape_cast %629 : vector<5xf32> to vector<1x5xf32>
    %631 = arith.divf %597, %630 : vector<1x5xf32>
    %632 = vector.broadcast %631 : vector<1x5xf32> to vector<5x5xf32>
    %633 = arith.mulf %600, %632 : vector<5x5xf32>
    %cst_243 = arith.constant dense<0.000000e+00> : vector<5xf32>
    %634 = vector.multi_reduction <add>, %633, %cst_243 [1] : vector<5x5xf32> to vector<5xf32>
    %635 = vector.shape_cast %634 : vector<5xf32> to vector<5x1xf32>
    %636 = arith.divf %588, %635 : vector<5x1xf32>
    %637 = vector.broadcast %636 : vector<5x1xf32> to vector<5x5xf32>
    %638 = arith.mulf %600, %637 : vector<5x5xf32>
    %cst_244 = arith.constant dense<0.000000e+00> : vector<5xf32>
    %639 = vector.multi_reduction <add>, %638, %cst_244 [0] : vector<5x5xf32> to vector<5xf32>
    %640 = vector.shape_cast %639 : vector<5xf32> to vector<1x5xf32>
    %641 = arith.divf %597, %640 : vector<1x5xf32>
    %642 = vector.broadcast %641 : vector<1x5xf32> to vector<5x5xf32>
    %643 = arith.mulf %600, %642 : vector<5x5xf32>
    %cst_245 = arith.constant dense<0.000000e+00> : vector<5xf32>
    %644 = vector.multi_reduction <add>, %643, %cst_245 [1] : vector<5x5xf32> to vector<5xf32>
    %645 = vector.shape_cast %644 : vector<5xf32> to vector<5x1xf32>
    %646 = arith.divf %588, %645 : vector<5x1xf32>
    %647 = vector.broadcast %646 : vector<5x1xf32> to vector<5x5xf32>
    %648 = arith.mulf %600, %647 : vector<5x5xf32>
    %cst_246 = arith.constant dense<0.000000e+00> : vector<5xf32>
    %649 = vector.multi_reduction <add>, %648, %cst_246 [0] : vector<5x5xf32> to vector<5xf32>
    %650 = vector.shape_cast %649 : vector<5xf32> to vector<1x5xf32>
    %651 = arith.divf %597, %650 : vector<1x5xf32>
    %cst_247 = arith.constant 1.000000e+00 : f32
    %652 = vector.broadcast %cst_247 : f32 to vector<5x5xf32>
    %653 = arith.subf %652, %576 : vector<5x5xf32>
    %654 = arith.mulf %600, %653 : vector<5x5xf32>
    %655 = vector.broadcast %646 : vector<5x1xf32> to vector<5x5xf32>
    %656 = arith.mulf %655, %654 : vector<5x5xf32>
    %657 = vector.broadcast %651 : vector<1x5xf32> to vector<5x5xf32>
    %658 = arith.mulf %656, %657 : vector<5x5xf32>
    %cst_248 = arith.constant dense<0.000000e+00> : vector<5xf32>
    %659 = vector.multi_reduction <add>, %658, %cst_248 [1] : vector<5x5xf32> to vector<5xf32>
    %660 = vector.shape_cast %659 : vector<5xf32> to vector<5x1xf32>
    %cst_249 = arith.constant dense<0.000000e+00> : vector<1xf32>
    %661 = vector.multi_reduction <add>, %660, %cst_249 [0] : vector<5x1xf32> to vector<1xf32>
    %662 = vector.shape_cast %661 : vector<1xf32> to vector<1x1xf32>
    %663 = tpu.concatenate %339, %557 in 0 : vector<1x1xf32>, vector<1x1xf32> -> vector<2x1xf32>
    %664 = tpu.concatenate %444, %662 in 0 : vector<1x1xf32>, vector<1x1xf32> -> vector<2x1xf32>
    %c0_250 = arith.constant 0 : index
    %c0_251 = arith.constant 0 : index
    %665 = vector.load %arg23[%c0_250, %c0_251] : memref<2x1xf32, #tpu.memory_space<vmem>>, vector<2x1xf32>
    tpu.vector_store %arg23[%c0_250, %c0_251], %663 {strides = array<i32>} : memref<2x1xf32, #tpu.memory_space<vmem>>, vector<2x1xf32>,
    %c0_252 = arith.constant 0 : index
    %c0_253 = arith.constant 0 : index
    %666 = vector.load %arg24[%c0_252, %c0_253] : memref<2x1xf32, #tpu.memory_space<vmem>>, vector<2x1xf32>
    tpu.vector_store %arg24[%c0_252, %c0_253], %664 {strides = array<i32>} : memref<2x1xf32, #tpu.memory_space<vmem>>, vector<2x1xf32>,
    %cst_254 = arith.constant 2.500000e+00 : f32
    %667 = vector.broadcast %cst_254 : f32 to vector<2x1xf32>
    %668 = arith.mulf %663, %667 : vector<2x1xf32>
    %669 = math.exp %668 : vector<2x1xf32>
    %670 = math.log %669 : vector<2x1xf32>
    %cst_255 = arith.constant 0.000000e+00 : f32
    %671 = vector.broadcast %cst_255 : f32 to vector<2x1xf32>
    %672 = arith.subf %671, %670 : vector<2x1xf32>
    %c0_256 = arith.constant 0 : index
    %c0_257 = arith.constant 0 : index
    %673 = vector.load %arg21[%c0_256, %c0_257] : memref<2x1xf32, #tpu.memory_space<vmem>>, vector<2x1xf32>
    tpu.vector_store %arg21[%c0_256, %c0_257], %672 {strides = array<i32>} : memref<2x1xf32, #tpu.memory_space<vmem>>, vector<2x1xf32>,
    %cst_258 = arith.constant 2.500000e+00 : f32
    %674 = vector.broadcast %cst_258 : f32 to vector<2x1xf32>
    %675 = arith.mulf %664, %674 : vector<2x1xf32>
    %676 = math.exp %675 : vector<2x1xf32>
    %677 = math.log %676 : vector<2x1xf32>
    %cst_259 = arith.constant 0.000000e+00 : f32
    %678 = vector.broadcast %cst_259 : f32 to vector<2x1xf32>
    %679 = arith.subf %678, %677 : vector<2x1xf32>
    %c0_260 = arith.constant 0 : index
    %c0_261 = arith.constant 0 : index
    %680 = vector.load %arg22[%c0_260, %c0_261] : memref<2x1xf32, #tpu.memory_space<vmem>>, vector<2x1xf32>
    tpu.vector_store %arg22[%c0_260, %c0_261], %679 {strides = array<i32>} : memref<2x1xf32, #tpu.memory_space<vmem>>, vector<2x1xf32>,
    return
  }
  func.func @transform_0(%arg0: i32) -> (i32, i32, i32) {
    %c0_i32 = arith.constant 0 : i32
    %c0_i32_0 = arith.constant 0 : i32
    %c0_i32_1 = arith.constant 0 : i32
    %c0_i32_2 = arith.constant 0 : i32
    return %c0_i32, %c0_i32_0, %c0_i32_1 : i32, i32, i32
  }
  func.func @transform_1(%arg0: i32) -> (i32, i32, i32) {
    %c0_i32 = arith.constant 0 : i32
    %c0_i32_0 = arith.constant 0 : i32
    %c0_i32_1 = arith.constant 0 : i32
    %c0_i32_2 = arith.constant 0 : i32
    return %c0_i32, %c0_i32_0, %c0_i32_1 : i32, i32, i32
  }
  func.func @transform_2(%arg0: i32) -> (i32, i32, i32) {
    %c0_i32 = arith.constant 0 : i32
    %c0_i32_0 = arith.constant 0 : i32
    %c0_i32_1 = arith.constant 0 : i32
    %c0_i32_2 = arith.constant 0 : i32
    return %c0_i32, %c0_i32_0, %c0_i32_1 : i32, i32, i32
  }
  func.func @transform_3(%arg0: i32) -> (i32, i32, i32) {
    %c0_i32 = arith.constant 0 : i32
    %c0_i32_0 = arith.constant 0 : i32
    %c0_i32_1 = arith.constant 0 : i32
    %c0_i32_2 = arith.constant 0 : i32
    return %c0_i32, %c0_i32_0, %c0_i32_1 : i32, i32, i32
  }
  func.func @transform_4(%arg0: i32) -> (i32, i32, i32) {
    %c0_i32 = arith.constant 0 : i32
    %c0_i32_0 = arith.constant 0 : i32
    %c0_i32_1 = arith.constant 0 : i32
    %c0_i32_2 = arith.constant 0 : i32
    return %c0_i32, %c0_i32_0, %c0_i32_1 : i32, i32, i32
  }
  func.func @transform_5(%arg0: i32) -> (i32, i32, i32) {
    %c0_i32 = arith.constant 0 : i32
    %c0_i32_0 = arith.constant 0 : i32
    %c0_i32_1 = arith.constant 0 : i32
    %c0_i32_2 = arith.constant 0 : i32
    return %c0_i32, %c0_i32_0, %c0_i32_1 : i32, i32, i32
  }
  func.func @transform_6(%arg0: i32) -> (i32, i32) {
    %c0_i32 = arith.constant 0 : i32
    %c0_i32_0 = arith.constant 0 : i32
    %c0_i32_1 = arith.constant 0 : i32
    return %c0_i32, %c0_i32_0 : i32, i32
  }
  func.func @transform_7(%arg0: i32) -> (i32, i32) {
    %c0_i32 = arith.constant 0 : i32
    %c0_i32_0 = arith.constant 0 : i32
    %c0_i32_1 = arith.constant 0 : i32
    return %c0_i32, %c0_i32_0 : i32, i32
  }
  func.func @transform_8(%arg0: i32) -> (i32, i32) {
    %c0_i32 = arith.constant 0 : i32
    %c0_i32_0 = arith.constant 0 : i32
    %c0_i32_1 = arith.constant 0 : i32
    return %c0_i32, %c0_i32_0 : i32, i32
  }
  func.func @transform_9(%arg0: i32) -> (i32, i32) {
    %c0_i32 = arith.constant 0 : i32
    %c0_i32_0 = arith.constant 0 : i32
    %c0_i32_1 = arith.constant 0 : i32
    return %c0_i32, %c0_i32_0 : i32, i32
  }
  func.func @transform_10(%arg0: i32) -> (i32, i32) {
    %c0_i32 = arith.constant 0 : i32
    %c0_i32_0 = arith.constant 0 : i32
    %c0_i32_1 = arith.constant 0 : i32
    return %c0_i32, %c0_i32_0 : i32, i32
  }
  func.func @transform_11(%arg0: i32) -> (i32, i32) {
    %c0_i32 = arith.constant 0 : i32
    %c0_i32_0 = arith.constant 0 : i32
    %c0_i32_1 = arith.constant 0 : i32
    return %c0_i32, %c0_i32_0 : i32, i32
  }
  func.func @transform_12(%arg0: i32) -> (i32, i32) {
    %c0_i32 = arith.constant 0 : i32
    %c0_i32_0 = arith.constant 0 : i32
    %c0_i32_1 = arith.constant 0 : i32
    return %c0_i32, %c0_i32_0 : i32, i32
  }
  func.func @transform_13(%arg0: i32) -> (i32, i32) {
    %c0_i32 = arith.constant 0 : i32
    %c0_i32_0 = arith.constant 0 : i32
    %c0_i32_1 = arith.constant 0 : i32
    return %c0_i32, %c0_i32_0 : i32, i32
  }
  func.func @transform_14(%arg0: i32) -> (i32, i32) {
    %c0_i32 = arith.constant 0 : i32
    %c0_i32_0 = arith.constant 0 : i32
    %c0_i32_1 = arith.constant 0 : i32
    return %c0_i32, %c0_i32_0 : i32, i32
  }
  func.func @transform_15(%arg0: i32) -> (i32, i32) {
    %c0_i32 = arith.constant 0 : i32
    %c0_i32_0 = arith.constant 0 : i32
    %c0_i32_1 = arith.constant 0 : i32
    return %c0_i32, %c0_i32_0 : i32, i32
  }
  func.func @transform_16(%arg0: i32) -> (i32, i32) {
    %c0_i32 = arith.constant 0 : i32
    %c0_i32_0 = arith.constant 0 : i32
    %c0_i32_1 = arith.constant 0 : i32
    return %c0_i32, %c0_i32_0 : i32, i32
  }
  func.func @transform_17(%arg0: i32) -> (i32, i32) {
    %c0_i32 = arith.constant 0 : i32
    %c0_i32_0 = arith.constant 0 : i32
    %c0_i32_1 = arith.constant 0 : i32
    return %c0_i32, %c0_i32_0 : i32, i32
  }
  func.func @transform_18(%arg0: i32) -> (i32, i32) {
    %c0_i32 = arith.constant 0 : i32
    %c0_i32_0 = arith.constant 0 : i32
    %c0_i32_1 = arith.constant 0 : i32
    return %c0_i32, %c0_i32_0 : i32, i32
  }
  func.func @transform_19(%arg0: i32) -> (i32, i32) {
    %c0_i32 = arith.constant 0 : i32
    %c0_i32_0 = arith.constant 0 : i32
    %c0_i32_1 = arith.constant 0 : i32
    return %c0_i32, %c0_i32_0 : i32, i32
  }
  func.func @transform_20(%arg0: i32) -> (i32, i32) {
    %c0_i32 = arith.constant 0 : i32
    %c0_i32_0 = arith.constant 0 : i32
    %c0_i32_1 = arith.constant 0 : i32
    return %c0_i32, %c0_i32_0 : i32, i32
  }
  func.func @transform_21(%arg0: i32) -> (i32, i32) {
    %c0_i32 = arith.constant 0 : i32
    %c0_i32_0 = arith.constant 0 : i32
    %c0_i32_1 = arith.constant 0 : i32
    return %c0_i32, %c0_i32_0 : i32, i32
  }
  func.func @transform_22(%arg0: i32) -> (i32, i32) {
    %c0_i32 = arith.constant 0 : i32
    %c0_i32_0 = arith.constant 0 : i32
    %c0_i32_1 = arith.constant 0 : i32
    return %c0_i32, %c0_i32_0 : i32, i32
  }
  func.func @transform_23(%arg0: i32) -> (i32, i32) {
    %c0_i32 = arith.constant 0 : i32
    %c0_i32_0 = arith.constant 0 : i32
    %c0_i32_1 = arith.constant 0 : i32
    return %c0_i32, %c0_i32_0 : i32, i32
  }
}

</mosaic_0001>

<llo_original>
// kernel: tpu_custom_call.1
$region0: #{tpu_custom_call.1}
  #allocation0 [shape = 'u32[]', space=smem, size = 0x4, offset = 0x4, fixed_abs, tag = 'smem constant byte address 0x4 - core index']
  #allocation1 [shape = 'u32[144,128]{1,0:T(1,128)}', space=vmem, size = 0x12000, scoped, tag = 'internal scratch']
  #allocation2 [shape = 'f32[1,1]{1,0:T(1,128)S(1)}', space=vmem, size = 0x200, scoped, tag = 'scoped memory for tpu_custom_call.1']
  %s0 = inlined_call_operand.vmem [shape: f32[2,6,16], index: 0, kind: input, shape index: {}]
  %s1 = inlined_call_operand.vmem [shape: f32[2,6,6], index: 1, kind: input, shape index: {}]
  %s2 = inlined_call_operand.vmem [shape: f32[2,6,16], index: 2, kind: input, shape index: {}]
  %s3 = inlined_call_operand.vmem [shape: f32[2,6,16], index: 3, kind: input, shape index: {}]
  %s4 = inlined_call_operand.vmem [shape: f32[2,6,6], index: 4, kind: input, shape index: {}]
  %s5 = inlined_call_operand.vmem [shape: f32[2,6,16], index: 5, kind: input, shape index: {}]
  %s6 = inlined_call_operand.vmem [shape: f32[16,32], index: 6, kind: input, shape index: {}]
  %s7 = inlined_call_operand.vmem [shape: f32[1,32], index: 7, kind: input, shape index: {}]
  %s8 = inlined_call_operand.vmem [shape: f32[128,128], index: 8, kind: input, shape index: {}]
  %s9 = inlined_call_operand.vmem [shape: f32[1,128], index: 9, kind: input, shape index: {}]
  %s10 = inlined_call_operand.vmem [shape: f32[128,128], index: 10, kind: input, shape index: {}]
  %s11 = inlined_call_operand.vmem [shape: f32[1,128], index: 11, kind: input, shape index: {}]
  %s12 = inlined_call_operand.vmem [shape: f32[128,16], index: 12, kind: input, shape index: {}]
  %s13 = inlined_call_operand.vmem [shape: f32[1,16], index: 13, kind: input, shape index: {}]
  %s14 = inlined_call_operand.vmem [shape: f32[32,32], index: 14, kind: input, shape index: {}]
  %s15 = inlined_call_operand.<no memory space> [shape: f32[1,1], index: 15, kind: input, shape index: {}]
  %s16 = inlined_call_operand.hbm [shape: f32[2,16], index: 16, kind: output, shape index: {0}]
  %s17 = inlined_call_operand.hbm [shape: f32[2,16], index: 17, kind: output, shape index: {1}]
  %s18 = inlined_call_operand.vmem [shape: f32[4,1], index: 18, kind: output, shape index: {2}]
  %s19 = inlined_call_operand.vmem [shape: f32[4,1], index: 19, kind: output, shape index: {3}]
  %s20 = inlined_call_operand.vmem [shape: f32[2,1], index: 20, kind: output, shape index: {4}]
  %s21 = inlined_call_operand.vmem [shape: f32[2,1], index: 21, kind: output, shape index: {5}]
  %s22 = inlined_call_operand.vmem [shape: f32[2,1], index: 22, kind: output, shape index: {6}]
  %s23 = inlined_call_operand.vmem [shape: f32[2,1], index: 23, kind: output, shape index: {7}]
  %24 = xla_tuple %s16, %s17, %s18, %s19, %s20, %s21, %s22, %s23
  %s25 = sld [smem:[#allocation0]]
  $region130: #{tpu_custom_call.1} parent=0
    _
  %s27 = ssub.s32 1, %s25
  %s28 = scalar_select 0, %s27, %s25
  %v29 = vstv %s15
  %30 = vst [vmem:[#allocation2] sm:$0x1] %v29
  $region1: #{tpu_custom_call.1} parent=0
    #allocation3 [shape = 'u8[1024]{0}', space=vmem, size = 0x400, scoped, tag = 'output window, operand 0, single buffered']
    #allocation4 [shape = 's32[1]{0}', space=sflag, size = 0x4, scoped, tag = 'scoped memory for tpu_custom_call.1']
    #allocation5 [shape = 'u8[1024]{0}', space=vmem, size = 0x400, scoped, tag = 'output window, operand 1, single buffered']
    #allocation6 [shape = 's32[1]{0}', space=sflag, size = 0x4, scoped, tag = 'scoped memory for tpu_custom_call.1']
    %31 = vsyncpa [#allocation4], 0
    %32 = vsyncpa [#allocation6], 0
    // Predicated region
    $region2: #{tpu_custom_call.1} parent=1 // pred_check
      _
    $region3: #{tpu_custom_call.1} parent=1 // pred_check_branch
      %34 = sbr.rel (0) target = $region5
    $region4: #{tpu_custom_call.1} parent=1 // pred_region
      _
    $region5: #{tpu_custom_call.1} parent=1 // pred_fallthru
      _
    // Predicated region
    $region6: #{tpu_custom_call.1} parent=1 // pred_check
      _
    $region7: #{tpu_custom_call.1} parent=1 // pred_check_branch
      %36 = sbr.rel (0) target = $region9
    $region8: #{tpu_custom_call.1} parent=1 // pred_region
      _
    $region9: #{tpu_custom_call.1} parent=1 // pred_fallthru
      _
    // Predicated region
    $region10: #{tpu_custom_call.1} parent=1 // pred_check
      _
    $region11: #{tpu_custom_call.1} parent=1 // pred_check_branch
      %38 = sbr.rel (0) target = $region13
    $region12: #{tpu_custom_call.1} parent=1 // pred_region
      _
    $region13: #{tpu_custom_call.1} parent=1 // pred_fallthru
      _
    // Predicated region
    $region14: #{tpu_custom_call.1} parent=1 // pred_check
      _
    $region15: #{tpu_custom_call.1} parent=1 // pred_check_branch
      %40 = sbr.rel (0) target = $region17
    $region16: #{tpu_custom_call.1} parent=1 // pred_region
      _
    $region17: #{tpu_custom_call.1} parent=1 // pred_fallthru
      _
    // Predicated region
    $region18: #{tpu_custom_call.1} parent=1 // pred_check
      _
    $region19: #{tpu_custom_call.1} parent=1 // pred_check_branch
      %42 = sbr.rel (0) target = $region21
    $region20: #{tpu_custom_call.1} parent=1 // pred_region
      _
    $region21: #{tpu_custom_call.1} parent=1 // pred_fallthru
      _
    // Predicated region
    $region22: #{tpu_custom_call.1} parent=1 // pred_check
      _
    $region23: #{tpu_custom_call.1} parent=1 // pred_check_branch
      %44 = sbr.rel (0) target = $region25
    $region24: #{tpu_custom_call.1} parent=1 // pred_region
      _
    $region25: #{tpu_custom_call.1} parent=1 // pred_fallthru
      _
    // Predicated region
    $region26: #{tpu_custom_call.1} parent=1 // pred_check
      _
    $region27: #{tpu_custom_call.1} parent=1 // pred_check_branch
      %46 = sbr.rel (0) target = $region29
    $region28: #{tpu_custom_call.1} parent=1 // pred_region
      _
    $region29: #{tpu_custom_call.1} parent=1 // pred_fallthru
      _
    // Predicated region
    $region30: #{tpu_custom_call.1} parent=1 // pred_check
      _
    $region31: #{tpu_custom_call.1} parent=1 // pred_check_branch
      %48 = sbr.rel (0) target = $region33
    $region32: #{tpu_custom_call.1} parent=1 // pred_region
      _
    $region33: #{tpu_custom_call.1} parent=1 // pred_fallthru
      _
    // Predicated region
    $region34: #{tpu_custom_call.1} parent=1 // pred_check
      _
    $region35: #{tpu_custom_call.1} parent=1 // pred_check_branch
      %50 = sbr.rel (0) target = $region37
    $region36: #{tpu_custom_call.1} parent=1 // pred_region
      _
    $region37: #{tpu_custom_call.1} parent=1 // pred_fallthru
      _
    // Predicated region
    $region38: #{tpu_custom_call.1} parent=1 // pred_check
      _
    $region39: #{tpu_custom_call.1} parent=1 // pred_check_branch
      %52 = sbr.rel (0) target = $region41
    $region40: #{tpu_custom_call.1} parent=1 // pred_region
      _
    $region41: #{tpu_custom_call.1} parent=1 // pred_fallthru
      _
    // Predicated region
    $region42: #{tpu_custom_call.1} parent=1 // pred_check
      _
    $region43: #{tpu_custom_call.1} parent=1 // pred_check_branch
      %54 = sbr.rel (0) target = $region45
    $region44: #{tpu_custom_call.1} parent=1 // pred_region
      _
    $region45: #{tpu_custom_call.1} parent=1 // pred_fallthru
      _
    // Predicated region
    $region46: #{tpu_custom_call.1} parent=1 // pred_check
      _
    $region47: #{tpu_custom_call.1} parent=1 // pred_check_branch
      %56 = sbr.rel (0) target = $region49
    $region48: #{tpu_custom_call.1} parent=1 // pred_region
      _
    $region49: #{tpu_custom_call.1} parent=1 // pred_fallthru
      _
    // Predicated region
    $region50: #{tpu_custom_call.1} parent=1 // pred_check
      _
    $region51: #{tpu_custom_call.1} parent=1 // pred_check_branch
      %58 = sbr.rel (0) target = $region53
    $region52: #{tpu_custom_call.1} parent=1 // pred_region
      _
    $region53: #{tpu_custom_call.1} parent=1 // pred_fallthru
      _
    // Predicated region
    $region54: #{tpu_custom_call.1} parent=1 // pred_check
      _
    $region55: #{tpu_custom_call.1} parent=1 // pred_check_branch
      %60 = sbr.rel (0) target = $region57
    $region56: #{tpu_custom_call.1} parent=1 // pred_region
      _
    $region57: #{tpu_custom_call.1} parent=1 // pred_fallthru
      _
    // Predicated region
    $region58: #{tpu_custom_call.1} parent=1 // pred_check
      _
    $region59: #{tpu_custom_call.1} parent=1 // pred_check_branch
      %62 = sbr.rel (0) target = $region61
    $region60: #{tpu_custom_call.1} parent=1 // pred_region
      _
    $region61: #{tpu_custom_call.1} parent=1 // pred_fallthru
      _
    // Predicated region
    $region62: #{tpu_custom_call.1} parent=1 // pred_check
      _
    $region63: #{tpu_custom_call.1} parent=1 // pred_check_branch
      %64 = sbr.rel (0) target = $region65
    $region64: #{tpu_custom_call.1} parent=1 // pred_region
      _
    $region65: #{tpu_custom_call.1} parent=1 // pred_fallthru
      _
    %v65 = vld [vmem:[%s6] sm:$0xff]
    %v66 = vld [vmem:[%s6 + $0x8] sm:$0xff]
    %v67 = vld [vmem:[%s7] sm:$0x1]
    %v68 = vld [vmem:[%s0] sm:$0x3f]
    %vm69 = vcmask 130048
    %v71 = vsel %vm69, %v68, 0
    %73 = vmatprep.subr.mxu0 0.0
    %74 = vmatpush1.msra.mxu0 %v65
    %75 = vmatprep.subr.mxu0 0.0
    %76 = vmatpush1.msra.mxu0 %v66
    %77 = vmatprep.subr.mxu0 0.0
    %78 = vmatpush1.msra.mxu0 0.0
    %79 = vmatprep.subr.mxu0 0.0
    %80 = vmatpush1.msra.mxu0 0.0
    %81 = vmatprep.subr.mxu0 0.0
    %82 = vmatpush1.msra.mxu0 0.0
    %83 = vmatprep.subr.mxu0 0.0
    %84 = vmatpush1.msra.mxu0 0.0
    %85 = vmatprep.subr.mxu0 0.0
    %86 = vmatpush1.msra.mxu0 0.0
    %87 = vmatprep.subr.mxu0 0.0
    %88 = vmatpush1.msra.mxu0 0.0
    %89 = vmatprep.subr.mxu0 0.0
    %90 = vmatpush1.msra.mxu0 0.0
    %91 = vmatprep.subr.mxu0 0.0
    %92 = vmatpush1.msra.mxu0 0.0
    %93 = vmatprep.subr.mxu0 0.0
    %94 = vmatpush1.msra.mxu0 0.0
    %95 = vmatprep.subr.mxu0 0.0
    %96 = vmatpush1.msra.mxu0 0.0
    %97 = vmatprep.subr.mxu0 0.0
    %98 = vmatpush1.msra.mxu0 0.0
    %99 = vmatprep.subr.mxu0 0.0
    %100 = vmatpush1.msra.mxu0 0.0
    %101 = vmatprep.subr.mxu0 0.0
    %102 = vmatpush1.msra.mxu0 0.0
    %103 = vmatprep.subr.mxu0 0.0
    %104 = vmatpush1.msra.mxu0 0.0
    %105 = vmatprep.subr.mxu0 0.0
    %106 = vmatpush1.msra.mxu0 0.0
    %107 = vmatprep.subr.mxu0 0.0
    %108 = vmatpush1.msra.mxu0 0.0
    %109 = vmatprep.subr.mxu0 0.0
    %110 = vmatpush1.msra.mxu0 0.0
    %111 = vmatprep.subr.mxu0 0.0
    %112 = vmatpush1.msra.mxu0 0.0
    %113 = vmatprep.subr.mxu0 0.0
    %114 = vmatpush1.msra.mxu0 0.0
    %115 = vmatprep.subr.mxu0 0.0
    %116 = vmatpush1.msra.mxu0 0.0
    %117 = vmatprep.subr.mxu0 0.0
    %118 = vmatpush1.msra.mxu0 0.0
    %119 = vmatprep.subr.mxu0 0.0
    %120 = vmatpush1.msra.mxu0 0.0
    %121 = vmatprep.subr.mxu0 0.0
    %122 = vmatpush1.msra.mxu0 0.0
    %123 = vmatprep.subr.mxu0 0.0
    %124 = vmatpush1.msra.mxu0 0.0
    %125 = vmatprep.subr.mxu0 0.0
    %126 = vmatpush1.msra.mxu0 0.0
    %127 = vmatprep.subr.mxu0 0.0
    %128 = vmatpush1.msra.mxu0 0.0
    %129 = vmatprep.subr.mxu0 0.0
    %130 = vmatpush1.msra.mxu0 0.0
    %131 = vmatprep.subr.mxu0 0.0
    %132 = vmatpush1.msra.mxu0 0.0
    %133 = vmatprep.subr.mxu0 0.0
    %134 = vmatpush1.msra.mxu0 0.0
    %135 = vmatprep.subr.mxu0 0.0
    %136 = vmatpush1.msra.mxu0 0.0
    %137 = vmatprep.mubr.f32.mxu0 0.0
    %138 = vmatmul.mubr.f32.gmra.mrb[0].mxu0 %v71
    %v139 = vpop.f32.mrb[0].mxu0
    %v140 = vadd.f32 0.0, %v139
    %v141 = vpop.f32.mrb[0].mxu0
    %142 = vdwg.mxu0
    %v143 = vld [vmem:[%s1] sm:$0x3f]
    %v145 = vlaneseq
    %v146 = vshrl.u32 %v145, 7
    %v147 = vsub.s32 0, %v146
    %v148 = vrot.slane %v67, %v147
    %vm150 = vcmask 48128
    %v152 = vsel %vm150, %v143, 0
    %vm154 = vcmask 1045504
    %v156 = vsel %vm154, %v140, 0
    %158 = vmatprep.subr.mxu0 0.0
    %159 = vmatpush1.msra.mxu0 %v156
    %160 = vmatprep.subr.mxu0 0.0
    %161 = vmatpush1.msra.mxu0 0.0
    %162 = vmatprep.subr.mxu0 0.0
    %163 = vmatpush1.msra.mxu0 0.0
    %164 = vmatprep.subr.mxu0 0.0
    %165 = vmatpush1.msra.mxu0 0.0
    %166 = vmatprep.subr.mxu0 0.0
    %167 = vmatpush1.msra.mxu0 0.0
    %168 = vmatprep.subr.mxu0 0.0
    %169 = vmatpush1.msra.mxu0 0.0
    %170 = vmatprep.subr.mxu0 0.0
    %171 = vmatpush1.msra.mxu0 0.0
    %172 = vmatprep.subr.mxu0 0.0
    %173 = vmatpush1.msra.mxu0 0.0
    %174 = vmatprep.subr.mxu0 0.0
    %175 = vmatpush1.msra.mxu0 0.0
    %176 = vmatprep.subr.mxu0 0.0
    %177 = vmatpush1.msra.mxu0 0.0
    %178 = vmatprep.subr.mxu0 0.0
    %179 = vmatpush1.msra.mxu0 0.0
    %180 = vmatprep.subr.mxu0 0.0
    %181 = vmatpush1.msra.mxu0 0.0
    %182 = vmatprep.subr.mxu0 0.0
    %183 = vmatpush1.msra.mxu0 0.0
    %184 = vmatprep.subr.mxu0 0.0
    %185 = vmatpush1.msra.mxu0 0.0
    %186 = vmatprep.subr.mxu0 0.0
    %187 = vmatpush1.msra.mxu0 0.0
    %188 = vmatprep.subr.mxu0 0.0
    %189 = vmatpush1.msra.mxu0 0.0
    %190 = vmatprep.subr.mxu0 0.0
    %191 = vmatpush1.msra.mxu0 0.0
    %192 = vmatprep.subr.mxu0 0.0
    %193 = vmatpush1.msra.mxu0 0.0
    %194 = vmatprep.subr.mxu0 0.0
    %195 = vmatpush1.msra.mxu0 0.0
    %196 = vmatprep.subr.mxu0 0.0
    %197 = vmatpush1.msra.mxu0 0.0
    %198 = vmatprep.subr.mxu0 0.0
    %199 = vmatpush1.msra.mxu0 0.0
    %200 = vmatprep.subr.mxu0 0.0
    %201 = vmatpush1.msra.mxu0 0.0
    %202 = vmatprep.subr.mxu0 0.0
    %203 = vmatpush1.msra.mxu0 0.0
    %204 = vmatprep.subr.mxu0 0.0
    %205 = vmatpush1.msra.mxu0 0.0
    %206 = vmatprep.subr.mxu0 0.0
    %207 = vmatpush1.msra.mxu0 0.0
    %208 = vmatprep.subr.mxu0 0.0
    %209 = vmatpush1.msra.mxu0 0.0
    %210 = vmatprep.subr.mxu0 0.0
    %211 = vmatpush1.msra.mxu0 0.0
    %212 = vmatprep.subr.mxu0 0.0
    %213 = vmatpush1.msra.mxu0 0.0
    %214 = vmatprep.subr.mxu0 0.0
    %215 = vmatpush1.msra.mxu0 0.0
    %216 = vmatprep.subr.mxu0 0.0
    %217 = vmatpush1.msra.mxu0 0.0
    %218 = vmatprep.subr.mxu0 0.0
    %219 = vmatpush1.msra.mxu0 0.0
    %220 = vmatprep.subr.mxu0 0.0
    %221 = vmatpush1.msra.mxu0 0.0
    %222 = vmatprep.mubr.f32.mxu0 0.0
    %223 = vmatmul.mubr.f32.gmra.mrb[0].mxu0 %v152
    %v224 = vpop.f32.mrb[0].mxu0
    %v225 = vadd.f32 %v148, %v224
    %v226 = vpop.f32.mrb[0].mxu0
    %227 = vdwg.mxu0
    %vm228 = vcmp.gt.f32.partialorder %v225, 0.0
    %v229 = vmul.f32 %v225, 0.25
    %v230 = vsel %vm228, %v225, %v229
    %s231 = scalar_lea.vmem %s0, 8
    %v232 = vld [vmem:[%s231] sm:$0x3f]
    %v234 = vsel %vm69, %v232, 0
    %236 = vmatprep.subr.mxu0 0.0
    %237 = vmatpush1.msra.mxu0 %v65
    %238 = vmatprep.subr.mxu0 0.0
    %239 = vmatpush1.msra.mxu0 %v66
    %240 = vmatprep.subr.mxu0 0.0
    %241 = vmatpush1.msra.mxu0 0.0
    %242 = vmatprep.subr.mxu0 0.0
    %243 = vmatpush1.msra.mxu0 0.0
    %244 = vmatprep.subr.mxu0 0.0
    %245 = vmatpush1.msra.mxu0 0.0
    %246 = vmatprep.subr.mxu0 0.0
    %247 = vmatpush1.msra.mxu0 0.0
    %248 = vmatprep.subr.mxu0 0.0
    %249 = vmatpush1.msra.mxu0 0.0
    %250 = vmatprep.subr.mxu0 0.0
    %251 = vmatpush1.msra.mxu0 0.0
    %252 = vmatprep.subr.mxu0 0.0
    %253 = vmatpush1.msra.mxu0 0.0
    %254 = vmatprep.subr.mxu0 0.0
    %255 = vmatpush1.msra.mxu0 0.0
    %256 = vmatprep.subr.mxu0 0.0
    %257 = vmatpush1.msra.mxu0 0.0
    %258 = vmatprep.subr.mxu0 0.0
    %259 = vmatpush1.msra.mxu0 0.0
    %260 = vmatprep.subr.mxu0 0.0
    %261 = vmatpush1.msra.mxu0 0.0
    %262 = vmatprep.subr.mxu0 0.0
    %263 = vmatpush1.msra.mxu0 0.0
    %264 = vmatprep.subr.mxu0 0.0
    %265 = vmatpush1.msra.mxu0 0.0
    %266 = vmatprep.subr.mxu0 0.0
    %267 = vmatpush1.msra.mxu0 0.0
    %268 = vmatprep.subr.mxu0 0.0
    %269 = vmatpush1.msra.mxu0 0.0
    %270 = vmatprep.subr.mxu0 0.0
    %271 = vmatpush1.msra.mxu0 0.0
    %272 = vmatprep.subr.mxu0 0.0
    %273 = vmatpush1.msra.mxu0 0.0
    %274 = vmatprep.subr.mxu0 0.0
    %275 = vmatpush1.msra.mxu0 0.0
    %276 = vmatprep.subr.mxu0 0.0
    %277 = vmatpush1.msra.mxu0 0.0
    %278 = vmatprep.subr.mxu0 0.0
    %279 = vmatpush1.msra.mxu0 0.0
    %280 = vmatprep.subr.mxu0 0.0
    %281 = vmatpush1.msra.mxu0 0.0
    %282 = vmatprep.subr.mxu0 0.0
    %283 = vmatpush1.msra.mxu0 0.0
    %284 = vmatprep.subr.mxu0 0.0
    %285 = vmatpush1.msra.mxu0 0.0
    %286 = vmatprep.subr.mxu0 0.0
    %287 = vmatpush1.msra.mxu0 0.0
    %288 = vmatprep.subr.mxu0 0.0
    %289 = vmatpush1.msra.mxu0 0.0
    %290 = vmatprep.subr.mxu0 0.0
    %291 = vmatpush1.msra.mxu0 0.0
    %292 = vmatprep.subr.mxu0 0.0
    %293 = vmatpush1.msra.mxu0 0.0
    %294 = vmatprep.subr.mxu0 0.0
    %295 = vmatpush1.msra.mxu0 0.0
    %296 = vmatprep.subr.mxu0 0.0
    %297 = vmatpush1.msra.mxu0 0.0
    %298 = vmatprep.subr.mxu0 0.0
    %299 = vmatpush1.msra.mxu0 0.0
    %300 = vmatprep.mubr.f32.mxu0 0.0
    %301 = vmatmul.mubr.f32.gmra.mrb[0].mxu0 %v234
    %v302 = vpop.f32.mrb[0].mxu0
    %v303 = vadd.f32 0.0, %v302
    %v304 = vpop.f32.mrb[0].mxu0
    %305 = vdwg.mxu0
    %s306 = scalar_lea.vmem %s1, 8
    %v307 = vld [vmem:[%s306] sm:$0x3f]
    %v309 = vsel %vm150, %v307, 0
    %v312 = vsel %vm154, %v303, 0
    %314 = vmatprep.subr.mxu0 0.0
    %315 = vmatpush1.msra.mxu0 %v312
    %316 = vmatprep.subr.mxu0 0.0
    %317 = vmatpush1.msra.mxu0 0.0
    %318 = vmatprep.subr.mxu0 0.0
    %319 = vmatpush1.msra.mxu0 0.0
    %320 = vmatprep.subr.mxu0 0.0
    %321 = vmatpush1.msra.mxu0 0.0
    %322 = vmatprep.subr.mxu0 0.0
    %323 = vmatpush1.msra.mxu0 0.0
    %324 = vmatprep.subr.mxu0 0.0
    %325 = vmatpush1.msra.mxu0 0.0
    %326 = vmatprep.subr.mxu0 0.0
    %327 = vmatpush1.msra.mxu0 0.0
    %328 = vmatprep.subr.mxu0 0.0
    %329 = vmatpush1.msra.mxu0 0.0
    %330 = vmatprep.subr.mxu0 0.0
    %331 = vmatpush1.msra.mxu0 0.0
    %332 = vmatprep.subr.mxu0 0.0
    %333 = vmatpush1.msra.mxu0 0.0
    %334 = vmatprep.subr.mxu0 0.0
    %335 = vmatpush1.msra.mxu0 0.0
    %336 = vmatprep.subr.mxu0 0.0
    %337 = vmatpush1.msra.mxu0 0.0
    %338 = vmatprep.subr.mxu0 0.0
    %339 = vmatpush1.msra.mxu0 0.0
    %340 = vmatprep.subr.mxu0 0.0
    %341 = vmatpush1.msra.mxu0 0.0
    %342 = vmatprep.subr.mxu0 0.0
    %343 = vmatpush1.msra.mxu0 0.0
    %344 = vmatprep.subr.mxu0 0.0
    %345 = vmatpush1.msra.mxu0 0.0
    %346 = vmatprep.subr.mxu0 0.0
    %347 = vmatpush1.msra.mxu0 0.0
    %348 = vmatprep.subr.mxu0 0.0
    %349 = vmatpush1.msra.mxu0 0.0
    %350 = vmatprep.subr.mxu0 0.0
    %351 = vmatpush1.msra.mxu0 0.0
    %352 = vmatprep.subr.mxu0 0.0
    %353 = vmatpush1.msra.mxu0 0.0
    %354 = vmatprep.subr.mxu0 0.0
    %355 = vmatpush1.msra.mxu0 0.0
    %356 = vmatprep.subr.mxu0 0.0
    %357 = vmatpush1.msra.mxu0 0.0
    %358 = vmatprep.subr.mxu0 0.0
    %359 = vmatpush1.msra.mxu0 0.0
    %360 = vmatprep.subr.mxu0 0.0
    %361 = vmatpush1.msra.mxu0 0.0
    %362 = vmatprep.subr.mxu0 0.0
    %363 = vmatpush1.msra.mxu0 0.0
    %364 = vmatprep.subr.mxu0 0.0
    %365 = vmatpush1.msra.mxu0 0.0
    %366 = vmatprep.subr.mxu0 0.0
    %367 = vmatpush1.msra.mxu0 0.0
    %368 = vmatprep.subr.mxu0 0.0
    %369 = vmatpush1.msra.mxu0 0.0
    %370 = vmatprep.subr.mxu0 0.0
    %371 = vmatpush1.msra.mxu0 0.0
    %372 = vmatprep.subr.mxu0 0.0
    %373 = vmatpush1.msra.mxu0 0.0
    %374 = vmatprep.subr.mxu0 0.0
    %375 = vmatpush1.msra.mxu0 0.0
    %376 = vmatprep.subr.mxu0 0.0
    %377 = vmatpush1.msra.mxu0 0.0
    %378 = vmatprep.mubr.f32.mxu0 0.0
    %379 = vmatmul.mubr.f32.gmra.mrb[0].mxu0 %v309
    %v380 = vpop.f32.mrb[0].mxu0
    %v381 = vadd.f32 %v148, %v380
    %v382 = vpop.f32.mrb[0].mxu0
    %383 = vdwg.mxu0
    %vm384 = vcmp.gt.f32.partialorder %v381, 0.0
    %v385 = vmul.f32 %v381, 0.25
    %v386 = vsel %vm384, %v381, %v385
    %v387 = vld [vmem:[%s3] sm:$0x3f]
    %v389 = vsel %vm69, %v387, 0
    %391 = vmatprep.subr.mxu0 0.0
    %392 = vmatpush1.msra.mxu0 %v65
    %393 = vmatprep.subr.mxu0 0.0
    %394 = vmatpush1.msra.mxu0 %v66
    %395 = vmatprep.subr.mxu0 0.0
    %396 = vmatpush1.msra.mxu0 0.0
    %397 = vmatprep.subr.mxu0 0.0
    %398 = vmatpush1.msra.mxu0 0.0
    %399 = vmatprep.subr.mxu0 0.0
    %400 = vmatpush1.msra.mxu0 0.0
    %401 = vmatprep.subr.mxu0 0.0
    %402 = vmatpush1.msra.mxu0 0.0
    %403 = vmatprep.subr.mxu0 0.0
    %404 = vmatpush1.msra.mxu0 0.0
    %405 = vmatprep.subr.mxu0 0.0
    %406 = vmatpush1.msra.mxu0 0.0
    %407 = vmatprep.subr.mxu0 0.0
    %408 = vmatpush1.msra.mxu0 0.0
    %409 = vmatprep.subr.mxu0 0.0
    %410 = vmatpush1.msra.mxu0 0.0
    %411 = vmatprep.subr.mxu0 0.0
    %412 = vmatpush1.msra.mxu0 0.0
    %413 = vmatprep.subr.mxu0 0.0
    %414 = vmatpush1.msra.mxu0 0.0
    %415 = vmatprep.subr.mxu0 0.0
    %416 = vmatpush1.msra.mxu0 0.0
    %417 = vmatprep.subr.mxu0 0.0
    %418 = vmatpush1.msra.mxu0 0.0
    %419 = vmatprep.subr.mxu0 0.0
    %420 = vmatpush1.msra.mxu0 0.0
    %421 = vmatprep.subr.mxu0 0.0
    %422 = vmatpush1.msra.mxu0 0.0
    %423 = vmatprep.subr.mxu0 0.0
    %424 = vmatpush1.msra.mxu0 0.0
    %425 = vmatprep.subr.mxu0 0.0
    %426 = vmatpush1.msra.mxu0 0.0
    %427 = vmatprep.subr.mxu0 0.0
    %428 = vmatpush1.msra.mxu0 0.0
    %429 = vmatprep.subr.mxu0 0.0
    %430 = vmatpush1.msra.mxu0 0.0
    %431 = vmatprep.subr.mxu0 0.0
    %432 = vmatpush1.msra.mxu0 0.0
    %433 = vmatprep.subr.mxu0 0.0
    %434 = vmatpush1.msra.mxu0 0.0
    %435 = vmatprep.subr.mxu0 0.0
    %436 = vmatpush1.msra.mxu0 0.0
    %437 = vmatprep.subr.mxu0 0.0
    %438 = vmatpush1.msra.mxu0 0.0
    %439 = vmatprep.subr.mxu0 0.0
    %440 = vmatpush1.msra.mxu0 0.0
    %441 = vmatprep.subr.mxu0 0.0
    %442 = vmatpush1.msra.mxu0 0.0
    %443 = vmatprep.subr.mxu0 0.0
    %444 = vmatpush1.msra.mxu0 0.0
    %445 = vmatprep.subr.mxu0 0.0
    %446 = vmatpush1.msra.mxu0 0.0
    %447 = vmatprep.subr.mxu0 0.0
    %448 = vmatpush1.msra.mxu0 0.0
    %449 = vmatprep.subr.mxu0 0.0
    %450 = vmatpush1.msra.mxu0 0.0
    %451 = vmatprep.subr.mxu0 0.0
    %452 = vmatpush1.msra.mxu0 0.0
    %453 = vmatprep.subr.mxu0 0.0
    %454 = vmatpush1.msra.mxu0 0.0
    %455 = vmatprep.mubr.f32.mxu0 0.0
    %456 = vmatmul.mubr.f32.gmra.mrb[0].mxu0 %v389
    %v457 = vpop.f32.mrb[0].mxu0
    %v458 = vadd.f32 0.0, %v457
    %v459 = vpop.f32.mrb[0].mxu0
    %460 = vdwg.mxu0
    %v461 = vld [vmem:[%s4] sm:$0x3f]
    %v463 = vsel %vm150, %v461, 0
    %v466 = vsel %vm154, %v458, 0
    %468 = vmatprep.subr.mxu0 0.0
    %469 = vmatpush1.msra.mxu0 %v466
    %470 = vmatprep.subr.mxu0 0.0
    %471 = vmatpush1.msra.mxu0 0.0
    %472 = vmatprep.subr.mxu0 0.0
    %473 = vmatpush1.msra.mxu0 0.0
    %474 = vmatprep.subr.mxu0 0.0
    %475 = vmatpush1.msra.mxu0 0.0
    %476 = vmatprep.subr.mxu0 0.0
    %477 = vmatpush1.msra.mxu0 0.0
    %478 = vmatprep.subr.mxu0 0.0
    %479 = vmatpush1.msra.mxu0 0.0
    %480 = vmatprep.subr.mxu0 0.0
    %481 = vmatpush1.msra.mxu0 0.0
    %482 = vmatprep.subr.mxu0 0.0
    %483 = vmatpush1.msra.mxu0 0.0
    %484 = vmatprep.subr.mxu0 0.0
    %485 = vmatpush1.msra.mxu0 0.0
    %486 = vmatprep.subr.mxu0 0.0
    %487 = vmatpush1.msra.mxu0 0.0
    %488 = vmatprep.subr.mxu0 0.0
    %489 = vmatpush1.msra.mxu0 0.0
    %490 = vmatprep.subr.mxu0 0.0
    %491 = vmatpush1.msra.mxu0 0.0
    %492 = vmatprep.subr.mxu0 0.0
    %493 = vmatpush1.msra.mxu0 0.0
    %494 = vmatprep.subr.mxu0 0.0
    %495 = vmatpush1.msra.mxu0 0.0
    %496 = vmatprep.subr.mxu0 0.0
    %497 = vmatpush1.msra.mxu0 0.0
    %498 = vmatprep.subr.mxu0 0.0
    %499 = vmatpush1.msra.mxu0 0.0
    %500 = vmatprep.subr.mxu0 0.0
    %501 = vmatpush1.msra.mxu0 0.0
    %502 = vmatprep.subr.mxu0 0.0
    %503 = vmatpush1.msra.mxu0 0.0
    %504 = vmatprep.subr.mxu0 0.0
    %505 = vmatpush1.msra.mxu0 0.0
    %506 = vmatprep.subr.mxu0 0.0
    %507 = vmatpush1.msra.mxu0 0.0
    %508 = vmatprep.subr.mxu0 0.0
    %509 = vmatpush1.msra.mxu0 0.0
    %510 = vmatprep.subr.mxu0 0.0
    %511 = vmatpush1.msra.mxu0 0.0
    %512 = vmatprep.subr.mxu0 0.0
    %513 = vmatpush1.msra.mxu0 0.0
    %514 = vmatprep.subr.mxu0 0.0
    %515 = vmatpush1.msra.mxu0 0.0
    %516 = vmatprep.subr.mxu0 0.0
    %517 = vmatpush1.msra.mxu0 0.0
    %518 = vmatprep.subr.mxu0 0.0
    %519 = vmatpush1.msra.mxu0 0.0
    %520 = vmatprep.subr.mxu0 0.0
    %521 = vmatpush1.msra.mxu0 0.0
    %522 = vmatprep.subr.mxu0 0.0
    %523 = vmatpush1.msra.mxu0 0.0
    %524 = vmatprep.subr.mxu0 0.0
    %525 = vmatpush1.msra.mxu0 0.0
    %526 = vmatprep.subr.mxu0 0.0
    %527 = vmatpush1.msra.mxu0 0.0
    %528 = vmatprep.subr.mxu0 0.0
    %529 = vmatpush1.msra.mxu0 0.0
    %530 = vmatprep.subr.mxu0 0.0
    %531 = vmatpush1.msra.mxu0 0.0
    %532 = vmatprep.mubr.f32.mxu0 0.0
    %533 = vmatmul.mubr.f32.gmra.mrb[0].mxu0 %v463
    %v534 = vpop.f32.mrb[0].mxu0
    %v535 = vadd.f32 %v148, %v534
    %v536 = vpop.f32.mrb[0].mxu0
    %537 = vdwg.mxu0
    %vm538 = vcmp.gt.f32.partialorder %v535, 0.0
    %v539 = vmul.f32 %v535, 0.25
    %v540 = vsel %vm538, %v535, %v539
    %s541 = scalar_lea.vmem %s3, 8
    %v542 = vld [vmem:[%s541] sm:$0x3f]
    %v544 = vsel %vm69, %v542, 0
    %546 = vmatprep.subr.mxu0 0.0
    %547 = vmatpush1.msra.mxu0 %v65
    %548 = vmatprep.subr.mxu0 0.0
    %549 = vmatpush1.msra.mxu0 %v66
    %550 = vmatprep.subr.mxu0 0.0
    %551 = vmatpush1.msra.mxu0 0.0
    %552 = vmatprep.subr.mxu0 0.0
    %553 = vmatpush1.msra.mxu0 0.0
    %554 = vmatprep.subr.mxu0 0.0
    %555 = vmatpush1.msra.mxu0 0.0
    %556 = vmatprep.subr.mxu0 0.0
    %557 = vmatpush1.msra.mxu0 0.0
    %558 = vmatprep.subr.mxu0 0.0
    %559 = vmatpush1.msra.mxu0 0.0
    %560 = vmatprep.subr.mxu0 0.0
    %561 = vmatpush1.msra.mxu0 0.0
    %562 = vmatprep.subr.mxu0 0.0
    %563 = vmatpush1.msra.mxu0 0.0
    %564 = vmatprep.subr.mxu0 0.0
    %565 = vmatpush1.msra.mxu0 0.0
    %566 = vmatprep.subr.mxu0 0.0
    %567 = vmatpush1.msra.mxu0 0.0
    %568 = vmatprep.subr.mxu0 0.0
    %569 = vmatpush1.msra.mxu0 0.0
    %570 = vmatprep.subr.mxu0 0.0
    %571 = vmatpush1.msra.mxu0 0.0
    %572 = vmatprep.subr.mxu0 0.0
    %573 = vmatpush1.msra.mxu0 0.0
    %574 = vmatprep.subr.mxu0 0.0
    %575 = vmatpush1.msra.mxu0 0.0
    %576 = vmatprep.subr.mxu0 0.0
    %577 = vmatpush1.msra.mxu0 0.0
    %578 = vmatprep.subr.mxu0 0.0
    %579 = vmatpush1.msra.mxu0 0.0
    %580 = vmatprep.subr.mxu0 0.0
    %581 = vmatpush1.msra.mxu0 0.0
    %582 = vmatprep.subr.mxu0 0.0
    %583 = vmatpush1.msra.mxu0 0.0
    %584 = vmatprep.subr.mxu0 0.0
    %585 = vmatpush1.msra.mxu0 0.0
    %586 = vmatprep.subr.mxu0 0.0
    %587 = vmatpush1.msra.mxu0 0.0
    %588 = vmatprep.subr.mxu0 0.0
    %589 = vmatpush1.msra.mxu0 0.0
    %590 = vmatprep.subr.mxu0 0.0
    %591 = vmatpush1.msra.mxu0 0.0
    %592 = vmatprep.subr.mxu0 0.0
    %593 = vmatpush1.msra.mxu0 0.0
    %594 = vmatprep.subr.mxu0 0.0
    %595 = vmatpush1.msra.mxu0 0.0
    %596 = vmatprep.subr.mxu0 0.0
    %597 = vmatpush1.msra.mxu0 0.0
    %598 = vmatprep.subr.mxu0 0.0
    %599 = vmatpush1.msra.mxu0 0.0
    %600 = vmatprep.subr.mxu0 0.0
    %601 = vmatpush1.msra.mxu0 0.0
    %602 = vmatprep.subr.mxu0 0.0
    %603 = vmatpush1.msra.mxu0 0.0
    %604 = vmatprep.subr.mxu0 0.0
    %605 = vmatpush1.msra.mxu0 0.0
    %606 = vmatprep.subr.mxu0 0.0
    %607 = vmatpush1.msra.mxu0 0.0
    %608 = vmatprep.subr.mxu0 0.0
    %609 = vmatpush1.msra.mxu0 0.0
    %610 = vmatprep.mubr.f32.mxu0 0.0
    %611 = vmatmul.mubr.f32.gmra.mrb[0].mxu0 %v544
    %v612 = vpop.f32.mrb[0].mxu0
    %v613 = vadd.f32 0.0, %v612
    %v614 = vpop.f32.mrb[0].mxu0
    %615 = vdwg.mxu0
    %s616 = scalar_lea.vmem %s4, 8
    %v617 = vld [vmem:[%s616] sm:$0x3f]
    %v619 = vsel %vm150, %v617, 0
    %v622 = vsel %vm154, %v613, 0
    %624 = vmatprep.subr.mxu0 0.0
    %625 = vmatpush1.msra.mxu0 %v622
    %626 = vmatprep.subr.mxu0 0.0
    %627 = vmatpush1.msra.mxu0 0.0
    %628 = vmatprep.subr.mxu0 0.0
    %629 = vmatpush1.msra.mxu0 0.0
    %630 = vmatprep.subr.mxu0 0.0
    %631 = vmatpush1.msra.mxu0 0.0
    %632 = vmatprep.subr.mxu0 0.0
    %633 = vmatpush1.msra.mxu0 0.0
    %634 = vmatprep.subr.mxu0 0.0
    %635 = vmatpush1.msra.mxu0 0.0
    %636 = vmatprep.subr.mxu0 0.0
    %637 = vmatpush1.msra.mxu0 0.0
    %638 = vmatprep.subr.mxu0 0.0
    %639 = vmatpush1.msra.mxu0 0.0
    %640 = vmatprep.subr.mxu0 0.0
    %641 = vmatpush1.msra.mxu0 0.0
    %642 = vmatprep.subr.mxu0 0.0
    %643 = vmatpush1.msra.mxu0 0.0
    %644 = vmatprep.subr.mxu0 0.0
    %645 = vmatpush1.msra.mxu0 0.0
    %646 = vmatprep.subr.mxu0 0.0
    %647 = vmatpush1.msra.mxu0 0.0
    %648 = vmatprep.subr.mxu0 0.0
    %649 = vmatpush1.msra.mxu0 0.0
    %650 = vmatprep.subr.mxu0 0.0
    %651 = vmatpush1.msra.mxu0 0.0
    %652 = vmatprep.subr.mxu0 0.0
    %653 = vmatpush1.msra.mxu0 0.0
    %654 = vmatprep.subr.mxu0 0.0
    %655 = vmatpush1.msra.mxu0 0.0
    %656 = vmatprep.subr.mxu0 0.0
    %657 = vmatpush1.msra.mxu0 0.0
    %658 = vmatprep.subr.mxu0 0.0
    %659 = vmatpush1.msra.mxu0 0.0
    %660 = vmatprep.subr.mxu0 0.0
    %661 = vmatpush1.msra.mxu0 0.0
    %662 = vmatprep.subr.mxu0 0.0
    %663 = vmatpush1.msra.mxu0 0.0
    %664 = vmatprep.subr.mxu0 0.0
    %665 = vmatpush1.msra.mxu0 0.0
    %666 = vmatprep.subr.mxu0 0.0
    %667 = vmatpush1.msra.mxu0 0.0
    %668 = vmatprep.subr.mxu0 0.0
    %669 = vmatpush1.msra.mxu0 0.0
    %670 = vmatprep.subr.mxu0 0.0
    %671 = vmatpush1.msra.mxu0 0.0
    %672 = vmatprep.subr.mxu0 0.0
    %673 = vmatpush1.msra.mxu0 0.0
    %674 = vmatprep.subr.mxu0 0.0
    %675 = vmatpush1.msra.mxu0 0.0
    %676 = vmatprep.subr.mxu0 0.0
    %677 = vmatpush1.msra.mxu0 0.0
    %678 = vmatprep.subr.mxu0 0.0
    %679 = vmatpush1.msra.mxu0 0.0
    %680 = vmatprep.subr.mxu0 0.0
    %681 = vmatpush1.msra.mxu0 0.0
    %682 = vmatprep.subr.mxu0 0.0
    %683 = vmatpush1.msra.mxu0 0.0
    %684 = vmatprep.subr.mxu0 0.0
    %685 = vmatpush1.msra.mxu0 0.0
    %686 = vmatprep.subr.mxu0 0.0
    %687 = vmatpush1.msra.mxu0 0.0
    %688 = vmatprep.mubr.f32.mxu0 0.0
    %689 = vmatmul.mubr.f32.gmra.mrb[0].mxu0 %v619
    %v690 = vpop.f32.mrb[0].mxu0
    %v691 = vadd.f32 %v148, %v690
    %v692 = vpop.f32.mrb[0].mxu0
    %693 = vdwg.mxu0
    %vm694 = vcmp.gt.f32.partialorder %v691, 0.0
    %v695 = vmul.f32 %v691, 0.25
    %v696 = vsel %vm694, %v691, %v695
    %v697 = vld [vmem:[%s2] sm:$0x3f]
    %v699 = vsel %vm69, %v697, 0
    %701 = vmatprep.subr.mxu0 0.0
    %702 = vmatpush1.msra.mxu0 %v65
    %703 = vmatprep.subr.mxu0 0.0
    %704 = vmatpush1.msra.mxu0 %v66
    %705 = vmatprep.subr.mxu0 0.0
    %706 = vmatpush1.msra.mxu0 0.0
    %707 = vmatprep.subr.mxu0 0.0
    %708 = vmatpush1.msra.mxu0 0.0
    %709 = vmatprep.subr.mxu0 0.0
    %710 = vmatpush1.msra.mxu0 0.0
    %711 = vmatprep.subr.mxu0 0.0
    %712 = vmatpush1.msra.mxu0 0.0
    %713 = vmatprep.subr.mxu0 0.0
    %714 = vmatpush1.msra.mxu0 0.0
    %715 = vmatprep.subr.mxu0 0.0
    %716 = vmatpush1.msra.mxu0 0.0
    %717 = vmatprep.subr.mxu0 0.0
    %718 = vmatpush1.msra.mxu0 0.0
    %719 = vmatprep.subr.mxu0 0.0
    %720 = vmatpush1.msra.mxu0 0.0
    %721 = vmatprep.subr.mxu0 0.0
    %722 = vmatpush1.msra.mxu0 0.0
    %723 = vmatprep.subr.mxu0 0.0
    %724 = vmatpush1.msra.mxu0 0.0
    %725 = vmatprep.subr.mxu0 0.0
    %726 = vmatpush1.msra.mxu0 0.0
    %727 = vmatprep.subr.mxu0 0.0
    %728 = vmatpush1.msra.mxu0 0.0
    %729 = vmatprep.subr.mxu0 0.0
    %730 = vmatpush1.msra.mxu0 0.0
    %731 = vmatprep.subr.mxu0 0.0
    %732 = vmatpush1.msra.mxu0 0.0
    %733 = vmatprep.subr.mxu0 0.0
    %734 = vmatpush1.msra.mxu0 0.0
    %735 = vmatprep.subr.mxu0 0.0
    %736 = vmatpush1.msra.mxu0 0.0
    %737 = vmatprep.subr.mxu0 0.0
    %738 = vmatpush1.msra.mxu0 0.0
    %739 = vmatprep.subr.mxu0 0.0
    %740 = vmatpush1.msra.mxu0 0.0
    %741 = vmatprep.subr.mxu0 0.0
    %742 = vmatpush1.msra.mxu0 0.0
    %743 = vmatprep.subr.mxu0 0.0
    %744 = vmatpush1.msra.mxu0 0.0
    %745 = vmatprep.subr.mxu0 0.0
    %746 = vmatpush1.msra.mxu0 0.0
    %747 = vmatprep.subr.mxu0 0.0
    %748 = vmatpush1.msra.mxu0 0.0
    %749 = vmatprep.subr.mxu0 0.0
    %750 = vmatpush1.msra.mxu0 0.0
    %751 = vmatprep.subr.mxu0 0.0
    %752 = vmatpush1.msra.mxu0 0.0
    %753 = vmatprep.subr.mxu0 0.0
    %754 = vmatpush1.msra.mxu0 0.0
    %755 = vmatprep.subr.mxu0 0.0
    %756 = vmatpush1.msra.mxu0 0.0
    %757 = vmatprep.subr.mxu0 0.0
    %758 = vmatpush1.msra.mxu0 0.0
    %759 = vmatprep.subr.mxu0 0.0
    %760 = vmatpush1.msra.mxu0 0.0
    %761 = vmatprep.subr.mxu0 0.0
    %762 = vmatpush1.msra.mxu0 0.0
    %763 = vmatprep.subr.mxu0 0.0
    %764 = vmatpush1.msra.mxu0 0.0
    %765 = vmatprep.mubr.f32.mxu0 0.0
    %766 = vmatmul.mubr.f32.gmra.mrb[0].mxu0 %v699
    %v767 = vpop.f32.mrb[0].mxu0
    %v768 = vadd.f32 0.0, %v767
    %v769 = vpop.f32.mrb[0].mxu0
    %770 = vdwg.mxu0
    %v772 = vsel %vm154, %v768, 0
    %774 = vmatprep.subr.mxu0 0.0
    %775 = vmatpush1.msra.mxu0 %v772
    %776 = vmatprep.subr.mxu0 0.0
    %777 = vmatpush1.msra.mxu0 0.0
    %778 = vmatprep.subr.mxu0 0.0
    %779 = vmatpush1.msra.mxu0 0.0
    %780 = vmatprep.subr.mxu0 0.0
    %781 = vmatpush1.msra.mxu0 0.0
    %782 = vmatprep.subr.mxu0 0.0
    %783 = vmatpush1.msra.mxu0 0.0
    %784 = vmatprep.subr.mxu0 0.0
    %785 = vmatpush1.msra.mxu0 0.0
    %786 = vmatprep.subr.mxu0 0.0
    %787 = vmatpush1.msra.mxu0 0.0
    %788 = vmatprep.subr.mxu0 0.0
    %789 = vmatpush1.msra.mxu0 0.0
    %790 = vmatprep.subr.mxu0 0.0
    %791 = vmatpush1.msra.mxu0 0.0
    %792 = vmatprep.subr.mxu0 0.0
    %793 = vmatpush1.msra.mxu0 0.0
    %794 = vmatprep.subr.mxu0 0.0
    %795 = vmatpush1.msra.mxu0 0.0
    %796 = vmatprep.subr.mxu0 0.0
    %797 = vmatpush1.msra.mxu0 0.0
    %798 = vmatprep.subr.mxu0 0.0
    %799 = vmatpush1.msra.mxu0 0.0
    %800 = vmatprep.subr.mxu0 0.0
    %801 = vmatpush1.msra.mxu0 0.0
    %802 = vmatprep.subr.mxu0 0.0
    %803 = vmatpush1.msra.mxu0 0.0
    %804 = vmatprep.subr.mxu0 0.0
    %805 = vmatpush1.msra.mxu0 0.0
    %806 = vmatprep.subr.mxu0 0.0
    %807 = vmatpush1.msra.mxu0 0.0
    %808 = vmatprep.subr.mxu0 0.0
    %809 = vmatpush1.msra.mxu0 0.0
    %810 = vmatprep.subr.mxu0 0.0
    %811 = vmatpush1.msra.mxu0 0.0
    %812 = vmatprep.subr.mxu0 0.0
    %813 = vmatpush1.msra.mxu0 0.0
    %814 = vmatprep.subr.mxu0 0.0
    %815 = vmatpush1.msra.mxu0 0.0
    %816 = vmatprep.subr.mxu0 0.0
    %817 = vmatpush1.msra.mxu0 0.0
    %818 = vmatprep.subr.mxu0 0.0
    %819 = vmatpush1.msra.mxu0 0.0
    %820 = vmatprep.subr.mxu0 0.0
    %821 = vmatpush1.msra.mxu0 0.0
    %822 = vmatprep.subr.mxu0 0.0
    %823 = vmatpush1.msra.mxu0 0.0
    %824 = vmatprep.subr.mxu0 0.0
    %825 = vmatpush1.msra.mxu0 0.0
    %826 = vmatprep.subr.mxu0 0.0
    %827 = vmatpush1.msra.mxu0 0.0
    %828 = vmatprep.subr.mxu0 0.0
    %829 = vmatpush1.msra.mxu0 0.0
    %830 = vmatprep.subr.mxu0 0.0
    %831 = vmatpush1.msra.mxu0 0.0
    %832 = vmatprep.subr.mxu0 0.0
    %833 = vmatpush1.msra.mxu0 0.0
    %834 = vmatprep.subr.mxu0 0.0
    %835 = vmatpush1.msra.mxu0 0.0
    %836 = vmatprep.subr.mxu0 0.0
    %837 = vmatpush1.msra.mxu0 0.0
    %838 = vmatprep.mubr.f32.mxu0 0.0
    %839 = vmatmul.mubr.f32.gmra.mrb[0].mxu0 %v152
    %v840 = vpop.f32.mrb[0].mxu0
    %v841 = vadd.f32 %v148, %v840
    %v842 = vpop.f32.mrb[0].mxu0
    %843 = vdwg.mxu0
    %vm844 = vcmp.gt.f32.partialorder %v841, 0.0
    %v845 = vmul.f32 %v841, 0.25
    %v846 = vsel %vm844, %v841, %v845
    %s847 = scalar_lea.vmem %s2, 8
    %v848 = vld [vmem:[%s847] sm:$0x3f]
    %v850 = vsel %vm69, %v848, 0
    %852 = vmatprep.subr.mxu0 0.0
    %853 = vmatpush1.msra.mxu0 %v65
    %854 = vmatprep.subr.mxu0 0.0
    %855 = vmatpush1.msra.mxu0 %v66
    %856 = vmatprep.subr.mxu0 0.0
    %857 = vmatpush1.msra.mxu0 0.0
    %858 = vmatprep.subr.mxu0 0.0
    %859 = vmatpush1.msra.mxu0 0.0
    %860 = vmatprep.subr.mxu0 0.0
    %861 = vmatpush1.msra.mxu0 0.0
    %862 = vmatprep.subr.mxu0 0.0
    %863 = vmatpush1.msra.mxu0 0.0
    %864 = vmatprep.subr.mxu0 0.0
    %865 = vmatpush1.msra.mxu0 0.0
    %866 = vmatprep.subr.mxu0 0.0
    %867 = vmatpush1.msra.mxu0 0.0
    %868 = vmatprep.subr.mxu0 0.0
    %869 = vmatpush1.msra.mxu0 0.0
    %870 = vmatprep.subr.mxu0 0.0
    %871 = vmatpush1.msra.mxu0 0.0
    %872 = vmatprep.subr.mxu0 0.0
    %873 = vmatpush1.msra.mxu0 0.0
    %874 = vmatprep.subr.mxu0 0.0
    %875 = vmatpush1.msra.mxu0 0.0
    %876 = vmatprep.subr.mxu0 0.0
    %877 = vmatpush1.msra.mxu0 0.0
    %878 = vmatprep.subr.mxu0 0.0
    %879 = vmatpush1.msra.mxu0 0.0
    %880 = vmatprep.subr.mxu0 0.0
    %881 = vmatpush1.msra.mxu0 0.0
    %882 = vmatprep.subr.mxu0 0.0
    %883 = vmatpush1.msra.mxu0 0.0
    %884 = vmatprep.subr.mxu0 0.0
    %885 = vmatpush1.msra.mxu0 0.0
    %886 = vmatprep.subr.mxu0 0.0
    %887 = vmatpush1.msra.mxu0 0.0
    %888 = vmatprep.subr.mxu0 0.0
    %889 = vmatpush1.msra.mxu0 0.0
    %890 = vmatprep.subr.mxu0 0.0
    %891 = vmatpush1.msra.mxu0 0.0
    %892 = vmatprep.subr.mxu0 0.0
    %893 = vmatpush1.msra.mxu0 0.0
    %894 = vmatprep.subr.mxu0 0.0
    %895 = vmatpush1.msra.mxu0 0.0
    %896 = vmatprep.subr.mxu0 0.0
    %897 = vmatpush1.msra.mxu0 0.0
    %898 = vmatprep.subr.mxu0 0.0
    %899 = vmatpush1.msra.mxu0 0.0
    %900 = vmatprep.subr.mxu0 0.0
    %901 = vmatpush1.msra.mxu0 0.0
    %902 = vmatprep.subr.mxu0 0.0
    %903 = vmatpush1.msra.mxu0 0.0
    %904 = vmatprep.subr.mxu0 0.0
    %905 = vmatpush1.msra.mxu0 0.0
    %906 = vmatprep.subr.mxu0 0.0
    %907 = vmatpush1.msra.mxu0 0.0
    %908 = vmatprep.subr.mxu0 0.0
    %909 = vmatpush1.msra.mxu0 0.0
    %910 = vmatprep.subr.mxu0 0.0
    %911 = vmatpush1.msra.mxu0 0.0
    %912 = vmatprep.subr.mxu0 0.0
    %913 = vmatpush1.msra.mxu0 0.0
    %914 = vmatprep.subr.mxu0 0.0
    %915 = vmatpush1.msra.mxu0 0.0
    %916 = vmatprep.mubr.f32.mxu0 0.0
    %917 = vmatmul.mubr.f32.gmra.mrb[0].mxu0 %v850
    %v918 = vpop.f32.mrb[0].mxu0
    %v919 = vadd.f32 0.0, %v918
    %v920 = vpop.f32.mrb[0].mxu0
    %921 = vdwg.mxu0
    %v923 = vsel %vm154, %v919, 0
    %925 = vmatprep.subr.mxu0 0.0
    %926 = vmatpush1.msra.mxu0 %v923
    %927 = vmatprep.subr.mxu0 0.0
    %928 = vmatpush1.msra.mxu0 0.0
    %929 = vmatprep.subr.mxu0 0.0
    %930 = vmatpush1.msra.mxu0 0.0
    %931 = vmatprep.subr.mxu0 0.0
    %932 = vmatpush1.msra.mxu0 0.0
    %933 = vmatprep.subr.mxu0 0.0
    %934 = vmatpush1.msra.mxu0 0.0
    %935 = vmatprep.subr.mxu0 0.0
    %936 = vmatpush1.msra.mxu0 0.0
    %937 = vmatprep.subr.mxu0 0.0
    %938 = vmatpush1.msra.mxu0 0.0
    %939 = vmatprep.subr.mxu0 0.0
    %940 = vmatpush1.msra.mxu0 0.0
    %941 = vmatprep.subr.mxu0 0.0
    %942 = vmatpush1.msra.mxu0 0.0
    %943 = vmatprep.subr.mxu0 0.0
    %944 = vmatpush1.msra.mxu0 0.0
    %945 = vmatprep.subr.mxu0 0.0
    %946 = vmatpush1.msra.mxu0 0.0
    %947 = vmatprep.subr.mxu0 0.0
    %948 = vmatpush1.msra.mxu0 0.0
    %949 = vmatprep.subr.mxu0 0.0
    %950 = vmatpush1.msra.mxu0 0.0
    %951 = vmatprep.subr.mxu0 0.0
    %952 = vmatpush1.msra.mxu0 0.0
    %953 = vmatprep.subr.mxu0 0.0
    %954 = vmatpush1.msra.mxu0 0.0
    %955 = vmatprep.subr.mxu0 0.0
    %956 = vmatpush1.msra.mxu0 0.0
    %957 = vmatprep.subr.mxu0 0.0
    %958 = vmatpush1.msra.mxu0 0.0
    %959 = vmatprep.subr.mxu0 0.0
    %960 = vmatpush1.msra.mxu0 0.0
    %961 = vmatprep.subr.mxu0 0.0
    %962 = vmatpush1.msra.mxu0 0.0
    %963 = vmatprep.subr.mxu0 0.0
    %964 = vmatpush1.msra.mxu0 0.0
    %965 = vmatprep.subr.mxu0 0.0
    %966 = vmatpush1.msra.mxu0 0.0
    %967 = vmatprep.subr.mxu0 0.0
    %968 = vmatpush1.msra.mxu0 0.0
    %969 = vmatprep.subr.mxu0 0.0
    %970 = vmatpush1.msra.mxu0 0.0
    %971 = vmatprep.subr.mxu0 0.0
    %972 = vmatpush1.msra.mxu0 0.0
    %973 = vmatprep.subr.mxu0 0.0
    %974 = vmatpush1.msra.mxu0 0.0
    %975 = vmatprep.subr.mxu0 0.0
    %976 = vmatpush1.msra.mxu0 0.0
    %977 = vmatprep.subr.mxu0 0.0
    %978 = vmatpush1.msra.mxu0 0.0
    %979 = vmatprep.subr.mxu0 0.0
    %980 = vmatpush1.msra.mxu0 0.0
    %981 = vmatprep.subr.mxu0 0.0
    %982 = vmatpush1.msra.mxu0 0.0
    %983 = vmatprep.subr.mxu0 0.0
    %984 = vmatpush1.msra.mxu0 0.0
    %985 = vmatprep.subr.mxu0 0.0
    %986 = vmatpush1.msra.mxu0 0.0
    %987 = vmatprep.subr.mxu0 0.0
    %988 = vmatpush1.msra.mxu0 0.0
    %989 = vmatprep.mubr.f32.mxu0 0.0
    %990 = vmatmul.mubr.f32.gmra.mrb[0].mxu0 %v309
    %v991 = vpop.f32.mrb[0].mxu0
    %v992 = vadd.f32 %v148, %v991
    %v993 = vpop.f32.mrb[0].mxu0
    %994 = vdwg.mxu0
    %vm995 = vcmp.gt.f32.partialorder %v992, 0.0
    %v996 = vmul.f32 %v992, 0.25
    %v997 = vsel %vm995, %v992, %v996
    %v998 = vld [vmem:[%s5] sm:$0x3f]
    %v1000 = vsel %vm69, %v998, 0
    %1002 = vmatprep.subr.mxu0 0.0
    %1003 = vmatpush1.msra.mxu0 %v65
    %1004 = vmatprep.subr.mxu0 0.0
    %1005 = vmatpush1.msra.mxu0 %v66
    %1006 = vmatprep.subr.mxu0 0.0
    %1007 = vmatpush1.msra.mxu0 0.0
    %1008 = vmatprep.subr.mxu0 0.0
    %1009 = vmatpush1.msra.mxu0 0.0
    %1010 = vmatprep.subr.mxu0 0.0
    %1011 = vmatpush1.msra.mxu0 0.0
    %1012 = vmatprep.subr.mxu0 0.0
    %1013 = vmatpush1.msra.mxu0 0.0
    %1014 = vmatprep.subr.mxu0 0.0
    %1015 = vmatpush1.msra.mxu0 0.0
    %1016 = vmatprep.subr.mxu0 0.0
    %1017 = vmatpush1.msra.mxu0 0.0
    %1018 = vmatprep.subr.mxu0 0.0
    %1019 = vmatpush1.msra.mxu0 0.0
    %1020 = vmatprep.subr.mxu0 0.0
    %1021 = vmatpush1.msra.mxu0 0.0
    %1022 = vmatprep.subr.mxu0 0.0
    %1023 = vmatpush1.msra.mxu0 0.0
    %1024 = vmatprep.subr.mxu0 0.0
    %1025 = vmatpush1.msra.mxu0 0.0
    %1026 = vmatprep.subr.mxu0 0.0
    %1027 = vmatpush1.msra.mxu0 0.0
    %1028 = vmatprep.subr.mxu0 0.0
    %1029 = vmatpush1.msra.mxu0 0.0
    %1030 = vmatprep.subr.mxu0 0.0
    %1031 = vmatpush1.msra.mxu0 0.0
    %1032 = vmatprep.subr.mxu0 0.0
    %1033 = vmatpush1.msra.mxu0 0.0
    %1034 = vmatprep.subr.mxu0 0.0
    %1035 = vmatpush1.msra.mxu0 0.0
    %1036 = vmatprep.subr.mxu0 0.0
    %1037 = vmatpush1.msra.mxu0 0.0
    %1038 = vmatprep.subr.mxu0 0.0
    %1039 = vmatpush1.msra.mxu0 0.0
    %1040 = vmatprep.subr.mxu0 0.0
    %1041 = vmatpush1.msra.mxu0 0.0
    %1042 = vmatprep.subr.mxu0 0.0
    %1043 = vmatpush1.msra.mxu0 0.0
    %1044 = vmatprep.subr.mxu0 0.0
    %1045 = vmatpush1.msra.mxu0 0.0
    %1046 = vmatprep.subr.mxu0 0.0
    %1047 = vmatpush1.msra.mxu0 0.0
    %1048 = vmatprep.subr.mxu0 0.0
    %1049 = vmatpush1.msra.mxu0 0.0
    %1050 = vmatprep.subr.mxu0 0.0
    %1051 = vmatpush1.msra.mxu0 0.0
    %1052 = vmatprep.subr.mxu0 0.0
    %1053 = vmatpush1.msra.mxu0 0.0
    %1054 = vmatprep.subr.mxu0 0.0
    %1055 = vmatpush1.msra.mxu0 0.0
    %1056 = vmatprep.subr.mxu0 0.0
    %1057 = vmatpush1.msra.mxu0 0.0
    %1058 = vmatprep.subr.mxu0 0.0
    %1059 = vmatpush1.msra.mxu0 0.0
    %1060 = vmatprep.subr.mxu0 0.0
    %1061 = vmatpush1.msra.mxu0 0.0
    %1062 = vmatprep.subr.mxu0 0.0
    %1063 = vmatpush1.msra.mxu0 0.0
    %1064 = vmatprep.subr.mxu0 0.0
    %1065 = vmatpush1.msra.mxu0 0.0
    %1066 = vmatprep.mubr.f32.mxu0 0.0
    %1067 = vmatmul.mubr.f32.gmra.mrb[0].mxu0 %v1000
    %v1068 = vpop.f32.mrb[0].mxu0
    %v1069 = vadd.f32 0.0, %v1068
    %v1070 = vpop.f32.mrb[0].mxu0
    %1071 = vdwg.mxu0
    %v1073 = vsel %vm154, %v1069, 0
    %1075 = vmatprep.subr.mxu0 0.0
    %1076 = vmatpush1.msra.mxu0 %v1073
    %1077 = vmatprep.subr.mxu0 0.0
    %1078 = vmatpush1.msra.mxu0 0.0
    %1079 = vmatprep.subr.mxu0 0.0
    %1080 = vmatpush1.msra.mxu0 0.0
    %1081 = vmatprep.subr.mxu0 0.0
    %1082 = vmatpush1.msra.mxu0 0.0
    %1083 = vmatprep.subr.mxu0 0.0
    %1084 = vmatpush1.msra.mxu0 0.0
    %1085 = vmatprep.subr.mxu0 0.0
    %1086 = vmatpush1.msra.mxu0 0.0
    %1087 = vmatprep.subr.mxu0 0.0
    %1088 = vmatpush1.msra.mxu0 0.0
    %1089 = vmatprep.subr.mxu0 0.0
    %1090 = vmatpush1.msra.mxu0 0.0
    %1091 = vmatprep.subr.mxu0 0.0
    %1092 = vmatpush1.msra.mxu0 0.0
    %1093 = vmatprep.subr.mxu0 0.0
    %1094 = vmatpush1.msra.mxu0 0.0
    %1095 = vmatprep.subr.mxu0 0.0
    %1096 = vmatpush1.msra.mxu0 0.0
    %1097 = vmatprep.subr.mxu0 0.0
    %1098 = vmatpush1.msra.mxu0 0.0
    %1099 = vmatprep.subr.mxu0 0.0
    %1100 = vmatpush1.msra.mxu0 0.0
    %1101 = vmatprep.subr.mxu0 0.0
    %1102 = vmatpush1.msra.mxu0 0.0
    %1103 = vmatprep.subr.mxu0 0.0
    %1104 = vmatpush1.msra.mxu0 0.0
    %1105 = vmatprep.subr.mxu0 0.0
    %1106 = vmatpush1.msra.mxu0 0.0
    %1107 = vmatprep.subr.mxu0 0.0
    %1108 = vmatpush1.msra.mxu0 0.0
    %1109 = vmatprep.subr.mxu0 0.0
    %1110 = vmatpush1.msra.mxu0 0.0
    %1111 = vmatprep.subr.mxu0 0.0
    %1112 = vmatpush1.msra.mxu0 0.0
    %1113 = vmatprep.subr.mxu0 0.0
    %1114 = vmatpush1.msra.mxu0 0.0
    %1115 = vmatprep.subr.mxu0 0.0
    %1116 = vmatpush1.msra.mxu0 0.0
    %1117 = vmatprep.subr.mxu0 0.0
    %1118 = vmatpush1.msra.mxu0 0.0
    %1119 = vmatprep.subr.mxu0 0.0
    %1120 = vmatpush1.msra.mxu0 0.0
    %1121 = vmatprep.subr.mxu0 0.0
    %1122 = vmatpush1.msra.mxu0 0.0
    %1123 = vmatprep.subr.mxu0 0.0
    %1124 = vmatpush1.msra.mxu0 0.0
    %1125 = vmatprep.subr.mxu0 0.0
    %1126 = vmatpush1.msra.mxu0 0.0
    %1127 = vmatprep.subr.mxu0 0.0
    %1128 = vmatpush1.msra.mxu0 0.0
    %1129 = vmatprep.subr.mxu0 0.0
    %1130 = vmatpush1.msra.mxu0 0.0
    %1131 = vmatprep.subr.mxu0 0.0
    %1132 = vmatpush1.msra.mxu0 0.0
    %1133 = vmatprep.subr.mxu0 0.0
    %1134 = vmatpush1.msra.mxu0 0.0
    %1135 = vmatprep.subr.mxu0 0.0
    %1136 = vmatpush1.msra.mxu0 0.0
    %1137 = vmatprep.subr.mxu0 0.0
    %1138 = vmatpush1.msra.mxu0 0.0
    %1139 = vmatprep.mubr.f32.mxu0 0.0
    %1140 = vmatmul.mubr.f32.gmra.mrb[0].mxu0 %v463
    %v1141 = vpop.f32.mrb[0].mxu0
    %v1142 = vadd.f32 %v148, %v1141
    %v1143 = vpop.f32.mrb[0].mxu0
    %1144 = vdwg.mxu0
    %vm1145 = vcmp.gt.f32.partialorder %v1142, 0.0
    %v1146 = vmul.f32 %v1142, 0.25
    %v1147 = vsel %vm1145, %v1142, %v1146
    %s1148 = scalar_lea.vmem %s5, 8
    %v1149 = vld [vmem:[%s1148] sm:$0x3f]
    %v1151 = vsel %vm69, %v1149, 0
    %1153 = vmatprep.subr.mxu0 0.0
    %1154 = vmatpush1.msra.mxu0 %v65
    %1155 = vmatprep.subr.mxu0 0.0
    %1156 = vmatpush1.msra.mxu0 %v66
    %1157 = vmatprep.subr.mxu0 0.0
    %1158 = vmatpush1.msra.mxu0 0.0
    %1159 = vmatprep.subr.mxu0 0.0
    %1160 = vmatpush1.msra.mxu0 0.0
    %1161 = vmatprep.subr.mxu0 0.0
    %1162 = vmatpush1.msra.mxu0 0.0
    %1163 = vmatprep.subr.mxu0 0.0
    %1164 = vmatpush1.msra.mxu0 0.0
    %1165 = vmatprep.subr.mxu0 0.0
    %1166 = vmatpush1.msra.mxu0 0.0
    %1167 = vmatprep.subr.mxu0 0.0
    %1168 = vmatpush1.msra.mxu0 0.0
    %1169 = vmatprep.subr.mxu0 0.0
    %1170 = vmatpush1.msra.mxu0 0.0
    %1171 = vmatprep.subr.mxu0 0.0
    %1172 = vmatpush1.msra.mxu0 0.0
    %1173 = vmatprep.subr.mxu0 0.0
    %1174 = vmatpush1.msra.mxu0 0.0
    %1175 = vmatprep.subr.mxu0 0.0
    %1176 = vmatpush1.msra.mxu0 0.0
    %1177 = vmatprep.subr.mxu0 0.0
    %1178 = vmatpush1.msra.mxu0 0.0
    %1179 = vmatprep.subr.mxu0 0.0
    %1180 = vmatpush1.msra.mxu0 0.0
    %1181 = vmatprep.subr.mxu0 0.0
    %1182 = vmatpush1.msra.mxu0 0.0
    %1183 = vmatprep.subr.mxu0 0.0
    %1184 = vmatpush1.msra.mxu0 0.0
    %1185 = vmatprep.subr.mxu0 0.0
    %1186 = vmatpush1.msra.mxu0 0.0
    %1187 = vmatprep.subr.mxu0 0.0
    %1188 = vmatpush1.msra.mxu0 0.0
    %1189 = vmatprep.subr.mxu0 0.0
    %1190 = vmatpush1.msra.mxu0 0.0
    %1191 = vmatprep.subr.mxu0 0.0
    %1192 = vmatpush1.msra.mxu0 0.0
    %1193 = vmatprep.subr.mxu0 0.0
    %1194 = vmatpush1.msra.mxu0 0.0
    %1195 = vmatprep.subr.mxu0 0.0
    %1196 = vmatpush1.msra.mxu0 0.0
    %1197 = vmatprep.subr.mxu0 0.0
    %1198 = vmatpush1.msra.mxu0 0.0
    %1199 = vmatprep.subr.mxu0 0.0
    %1200 = vmatpush1.msra.mxu0 0.0
    %1201 = vmatprep.subr.mxu0 0.0
    %1202 = vmatpush1.msra.mxu0 0.0
    %1203 = vmatprep.subr.mxu0 0.0
    %1204 = vmatpush1.msra.mxu0 0.0
    %1205 = vmatprep.subr.mxu0 0.0
    %1206 = vmatpush1.msra.mxu0 0.0
    %1207 = vmatprep.subr.mxu0 0.0
    %1208 = vmatpush1.msra.mxu0 0.0
    %1209 = vmatprep.subr.mxu0 0.0
    %1210 = vmatpush1.msra.mxu0 0.0
    %1211 = vmatprep.subr.mxu0 0.0
    %1212 = vmatpush1.msra.mxu0 0.0
    %1213 = vmatprep.subr.mxu0 0.0
    %1214 = vmatpush1.msra.mxu0 0.0
    %1215 = vmatprep.subr.mxu0 0.0
    %1216 = vmatpush1.msra.mxu0 0.0
    %1217 = vmatprep.mubr.f32.mxu0 0.0
    %1218 = vmatmul.mubr.f32.gmra.mrb[0].mxu0 %v1151
    %v1219 = vpop.f32.mrb[0].mxu0
    %v1220 = vadd.f32 0.0, %v1219
    %v1221 = vpop.f32.mrb[0].mxu0
    %1222 = vdwg.mxu0
    %v1224 = vsel %vm154, %v1220, 0
    %1226 = vmatprep.subr.mxu0 0.0
    %1227 = vmatpush1.msra.mxu0 %v1224
    %1228 = vmatprep.subr.mxu0 0.0
    %1229 = vmatpush1.msra.mxu0 0.0
    %1230 = vmatprep.subr.mxu0 0.0
    %1231 = vmatpush1.msra.mxu0 0.0
    %1232 = vmatprep.subr.mxu0 0.0
    %1233 = vmatpush1.msra.mxu0 0.0
    %1234 = vmatprep.subr.mxu0 0.0
    %1235 = vmatpush1.msra.mxu0 0.0
    %1236 = vmatprep.subr.mxu0 0.0
    %1237 = vmatpush1.msra.mxu0 0.0
    %1238 = vmatprep.subr.mxu0 0.0
    %1239 = vmatpush1.msra.mxu0 0.0
    %1240 = vmatprep.subr.mxu0 0.0
    %1241 = vmatpush1.msra.mxu0 0.0
    %1242 = vmatprep.subr.mxu0 0.0
    %1243 = vmatpush1.msra.mxu0 0.0
    %1244 = vmatprep.subr.mxu0 0.0
    %1245 = vmatpush1.msra.mxu0 0.0
    %1246 = vmatprep.subr.mxu0 0.0
    %1247 = vmatpush1.msra.mxu0 0.0
    %1248 = vmatprep.subr.mxu0 0.0
    %1249 = vmatpush1.msra.mxu0 0.0
    %1250 = vmatprep.subr.mxu0 0.0
    %1251 = vmatpush1.msra.mxu0 0.0
    %1252 = vmatprep.subr.mxu0 0.0
    %1253 = vmatpush1.msra.mxu0 0.0
    %1254 = vmatprep.subr.mxu0 0.0
    %1255 = vmatpush1.msra.mxu0 0.0
    %1256 = vmatprep.subr.mxu0 0.0
    %1257 = vmatpush1.msra.mxu0 0.0
    %1258 = vmatprep.subr.mxu0 0.0
    %1259 = vmatpush1.msra.mxu0 0.0
    %1260 = vmatprep.subr.mxu0 0.0
    %1261 = vmatpush1.msra.mxu0 0.0
    %1262 = vmatprep.subr.mxu0 0.0
    %1263 = vmatpush1.msra.mxu0 0.0
    %1264 = vmatprep.subr.mxu0 0.0
    %1265 = vmatpush1.msra.mxu0 0.0
    %1266 = vmatprep.subr.mxu0 0.0
    %1267 = vmatpush1.msra.mxu0 0.0
    %1268 = vmatprep.subr.mxu0 0.0
    %1269 = vmatpush1.msra.mxu0 0.0
    %1270 = vmatprep.subr.mxu0 0.0
    %1271 = vmatpush1.msra.mxu0 0.0
    %1272 = vmatprep.subr.mxu0 0.0
    %1273 = vmatpush1.msra.mxu0 0.0
    %1274 = vmatprep.subr.mxu0 0.0
    %1275 = vmatpush1.msra.mxu0 0.0
    %1276 = vmatprep.subr.mxu0 0.0
    %1277 = vmatpush1.msra.mxu0 0.0
    %1278 = vmatprep.subr.mxu0 0.0
    %1279 = vmatpush1.msra.mxu0 0.0
    %1280 = vmatprep.subr.mxu0 0.0
    %1281 = vmatpush1.msra.mxu0 0.0
    %1282 = vmatprep.subr.mxu0 0.0
    %1283 = vmatpush1.msra.mxu0 0.0
    %1284 = vmatprep.subr.mxu0 0.0
    %1285 = vmatpush1.msra.mxu0 0.0
    %1286 = vmatprep.subr.mxu0 0.0
    %1287 = vmatpush1.msra.mxu0 0.0
    %1288 = vmatprep.subr.mxu0 0.0
    %1289 = vmatpush1.msra.mxu0 0.0
    %1290 = vmatprep.mubr.f32.mxu0 0.0
    %1291 = vmatmul.mubr.f32.gmra.mrb[0].mxu0 %v619
    %v1292 = vpop.f32.mrb[0].mxu0
    %v1293 = vadd.f32 %v148, %v1292
    %v1294 = vpop.f32.mrb[0].mxu0
    %1295 = vdwg.mxu0
    %vm1296 = vcmp.gt.f32.partialorder %v1293, 0.0
    %v1297 = vmul.f32 %v1293, 0.25
    %v1298 = vsel %vm1296, %v1293, %v1297
    %v1300 = vrot.slane %v997, 7
    %v1303 = vrot.slane %v1147, 6
    %v1306 = vrot.slane %v1298, 5
    %vm1308 = vcmask 1040384
    %v1309 = vsel %vm1308, %v846, %v1300
    %vm1310 = vcmask 1041408
    %v1311 = vsel %vm1310, %v1309, %v1303
    %vm1312 = vcmask 1042432
    %v1313 = vsel %vm1312, %v1311, %v1306
    %v1314 = vld [vmem:[%s8] sm:$0xff]
    %v1315 = vld [vmem:[%s8 + $0x8] sm:$0xff]
    %v1316 = vld [vmem:[%s8 + $0x10] sm:$0xff]
    %v1317 = vld [vmem:[%s8 + $0x18] sm:$0xff]
    %v1319 = vrot.slane %v846, 1
    %v1321 = vrot.slane %v1147, 7
    %v1323 = vrot.slane %v1298, 6
    %v1325 = vsel %vm1308, %v1319, %v997
    %v1326 = vsel %vm1310, %v1325, %v1321
    %v1327 = vsel %vm1312, %v1326, %v1323
    %v1328 = vld [vmem:[%s8 + $0x20] sm:$0xff]
    %v1329 = vld [vmem:[%s8 + $0x28] sm:$0xff]
    %v1330 = vld [vmem:[%s8 + $0x30] sm:$0xff]
    %v1331 = vld [vmem:[%s8 + $0x38] sm:$0xff]
    %vm1332 = vcmask 261120
    %v1334 = vsel %vm1332, %v1327, 0
    %1336 = vmatprep.subr.mxu0 0.0
    %1337 = vmatpush1.msra.mxu0 %v1328
    %1338 = vmatprep.subr.mxu0 0.0
    %1339 = vmatpush1.msra.mxu0 %v1329
    %1340 = vmatprep.subr.mxu0 0.0
    %1341 = vmatpush1.msra.mxu0 %v1330
    %1342 = vmatprep.subr.mxu0 0.0
    %1343 = vmatpush1.msra.mxu0 %v1331
    %1344 = vmatprep.subr.mxu0 0.0
    %1345 = vmatpush1.msra.mxu0 0.0
    %1346 = vmatprep.subr.mxu0 0.0
    %1347 = vmatpush1.msra.mxu0 0.0
    %1348 = vmatprep.subr.mxu0 0.0
    %1349 = vmatpush1.msra.mxu0 0.0
    %1350 = vmatprep.subr.mxu0 0.0
    %1351 = vmatpush1.msra.mxu0 0.0
    %1352 = vmatprep.subr.mxu0 0.0
    %1353 = vmatpush1.msra.mxu0 0.0
    %1354 = vmatprep.subr.mxu0 0.0
    %1355 = vmatpush1.msra.mxu0 0.0
    %1356 = vmatprep.subr.mxu0 0.0
    %1357 = vmatpush1.msra.mxu0 0.0
    %1358 = vmatprep.subr.mxu0 0.0
    %1359 = vmatpush1.msra.mxu0 0.0
    %1360 = vmatprep.subr.mxu0 0.0
    %1361 = vmatpush1.msra.mxu0 0.0
    %1362 = vmatprep.subr.mxu0 0.0
    %1363 = vmatpush1.msra.mxu0 0.0
    %1364 = vmatprep.subr.mxu0 0.0
    %1365 = vmatpush1.msra.mxu0 0.0
    %1366 = vmatprep.subr.mxu0 0.0
    %1367 = vmatpush1.msra.mxu0 0.0
    %1368 = vmatprep.subr.mxu0 0.0
    %1369 = vmatpush1.msra.mxu0 0.0
    %1370 = vmatprep.subr.mxu0 0.0
    %1371 = vmatpush1.msra.mxu0 0.0
    %1372 = vmatprep.subr.mxu0 0.0
    %1373 = vmatpush1.msra.mxu0 0.0
    %1374 = vmatprep.subr.mxu0 0.0
    %1375 = vmatpush1.msra.mxu0 0.0
    %1376 = vmatprep.subr.mxu0 0.0
    %1377 = vmatpush1.msra.mxu0 0.0
    %1378 = vmatprep.subr.mxu0 0.0
    %1379 = vmatpush1.msra.mxu0 0.0
    %1380 = vmatprep.subr.mxu0 0.0
    %1381 = vmatpush1.msra.mxu0 0.0
    %1382 = vmatprep.subr.mxu0 0.0
    %1383 = vmatpush1.msra.mxu0 0.0
    %1384 = vmatprep.subr.mxu0 0.0
    %1385 = vmatpush1.msra.mxu0 0.0
    %1386 = vmatprep.subr.mxu0 0.0
    %1387 = vmatpush1.msra.mxu0 0.0
    %1388 = vmatprep.subr.mxu0 0.0
    %1389 = vmatpush1.msra.mxu0 0.0
    %1390 = vmatprep.subr.mxu0 0.0
    %1391 = vmatpush1.msra.mxu0 0.0
    %1392 = vmatprep.subr.mxu0 0.0
    %1393 = vmatpush1.msra.mxu0 0.0
    %1394 = vmatprep.subr.mxu0 0.0
    %1395 = vmatpush1.msra.mxu0 0.0
    %1396 = vmatprep.subr.mxu0 0.0
    %1397 = vmatpush1.msra.mxu0 0.0
    %1398 = vmatprep.subr.mxu0 0.0
    %1399 = vmatpush1.msra.mxu0 0.0
    %1400 = vmatprep.mubr.f32.mxu0 0.0
    %1401 = vmatmul.mubr.f32.gmra.mrb[0].mxu0 %v1334
    %v1402 = vpop.f32.mrb[0].mxu0
    %v1403 = vadd.f32 0.0, %v1402
    %v1404 = vpop.f32.mrb[0].mxu0
    %1405 = vdwg.mxu0
    %v1407 = vsel %vm1332, %v1313, 0
    %1409 = vmatprep.subr.mxu0 0.0
    %1410 = vmatpush1.msra.mxu0 %v1314
    %1411 = vmatprep.subr.mxu0 0.0
    %1412 = vmatpush1.msra.mxu0 %v1315
    %1413 = vmatprep.subr.mxu0 0.0
    %1414 = vmatpush1.msra.mxu0 %v1316
    %1415 = vmatprep.subr.mxu0 0.0
    %1416 = vmatpush1.msra.mxu0 %v1317
    %1417 = vmatprep.subr.mxu0 0.0
    %1418 = vmatpush1.msra.mxu0 0.0
    %1419 = vmatprep.subr.mxu0 0.0
    %1420 = vmatpush1.msra.mxu0 0.0
    %1421 = vmatprep.subr.mxu0 0.0
    %1422 = vmatpush1.msra.mxu0 0.0
    %1423 = vmatprep.subr.mxu0 0.0
    %1424 = vmatpush1.msra.mxu0 0.0
    %1425 = vmatprep.subr.mxu0 0.0
    %1426 = vmatpush1.msra.mxu0 0.0
    %1427 = vmatprep.subr.mxu0 0.0
    %1428 = vmatpush1.msra.mxu0 0.0
    %1429 = vmatprep.subr.mxu0 0.0
    %1430 = vmatpush1.msra.mxu0 0.0
    %1431 = vmatprep.subr.mxu0 0.0
    %1432 = vmatpush1.msra.mxu0 0.0
    %1433 = vmatprep.subr.mxu0 0.0
    %1434 = vmatpush1.msra.mxu0 0.0
    %1435 = vmatprep.subr.mxu0 0.0
    %1436 = vmatpush1.msra.mxu0 0.0
    %1437 = vmatprep.subr.mxu0 0.0
    %1438 = vmatpush1.msra.mxu0 0.0
    %1439 = vmatprep.subr.mxu0 0.0
    %1440 = vmatpush1.msra.mxu0 0.0
    %1441 = vmatprep.subr.mxu0 0.0
    %1442 = vmatpush1.msra.mxu0 0.0
    %1443 = vmatprep.subr.mxu0 0.0
    %1444 = vmatpush1.msra.mxu0 0.0
    %1445 = vmatprep.subr.mxu0 0.0
    %1446 = vmatpush1.msra.mxu0 0.0
    %1447 = vmatprep.subr.mxu0 0.0
    %1448 = vmatpush1.msra.mxu0 0.0
    %1449 = vmatprep.subr.mxu0 0.0
    %1450 = vmatpush1.msra.mxu0 0.0
    %1451 = vmatprep.subr.mxu0 0.0
    %1452 = vmatpush1.msra.mxu0 0.0
    %1453 = vmatprep.subr.mxu0 0.0
    %1454 = vmatpush1.msra.mxu0 0.0
    %1455 = vmatprep.subr.mxu0 0.0
    %1456 = vmatpush1.msra.mxu0 0.0
    %1457 = vmatprep.subr.mxu0 0.0
    %1458 = vmatpush1.msra.mxu0 0.0
    %1459 = vmatprep.subr.mxu0 0.0
    %1460 = vmatpush1.msra.mxu0 0.0
    %1461 = vmatprep.subr.mxu0 0.0
    %1462 = vmatpush1.msra.mxu0 0.0
    %1463 = vmatprep.subr.mxu0 0.0
    %1464 = vmatpush1.msra.mxu0 0.0
    %1465 = vmatprep.subr.mxu0 0.0
    %1466 = vmatpush1.msra.mxu0 0.0
    %1467 = vmatprep.subr.mxu0 0.0
    %1468 = vmatpush1.msra.mxu0 0.0
    %1469 = vmatprep.subr.mxu0 0.0
    %1470 = vmatpush1.msra.mxu0 0.0
    %1471 = vmatprep.subr.mxu0 0.0
    %1472 = vmatpush1.msra.mxu0 0.0
    %1473 = vmatprep.mubr.f32.mxu0 0.0
    %1474 = vmatmul.mubr.f32.gmra.mrb[0].mxu0 %v1407
    %v1475 = vpop.f32.mrb[0].mxu0
    %v1476 = vadd.f32 %v1403, %v1475
    %v1477 = vpop.f32.mrb[0].mxu0
    %1478 = vdwg.mxu0
    %v1479 = vrot.slane %v846, 2
    %v1481 = vrot.slane %v997, 1
    %v1483 = vrot.slane %v1298, 7
    %v1485 = vsel %vm1308, %v1479, %v1481
    %v1486 = vsel %vm1310, %v1485, %v1147
    %v1487 = vsel %vm1312, %v1486, %v1483
    %v1488 = vld [vmem:[%s8 + $0x40] sm:$0xff]
    %v1489 = vld [vmem:[%s8 + $0x48] sm:$0xff]
    %v1490 = vld [vmem:[%s8 + $0x50] sm:$0xff]
    %v1491 = vld [vmem:[%s8 + $0x58] sm:$0xff]
    %v1493 = vsel %vm1332, %v1487, 0
    %1495 = vmatprep.subr.mxu0 0.0
    %1496 = vmatpush1.msra.mxu0 %v1488
    %1497 = vmatprep.subr.mxu0 0.0
    %1498 = vmatpush1.msra.mxu0 %v1489
    %1499 = vmatprep.subr.mxu0 0.0
    %1500 = vmatpush1.msra.mxu0 %v1490
    %1501 = vmatprep.subr.mxu0 0.0
    %1502 = vmatpush1.msra.mxu0 %v1491
    %1503 = vmatprep.subr.mxu0 0.0
    %1504 = vmatpush1.msra.mxu0 0.0
    %1505 = vmatprep.subr.mxu0 0.0
    %1506 = vmatpush1.msra.mxu0 0.0
    %1507 = vmatprep.subr.mxu0 0.0
    %1508 = vmatpush1.msra.mxu0 0.0
    %1509 = vmatprep.subr.mxu0 0.0
    %1510 = vmatpush1.msra.mxu0 0.0
    %1511 = vmatprep.subr.mxu0 0.0
    %1512 = vmatpush1.msra.mxu0 0.0
    %1513 = vmatprep.subr.mxu0 0.0
    %1514 = vmatpush1.msra.mxu0 0.0
    %1515 = vmatprep.subr.mxu0 0.0
    %1516 = vmatpush1.msra.mxu0 0.0
    %1517 = vmatprep.subr.mxu0 0.0
    %1518 = vmatpush1.msra.mxu0 0.0
    %1519 = vmatprep.subr.mxu0 0.0
    %1520 = vmatpush1.msra.mxu0 0.0
    %1521 = vmatprep.subr.mxu0 0.0
    %1522 = vmatpush1.msra.mxu0 0.0
    %1523 = vmatprep.subr.mxu0 0.0
    %1524 = vmatpush1.msra.mxu0 0.0
    %1525 = vmatprep.subr.mxu0 0.0
    %1526 = vmatpush1.msra.mxu0 0.0
    %1527 = vmatprep.subr.mxu0 0.0
    %1528 = vmatpush1.msra.mxu0 0.0
    %1529 = vmatprep.subr.mxu0 0.0
    %1530 = vmatpush1.msra.mxu0 0.0
    %1531 = vmatprep.subr.mxu0 0.0
    %1532 = vmatpush1.msra.mxu0 0.0
    %1533 = vmatprep.subr.mxu0 0.0
    %1534 = vmatpush1.msra.mxu0 0.0
    %1535 = vmatprep.subr.mxu0 0.0
    %1536 = vmatpush1.msra.mxu0 0.0
    %1537 = vmatprep.subr.mxu0 0.0
    %1538 = vmatpush1.msra.mxu0 0.0
    %1539 = vmatprep.subr.mxu0 0.0
    %1540 = vmatpush1.msra.mxu0 0.0
    %1541 = vmatprep.subr.mxu0 0.0
    %1542 = vmatpush1.msra.mxu0 0.0
    %1543 = vmatprep.subr.mxu0 0.0
    %1544 = vmatpush1.msra.mxu0 0.0
    %1545 = vmatprep.subr.mxu0 0.0
    %1546 = vmatpush1.msra.mxu0 0.0
    %1547 = vmatprep.subr.mxu0 0.0
    %1548 = vmatpush1.msra.mxu0 0.0
    %1549 = vmatprep.subr.mxu0 0.0
    %1550 = vmatpush1.msra.mxu0 0.0
    %1551 = vmatprep.subr.mxu0 0.0
    %1552 = vmatpush1.msra.mxu0 0.0
    %1553 = vmatprep.subr.mxu0 0.0
    %1554 = vmatpush1.msra.mxu0 0.0
    %1555 = vmatprep.subr.mxu0 0.0
    %1556 = vmatpush1.msra.mxu0 0.0
    %1557 = vmatprep.subr.mxu0 0.0
    %1558 = vmatpush1.msra.mxu0 0.0
    %1559 = vmatprep.mubr.f32.mxu0 0.0
    %1560 = vmatmul.mubr.f32.gmra.mrb[0].mxu0 %v1493
    %v1561 = vpop.f32.mrb[0].mxu0
    %v1562 = vadd.f32 0.0, %v1561
    %v1563 = vpop.f32.mrb[0].mxu0
    %1564 = vdwg.mxu0
    %v1565 = vadd.f32 %v1476, %v1562
    %v1566 = vrot.slane %v846, 3
    %v1568 = vrot.slane %v997, 2
    %v1570 = vrot.slane %v1147, 1
    %v1572 = vsel %vm1308, %v1566, %v1568
    %v1573 = vsel %vm1310, %v1572, %v1570
    %v1574 = vsel %vm1312, %v1573, %v1298
    %v1575 = vld [vmem:[%s8 + $0x60] sm:$0xff]
    %v1576 = vld [vmem:[%s8 + $0x68] sm:$0xff]
    %v1577 = vld [vmem:[%s8 + $0x70] sm:$0xff]
    %v1578 = vld [vmem:[%s8 + $0x78] sm:$0xff]
    %v1580 = vsel %vm1332, %v1574, 0
    %1582 = vmatprep.subr.mxu0 0.0
    %1583 = vmatpush1.msra.mxu0 %v1575
    %1584 = vmatprep.subr.mxu0 0.0
    %1585 = vmatpush1.msra.mxu0 %v1576
    %1586 = vmatprep.subr.mxu0 0.0
    %1587 = vmatpush1.msra.mxu0 %v1577
    %1588 = vmatprep.subr.mxu0 0.0
    %1589 = vmatpush1.msra.mxu0 %v1578
    %1590 = vmatprep.subr.mxu0 0.0
    %1591 = vmatpush1.msra.mxu0 0.0
    %1592 = vmatprep.subr.mxu0 0.0
    %1593 = vmatpush1.msra.mxu0 0.0
    %1594 = vmatprep.subr.mxu0 0.0
    %1595 = vmatpush1.msra.mxu0 0.0
    %1596 = vmatprep.subr.mxu0 0.0
    %1597 = vmatpush1.msra.mxu0 0.0
    %1598 = vmatprep.subr.mxu0 0.0
    %1599 = vmatpush1.msra.mxu0 0.0
    %1600 = vmatprep.subr.mxu0 0.0
    %1601 = vmatpush1.msra.mxu0 0.0
    %1602 = vmatprep.subr.mxu0 0.0
    %1603 = vmatpush1.msra.mxu0 0.0
    %1604 = vmatprep.subr.mxu0 0.0
    %1605 = vmatpush1.msra.mxu0 0.0
    %1606 = vmatprep.subr.mxu0 0.0
    %1607 = vmatpush1.msra.mxu0 0.0
    %1608 = vmatprep.subr.mxu0 0.0
    %1609 = vmatpush1.msra.mxu0 0.0
    %1610 = vmatprep.subr.mxu0 0.0
    %1611 = vmatpush1.msra.mxu0 0.0
    %1612 = vmatprep.subr.mxu0 0.0
    %1613 = vmatpush1.msra.mxu0 0.0
    %1614 = vmatprep.subr.mxu0 0.0
    %1615 = vmatpush1.msra.mxu0 0.0
    %1616 = vmatprep.subr.mxu0 0.0
    %1617 = vmatpush1.msra.mxu0 0.0
    %1618 = vmatprep.subr.mxu0 0.0
    %1619 = vmatpush1.msra.mxu0 0.0
    %1620 = vmatprep.subr.mxu0 0.0
    %1621 = vmatpush1.msra.mxu0 0.0
    %1622 = vmatprep.subr.mxu0 0.0
    %1623 = vmatpush1.msra.mxu0 0.0
    %1624 = vmatprep.subr.mxu0 0.0
    %1625 = vmatpush1.msra.mxu0 0.0
    %1626 = vmatprep.subr.mxu0 0.0
    %1627 = vmatpush1.msra.mxu0 0.0
    %1628 = vmatprep.subr.mxu0 0.0
    %1629 = vmatpush1.msra.mxu0 0.0
    %1630 = vmatprep.subr.mxu0 0.0
    %1631 = vmatpush1.msra.mxu0 0.0
    %1632 = vmatprep.subr.mxu0 0.0
    %1633 = vmatpush1.msra.mxu0 0.0
    %1634 = vmatprep.subr.mxu0 0.0
    %1635 = vmatpush1.msra.mxu0 0.0
    %1636 = vmatprep.subr.mxu0 0.0
    %1637 = vmatpush1.msra.mxu0 0.0
    %1638 = vmatprep.subr.mxu0 0.0
    %1639 = vmatpush1.msra.mxu0 0.0
    %1640 = vmatprep.subr.mxu0 0.0
    %1641 = vmatpush1.msra.mxu0 0.0
    %1642 = vmatprep.subr.mxu0 0.0
    %1643 = vmatpush1.msra.mxu0 0.0
    %1644 = vmatprep.subr.mxu0 0.0
    %1645 = vmatpush1.msra.mxu0 0.0
    %1646 = vmatprep.mubr.f32.mxu0 0.0
    %1647 = vmatmul.mubr.f32.gmra.mrb[0].mxu0 %v1580
    %v1648 = vpop.f32.mrb[0].mxu0
    %v1649 = vadd.f32 0.0, %v1648
    %v1650 = vpop.f32.mrb[0].mxu0
    %1651 = vdwg.mxu0
    %v1652 = vadd.f32 %v1565, %v1649
    %v1653 = vld [vmem:[%s9] sm:$0x1]
    %v1655 = vlaneseq
    %v1656 = vshrl.u32 %v1655, 7
    %v1657 = vsub.s32 0, %v1656
    %v1658 = vrot.slane %v1653, %v1657
    %v1660 = vadd.f32 %v1652, %v1658
    %vm1661 = vcmp.gt.f32.partialorder %v1660, 0.0
    %v1662 = vmul.f32 %v1660, 0.25
    %v1663 = vsel %vm1661, %v1660, %v1662
    %v1664 = vld [vmem:[%s10] sm:$0xff]
    %v1665 = vld [vmem:[%s10 + $0x8] sm:$0xff]
    %v1666 = vld [vmem:[%s10 + $0x10] sm:$0xff]
    %v1667 = vld [vmem:[%s10 + $0x18] sm:$0xff]
    %v1668 = vld [vmem:[%s10 + $0x20] sm:$0xff]
    %v1669 = vld [vmem:[%s10 + $0x28] sm:$0xff]
    %v1670 = vld [vmem:[%s10 + $0x30] sm:$0xff]
    %v1671 = vld [vmem:[%s10 + $0x38] sm:$0xff]
    %v1672 = vld [vmem:[%s10 + $0x40] sm:$0xff]
    %v1673 = vld [vmem:[%s10 + $0x48] sm:$0xff]
    %v1674 = vld [vmem:[%s10 + $0x50] sm:$0xff]
    %v1675 = vld [vmem:[%s10 + $0x58] sm:$0xff]
    %v1676 = vld [vmem:[%s10 + $0x60] sm:$0xff]
    %v1677 = vld [vmem:[%s10 + $0x68] sm:$0xff]
    %v1678 = vld [vmem:[%s10 + $0x70] sm:$0xff]
    %v1679 = vld [vmem:[%s10 + $0x78] sm:$0xff]
    %v1680 = vld [vmem:[%s11] sm:$0x1]
    %v1682 = vlaneseq
    %v1683 = vshrl.u32 %v1682, 7
    %v1684 = vsub.s32 0, %v1683
    %v1685 = vrot.slane %v1680, %v1684
    %1687 = vmatprep.subr.mxu0 0.0
    %1688 = vmatpush1.msra.mxu0 %v1664
    %1689 = vmatprep.subr.mxu0 0.0
    %1690 = vmatpush1.msra.mxu0 %v1665
    %1691 = vmatprep.subr.mxu0 0.0
    %1692 = vmatpush1.msra.mxu0 %v1666
    %1693 = vmatprep.subr.mxu0 0.0
    %1694 = vmatpush1.msra.mxu0 %v1667
    %1695 = vmatprep.subr.mxu0 0.0
    %1696 = vmatpush1.msra.mxu0 %v1668
    %1697 = vmatprep.subr.mxu0 0.0
    %1698 = vmatpush1.msra.mxu0 %v1669
    %1699 = vmatprep.subr.mxu0 0.0
    %1700 = vmatpush1.msra.mxu0 %v1670
    %1701 = vmatprep.subr.mxu0 0.0
    %1702 = vmatpush1.msra.mxu0 %v1671
    %1703 = vmatprep.subr.mxu0 0.0
    %1704 = vmatpush1.msra.mxu0 %v1672
    %1705 = vmatprep.subr.mxu0 0.0
    %1706 = vmatpush1.msra.mxu0 %v1673
    %1707 = vmatprep.subr.mxu0 0.0
    %1708 = vmatpush1.msra.mxu0 %v1674
    %1709 = vmatprep.subr.mxu0 0.0
    %1710 = vmatpush1.msra.mxu0 %v1675
    %1711 = vmatprep.subr.mxu0 0.0
    %1712 = vmatpush1.msra.mxu0 %v1676
    %1713 = vmatprep.subr.mxu0 0.0
    %1714 = vmatpush1.msra.mxu0 %v1677
    %1715 = vmatprep.subr.mxu0 0.0
    %1716 = vmatpush1.msra.mxu0 %v1678
    %1717 = vmatprep.subr.mxu0 0.0
    %1718 = vmatpush1.msra.mxu0 %v1679
    %1719 = vmatprep.subr.mxu0 0.0
    %1720 = vmatpush1.msra.mxu0 0.0
    %1721 = vmatprep.subr.mxu0 0.0
    %1722 = vmatpush1.msra.mxu0 0.0
    %1723 = vmatprep.subr.mxu0 0.0
    %1724 = vmatpush1.msra.mxu0 0.0
    %1725 = vmatprep.subr.mxu0 0.0
    %1726 = vmatpush1.msra.mxu0 0.0
    %1727 = vmatprep.subr.mxu0 0.0
    %1728 = vmatpush1.msra.mxu0 0.0
    %1729 = vmatprep.subr.mxu0 0.0
    %1730 = vmatpush1.msra.mxu0 0.0
    %1731 = vmatprep.subr.mxu0 0.0
    %1732 = vmatpush1.msra.mxu0 0.0
    %1733 = vmatprep.subr.mxu0 0.0
    %1734 = vmatpush1.msra.mxu0 0.0
    %1735 = vmatprep.subr.mxu0 0.0
    %1736 = vmatpush1.msra.mxu0 0.0
    %1737 = vmatprep.subr.mxu0 0.0
    %1738 = vmatpush1.msra.mxu0 0.0
    %1739 = vmatprep.subr.mxu0 0.0
    %1740 = vmatpush1.msra.mxu0 0.0
    %1741 = vmatprep.subr.mxu0 0.0
    %1742 = vmatpush1.msra.mxu0 0.0
    %1743 = vmatprep.subr.mxu0 0.0
    %1744 = vmatpush1.msra.mxu0 0.0
    %1745 = vmatprep.subr.mxu0 0.0
    %1746 = vmatpush1.msra.mxu0 0.0
    %1747 = vmatprep.subr.mxu0 0.0
    %1748 = vmatpush1.msra.mxu0 0.0
    %1749 = vmatprep.subr.mxu0 0.0
    %1750 = vmatpush1.msra.mxu0 0.0
    %1751 = vmatprep.mubr.f32.mxu0 0.0
    %1752 = vmatmul.mubr.f32.gmra.mrb[0].mxu0 %v1663
    %v1753 = vpop.f32.mrb[0].mxu0
    %v1754 = vadd.f32 %v1685, %v1753
    %v1755 = vpop.f32.mrb[0].mxu0
    %1756 = vdwg.mxu0
    %vm1757 = vcmp.gt.f32.partialorder %v1754, 0.0
    %v1758 = vmul.f32 %v1754, 0.25
    %v1759 = vsel %vm1757, %v1754, %v1758
    %v1760 = vld [vmem:[%s12] sm:$0xff]
    %v1761 = vld [vmem:[%s12 + $0x8] sm:$0xff]
    %v1762 = vld [vmem:[%s12 + $0x10] sm:$0xff]
    %v1763 = vld [vmem:[%s12 + $0x18] sm:$0xff]
    %v1764 = vld [vmem:[%s12 + $0x20] sm:$0xff]
    %v1765 = vld [vmem:[%s12 + $0x28] sm:$0xff]
    %v1766 = vld [vmem:[%s12 + $0x30] sm:$0xff]
    %v1767 = vld [vmem:[%s12 + $0x38] sm:$0xff]
    %v1768 = vld [vmem:[%s12 + $0x40] sm:$0xff]
    %v1769 = vld [vmem:[%s12 + $0x48] sm:$0xff]
    %v1770 = vld [vmem:[%s12 + $0x50] sm:$0xff]
    %v1771 = vld [vmem:[%s12 + $0x58] sm:$0xff]
    %v1772 = vld [vmem:[%s12 + $0x60] sm:$0xff]
    %v1773 = vld [vmem:[%s12 + $0x68] sm:$0xff]
    %v1774 = vld [vmem:[%s12 + $0x70] sm:$0xff]
    %v1775 = vld [vmem:[%s12 + $0x78] sm:$0xff]
    %v1776 = vld [vmem:[%s13] sm:$0x1]
    %v1778 = vlaneseq
    %v1779 = vshrl.u32 %v1778, 7
    %v1780 = vsub.s32 0, %v1779
    %v1781 = vrot.slane %v1776, %v1780
    %1783 = vmatprep.subr.mxu0 0.0
    %1784 = vmatpush1.msra.mxu0 %v1760
    %1785 = vmatprep.subr.mxu0 0.0
    %1786 = vmatpush1.msra.mxu0 %v1761
    %1787 = vmatprep.subr.mxu0 0.0
    %1788 = vmatpush1.msra.mxu0 %v1762
    %1789 = vmatprep.subr.mxu0 0.0
    %1790 = vmatpush1.msra.mxu0 %v1763
    %1791 = vmatprep.subr.mxu0 0.0
    %1792 = vmatpush1.msra.mxu0 %v1764
    %1793 = vmatprep.subr.mxu0 0.0
    %1794 = vmatpush1.msra.mxu0 %v1765
    %1795 = vmatprep.subr.mxu0 0.0
    %1796 = vmatpush1.msra.mxu0 %v1766
    %1797 = vmatprep.subr.mxu0 0.0
    %1798 = vmatpush1.msra.mxu0 %v1767
    %1799 = vmatprep.subr.mxu0 0.0
    %1800 = vmatpush1.msra.mxu0 %v1768
    %1801 = vmatprep.subr.mxu0 0.0
    %1802 = vmatpush1.msra.mxu0 %v1769
    %1803 = vmatprep.subr.mxu0 0.0
    %1804 = vmatpush1.msra.mxu0 %v1770
    %1805 = vmatprep.subr.mxu0 0.0
    %1806 = vmatpush1.msra.mxu0 %v1771
    %1807 = vmatprep.subr.mxu0 0.0
    %1808 = vmatpush1.msra.mxu0 %v1772
    %1809 = vmatprep.subr.mxu0 0.0
    %1810 = vmatpush1.msra.mxu0 %v1773
    %1811 = vmatprep.subr.mxu0 0.0
    %1812 = vmatpush1.msra.mxu0 %v1774
    %1813 = vmatprep.subr.mxu0 0.0
    %1814 = vmatpush1.msra.mxu0 %v1775
    %1815 = vmatprep.subr.mxu0 0.0
    %1816 = vmatpush1.msra.mxu0 0.0
    %1817 = vmatprep.subr.mxu0 0.0
    %1818 = vmatpush1.msra.mxu0 0.0
    %1819 = vmatprep.subr.mxu0 0.0
    %1820 = vmatpush1.msra.mxu0 0.0
    %1821 = vmatprep.subr.mxu0 0.0
    %1822 = vmatpush1.msra.mxu0 0.0
    %1823 = vmatprep.subr.mxu0 0.0
    %1824 = vmatpush1.msra.mxu0 0.0
    %1825 = vmatprep.subr.mxu0 0.0
    %1826 = vmatpush1.msra.mxu0 0.0
    %1827 = vmatprep.subr.mxu0 0.0
    %1828 = vmatpush1.msra.mxu0 0.0
    %1829 = vmatprep.subr.mxu0 0.0
    %1830 = vmatpush1.msra.mxu0 0.0
    %1831 = vmatprep.subr.mxu0 0.0
    %1832 = vmatpush1.msra.mxu0 0.0
    %1833 = vmatprep.subr.mxu0 0.0
    %1834 = vmatpush1.msra.mxu0 0.0
    %1835 = vmatprep.subr.mxu0 0.0
    %1836 = vmatpush1.msra.mxu0 0.0
    %1837 = vmatprep.subr.mxu0 0.0
    %1838 = vmatpush1.msra.mxu0 0.0
    %1839 = vmatprep.subr.mxu0 0.0
    %1840 = vmatpush1.msra.mxu0 0.0
    %1841 = vmatprep.subr.mxu0 0.0
    %1842 = vmatpush1.msra.mxu0 0.0
    %1843 = vmatprep.subr.mxu0 0.0
    %1844 = vmatpush1.msra.mxu0 0.0
    %1845 = vmatprep.subr.mxu0 0.0
    %1846 = vmatpush1.msra.mxu0 0.0
    %1847 = vmatprep.mubr.f32.mxu0 0.0
    %1848 = vmatmul.mubr.f32.gmra.mrb[0].mxu0 %v1759
    %v1849 = vpop.f32.mrb[0].mxu0
    %v1850 = vadd.f32 %v1781, %v1849
    %v1851 = vpop.f32.mrb[0].mxu0
    %1852 = vdwg.mxu0
    %vm1853 = vcmp.gt.f32.partialorder %v1850, 0.0
    %v1854 = vmul.f32 %v1850, 0.25
    %v1855 = vsel %vm1853, %v1850, %v1854
    %vm1856 = vcmask 123904
    %1857 = vst.msk [vmem:[#allocation3] sm:$0x3] %vm1856, %v1855
    %vm1858 = vcmask 125954
    %1859 = vst.msk [vmem:[#allocation5 - $0x2] sm:$0xc] %vm1858, %v1855
    %v1860 = vld [vmem:[%s14] sm:$0xff]
    %v1861 = vld [vmem:[%s14 + $0x8] sm:$0xff]
    %v1862 = vld [vmem:[%s14 + $0x10] sm:$0xff]
    %v1863 = vld [vmem:[%s14 + $0x18] sm:$0xff]
    %v1864 = vld [vmem:[#allocation2] sm:$0x1]
    %v1866 = vrot.slane %v230, 5
    %v1869 = vrot.slane %v386, 4
    %v1871 = vsel %vm1308, %v1866, %v1869
    %vm1872 = vcmask 258048
    %v1873 = vsel %vm1872, %v230, 0.0
    %v1874 = vrot.slane %v1873, 4
    %v1875 = vadd.f32 %v1873, %v1874
    %v1876 = vrot.slane %v1875, 2
    %v1877 = vadd.f32 %v1875, %v1876
    %v1878 = vrot.slane %v1877, 1
    %v1879 = vadd.f32 %v1877, %v1878
    %v1880 = vrcp.pop 5.0
    %v1881 = vmul.f32 %v1879, %v1880
    %v1882 = vsel %vm1872, %v386, 0.0
    %v1883 = vrot.slane %v1882, 4
    %v1884 = vadd.f32 %v1882, %v1883
    %v1885 = vrot.slane %v1884, 2
    %v1886 = vadd.f32 %v1884, %v1885
    %v1887 = vrot.slane %v1886, 1
    %v1888 = vadd.f32 %v1886, %v1887
    %v1889 = vmul.f32 %v1888, %v1880
    %v1890 = vsel %vm1308, %v1881, %v1889
    %v1892 = vsel %vm1332, %v1871, 0
    %1894 = vmatprep.subr.mxu0 0.0
    %1895 = vmatpush1.msra.mxu0 %v1860
    %1896 = vmatprep.subr.mxu0 0.0
    %1897 = vmatpush1.msra.mxu0 %v1861
    %1898 = vmatprep.subr.mxu0 0.0
    %1899 = vmatpush1.msra.mxu0 %v1862
    %1900 = vmatprep.subr.mxu0 0.0
    %1901 = vmatpush1.msra.mxu0 %v1863
    %1902 = vmatprep.subr.mxu0 0.0
    %1903 = vmatpush1.msra.mxu0 0.0
    %1904 = vmatprep.subr.mxu0 0.0
    %1905 = vmatpush1.msra.mxu0 0.0
    %1906 = vmatprep.subr.mxu0 0.0
    %1907 = vmatpush1.msra.mxu0 0.0
    %1908 = vmatprep.subr.mxu0 0.0
    %1909 = vmatpush1.msra.mxu0 0.0
    %1910 = vmatprep.subr.mxu0 0.0
    %1911 = vmatpush1.msra.mxu0 0.0
    %1912 = vmatprep.subr.mxu0 0.0
    %1913 = vmatpush1.msra.mxu0 0.0
    %1914 = vmatprep.subr.mxu0 0.0
    %1915 = vmatpush1.msra.mxu0 0.0
    %1916 = vmatprep.subr.mxu0 0.0
    %1917 = vmatpush1.msra.mxu0 0.0
    %1918 = vmatprep.subr.mxu0 0.0
    %1919 = vmatpush1.msra.mxu0 0.0
    %1920 = vmatprep.subr.mxu0 0.0
    %1921 = vmatpush1.msra.mxu0 0.0
    %1922 = vmatprep.subr.mxu0 0.0
    %1923 = vmatpush1.msra.mxu0 0.0
    %1924 = vmatprep.subr.mxu0 0.0
    %1925 = vmatpush1.msra.mxu0 0.0
    %1926 = vmatprep.subr.mxu0 0.0
    %1927 = vmatpush1.msra.mxu0 0.0
    %1928 = vmatprep.subr.mxu0 0.0
    %1929 = vmatpush1.msra.mxu0 0.0
    %1930 = vmatprep.subr.mxu0 0.0
    %1931 = vmatpush1.msra.mxu0 0.0
    %1932 = vmatprep.subr.mxu0 0.0
    %1933 = vmatpush1.msra.mxu0 0.0
    %1934 = vmatprep.subr.mxu0 0.0
    %1935 = vmatpush1.msra.mxu0 0.0
    %1936 = vmatprep.subr.mxu0 0.0
    %1937 = vmatpush1.msra.mxu0 0.0
    %1938 = vmatprep.subr.mxu0 0.0
    %1939 = vmatpush1.msra.mxu0 0.0
    %1940 = vmatprep.subr.mxu0 0.0
    %1941 = vmatpush1.msra.mxu0 0.0
    %1942 = vmatprep.subr.mxu0 0.0
    %1943 = vmatpush1.msra.mxu0 0.0
    %1944 = vmatprep.subr.mxu0 0.0
    %1945 = vmatpush1.msra.mxu0 0.0
    %1946 = vmatprep.subr.mxu0 0.0
    %1947 = vmatpush1.msra.mxu0 0.0
    %1948 = vmatprep.subr.mxu0 0.0
    %1949 = vmatpush1.msra.mxu0 0.0
    %1950 = vmatprep.subr.mxu0 0.0
    %1951 = vmatpush1.msra.mxu0 0.0
    %1952 = vmatprep.subr.mxu0 0.0
    %1953 = vmatpush1.msra.mxu0 0.0
    %1954 = vmatprep.subr.mxu0 0.0
    %1955 = vmatpush1.msra.mxu0 0.0
    %1956 = vmatprep.subr.mxu0 0.0
    %1957 = vmatpush1.msra.mxu0 0.0
    %1958 = vmatprep.mubr.f32.mxu0 0.0
    %1959 = vmatmul.mubr.f32.gmra.mrb[0].mxu0 %v1892
    %v1960 = vpop.f32.mrb[0].mxu0
    %v1961 = vadd.f32 0.0, %v1960
    %v1962 = vpop.f32.mrb[0].mxu0
    %1963 = vdwg.mxu0
    %v1964 = vmul.f32 %v1961, %v1890
    %vm1965 = vcmask 254976
    %v1966 = vsel %vm1965, %v1964, 0.0
    %1967 = vadd.xlane.f32.xlu0 %v1966
    %v1968 = vpop.xlane.xlu0 %1967
    %v1970 = vrot.slane %v1890, 7
    %v1972 = vsel %vm1308, %v1890, %v1970
    %v1973 = vmul.f32 %v1961, %v1972
    %v1974 = vsel %vm1965, %v1973, 0.0
    %1975 = vadd.xlane.f32.xlu0 %v1974
    %v1976 = vpop.xlane.xlu0 %1975
    %v1978 = vrot.slane %v1976, 6
    %v1980 = vsel %vm1310, %v1968, %v1978
    %v1982 = vlaneseq
    %v1983 = vshrl.u32 %v1982, 7
    %v1984 = vsub.s32 0, %v1983
    %v1985 = vrot.slane %v1864, %v1984
    %v1987 = vadd.f32 %v1980, %v1985
    %vm1988 = vcmask 3072
    %1989 = vst.msk [vmem:[%s18] sm:$0xf] %vm1988, %v1987
    %v1991 = vrot.slane %v540, 5
    %v1994 = vrot.slane %v696, 4
    %v1996 = vsel %vm1308, %v1991, %v1994
    %v1997 = vsel %vm1872, %v540, 0.0
    %v1998 = vrot.slane %v1997, 4
    %v1999 = vadd.f32 %v1997, %v1998
    %v2000 = vrot.slane %v1999, 2
    %v2001 = vadd.f32 %v1999, %v2000
    %v2002 = vrot.slane %v2001, 1
    %v2003 = vadd.f32 %v2001, %v2002
    %v2004 = vmul.f32 %v2003, %v1880
    %v2005 = vsel %vm1872, %v696, 0.0
    %v2006 = vrot.slane %v2005, 4
    %v2007 = vadd.f32 %v2005, %v2006
    %v2008 = vrot.slane %v2007, 2
    %v2009 = vadd.f32 %v2007, %v2008
    %v2010 = vrot.slane %v2009, 1
    %v2011 = vadd.f32 %v2009, %v2010
    %v2012 = vmul.f32 %v2011, %v1880
    %v2013 = vsel %vm1308, %v2004, %v2012
    %v2015 = vsel %vm1332, %v1996, 0
    %2017 = vmatprep.subr.mxu0 0.0
    %2018 = vmatpush1.msra.mxu0 %v1860
    %2019 = vmatprep.subr.mxu0 0.0
    %2020 = vmatpush1.msra.mxu0 %v1861
    %2021 = vmatprep.subr.mxu0 0.0
    %2022 = vmatpush1.msra.mxu0 %v1862
    %2023 = vmatprep.subr.mxu0 0.0
    %2024 = vmatpush1.msra.mxu0 %v1863
    %2025 = vmatprep.subr.mxu0 0.0
    %2026 = vmatpush1.msra.mxu0 0.0
    %2027 = vmatprep.subr.mxu0 0.0
    %2028 = vmatpush1.msra.mxu0 0.0
    %2029 = vmatprep.subr.mxu0 0.0
    %2030 = vmatpush1.msra.mxu0 0.0
    %2031 = vmatprep.subr.mxu0 0.0
    %2032 = vmatpush1.msra.mxu0 0.0
    %2033 = vmatprep.subr.mxu0 0.0
    %2034 = vmatpush1.msra.mxu0 0.0
    %2035 = vmatprep.subr.mxu0 0.0
    %2036 = vmatpush1.msra.mxu0 0.0
    %2037 = vmatprep.subr.mxu0 0.0
    %2038 = vmatpush1.msra.mxu0 0.0
    %2039 = vmatprep.subr.mxu0 0.0
    %2040 = vmatpush1.msra.mxu0 0.0
    %2041 = vmatprep.subr.mxu0 0.0
    %2042 = vmatpush1.msra.mxu0 0.0
    %2043 = vmatprep.subr.mxu0 0.0
    %2044 = vmatpush1.msra.mxu0 0.0
    %2045 = vmatprep.subr.mxu0 0.0
    %2046 = vmatpush1.msra.mxu0 0.0
    %2047 = vmatprep.subr.mxu0 0.0
    %2048 = vmatpush1.msra.mxu0 0.0
    %2049 = vmatprep.subr.mxu0 0.0
    %2050 = vmatpush1.msra.mxu0 0.0
    %2051 = vmatprep.subr.mxu0 0.0
    %2052 = vmatpush1.msra.mxu0 0.0
    %2053 = vmatprep.subr.mxu0 0.0
    %2054 = vmatpush1.msra.mxu0 0.0
    %2055 = vmatprep.subr.mxu0 0.0
    %2056 = vmatpush1.msra.mxu0 0.0
    %2057 = vmatprep.subr.mxu0 0.0
    %2058 = vmatpush1.msra.mxu0 0.0
    %2059 = vmatprep.subr.mxu0 0.0
    %2060 = vmatpush1.msra.mxu0 0.0
    %2061 = vmatprep.subr.mxu0 0.0
    %2062 = vmatpush1.msra.mxu0 0.0
    %2063 = vmatprep.subr.mxu0 0.0
    %2064 = vmatpush1.msra.mxu0 0.0
    %2065 = vmatprep.subr.mxu0 0.0
    %2066 = vmatpush1.msra.mxu0 0.0
    %2067 = vmatprep.subr.mxu0 0.0
    %2068 = vmatpush1.msra.mxu0 0.0
    %2069 = vmatprep.subr.mxu0 0.0
    %2070 = vmatpush1.msra.mxu0 0.0
    %2071 = vmatprep.subr.mxu0 0.0
    %2072 = vmatpush1.msra.mxu0 0.0
    %2073 = vmatprep.subr.mxu0 0.0
    %2074 = vmatpush1.msra.mxu0 0.0
    %2075 = vmatprep.subr.mxu0 0.0
    %2076 = vmatpush1.msra.mxu0 0.0
    %2077 = vmatprep.subr.mxu0 0.0
    %2078 = vmatpush1.msra.mxu0 0.0
    %2079 = vmatprep.subr.mxu0 0.0
    %2080 = vmatpush1.msra.mxu0 0.0
    %2081 = vmatprep.mubr.f32.mxu0 0.0
    %2082 = vmatmul.mubr.f32.gmra.mrb[0].mxu0 %v2015
    %v2083 = vpop.f32.mrb[0].mxu0
    %v2084 = vadd.f32 0.0, %v2083
    %v2085 = vpop.f32.mrb[0].mxu0
    %2086 = vdwg.mxu0
    %v2087 = vmul.f32 %v2084, %v2013
    %v2088 = vsel %vm1965, %v2087, 0.0
    %2089 = vadd.xlane.f32.xlu0 %v2088
    %v2090 = vpop.xlane.xlu0 %2089
    %v2092 = vrot.slane %v2013, 7
    %v2094 = vsel %vm1308, %v2013, %v2092
    %v2095 = vmul.f32 %v2084, %v2094
    %v2096 = vsel %vm1965, %v2095, 0.0
    %2097 = vadd.xlane.f32.xlu0 %v2096
    %v2098 = vpop.xlane.xlu0 %2097
    %v2100 = vrot.slane %v2098, 6
    %v2102 = vsel %vm1310, %v2090, %v2100
    %v2103 = vadd.f32 %v2102, %v1985
    %2104 = vst.msk [vmem:[%s19] sm:$0xf] %vm1988, %v2103
    %v2105 = vrot.slane %v230, 1
    %vm2107 = vcmask 1043456
    %v2108 = vsel %vm2107, %v230, %v2105
    %v2109 = vrot.slane %v540, 1
    %v2111 = vsel %vm2107, %v540, %v2109
    %v2112 = vmul.f32 %v2108, %v2108
    %v2113 = vsel %vm1872, %v2112, 0.0
    %2114 = vadd.xlane.f32.xlu0 %v2113
    %v2115 = vpop.xlane.xlu0 %2114
    %v2116 = vrsqrt.pop %v2115
    %v2117 = vmul.f32 %v2115, %v2116
    %vm2118 = vcmp.eq.f32.partialorder %v2115, inf
    %v2119 = vsel %vm2118, %v2115, %v2117
    %vm2120 = vcmp.eq.f32.partialorder %v2115, 0.0
    %v2121 = vand.u32 %v2115, 2147483648
    %v2122 = vsel %vm2120, %v2121, %v2119
    %v2123 = vmax.f32 %v2122, 1e-12
    %v2124 = vrcp.pop %v2123
    %v2125 = vmul.f32 %v2108, %v2124
    %v2126 = vmul.f32 %v2111, %v2111
    %v2127 = vsel %vm1872, %v2126, 0.0
    %2128 = vadd.xlane.f32.xlu0 %v2127
    %v2129 = vpop.xlane.xlu0 %2128
    %v2130 = vrsqrt.pop %v2129
    %v2131 = vmul.f32 %v2129, %v2130
    %vm2132 = vcmp.eq.f32.partialorder %v2129, inf
    %v2133 = vsel %vm2132, %v2129, %v2131
    %vm2134 = vcmp.eq.f32.partialorder %v2129, 0.0
    %v2135 = vand.u32 %v2129, 2147483648
    %v2136 = vsel %vm2134, %v2135, %v2133
    %v2137 = vmax.f32 %v2136, 1e-12
    %v2138 = vrcp.pop %v2137
    %v2139 = vmul.f32 %v2111, %v2138
    %v2141 = vsel %vm1332, %v2125, 0
    %v2144 = vsel %vm1332, %v2139, 0
    %2146 = vmatprep.subr.mxu0 0.0
    %2147 = vmatpush1.xpose.msra.mxu0 %v2144
    %2148 = vmatprep.subr.mxu0 0.0
    %2149 = vmatpush1.xpose.msra.mxu0 0.0
    %2150 = vmatprep.subr.mxu0 0.0
    %2151 = vmatpush1.xpose.msra.mxu0 0.0
    %2152 = vmatprep.subr.mxu0 0.0
    %2153 = vmatpush1.xpose.msra.mxu0 0.0
    %2154 = vmatprep.subr.mxu0 0.0
    %2155 = vmatpush1.xpose.msra.mxu0 0.0
    %2156 = vmatprep.subr.mxu0 0.0
    %2157 = vmatpush1.xpose.msra.mxu0 0.0
    %2158 = vmatprep.subr.mxu0 0.0
    %2159 = vmatpush1.xpose.msra.mxu0 0.0
    %2160 = vmatprep.subr.mxu0 0.0
    %2161 = vmatpush1.xpose.msra.mxu0 0.0
    %2162 = vmatprep.subr.mxu0 0.0
    %2163 = vmatpush1.xpose.msra.mxu0 0.0
    %2164 = vmatprep.subr.mxu0 0.0
    %2165 = vmatpush1.xpose.msra.mxu0 0.0
    %2166 = vmatprep.subr.mxu0 0.0
    %2167 = vmatpush1.xpose.msra.mxu0 0.0
    %2168 = vmatprep.subr.mxu0 0.0
    %2169 = vmatpush1.xpose.msra.mxu0 0.0
    %2170 = vmatprep.subr.mxu0 0.0
    %2171 = vmatpush1.xpose.msra.mxu0 0.0
    %2172 = vmatprep.subr.mxu0 0.0
    %2173 = vmatpush1.xpose.msra.mxu0 0.0
    %2174 = vmatprep.subr.mxu0 0.0
    %2175 = vmatpush1.xpose.msra.mxu0 0.0
    %2176 = vmatprep.subr.mxu0 0.0
    %2177 = vmatpush1.xpose.msra.mxu0 0.0
    %2178 = vmatprep.subr.mxu0 0.0
    %2179 = vmatpush1.xpose.msra.mxu0 0.0
    %2180 = vmatprep.subr.mxu0 0.0
    %2181 = vmatpush1.xpose.msra.mxu0 0.0
    %2182 = vmatprep.subr.mxu0 0.0
    %2183 = vmatpush1.xpose.msra.mxu0 0.0
    %2184 = vmatprep.subr.mxu0 0.0
    %2185 = vmatpush1.xpose.msra.mxu0 0.0
    %2186 = vmatprep.subr.mxu0 0.0
    %2187 = vmatpush1.xpose.msra.mxu0 0.0
    %2188 = vmatprep.subr.mxu0 0.0
    %2189 = vmatpush1.xpose.msra.mxu0 0.0
    %2190 = vmatprep.subr.mxu0 0.0
    %2191 = vmatpush1.xpose.msra.mxu0 0.0
    %2192 = vmatprep.subr.mxu0 0.0
    %2193 = vmatpush1.xpose.msra.mxu0 0.0
    %2194 = vmatprep.subr.mxu0 0.0
    %2195 = vmatpush1.xpose.msra.mxu0 0.0
    %2196 = vmatprep.subr.mxu0 0.0
    %2197 = vmatpush1.xpose.msra.mxu0 0.0
    %2198 = vmatprep.subr.mxu0 0.0
    %2199 = vmatpush1.xpose.msra.mxu0 0.0
    %2200 = vmatprep.subr.mxu0 0.0
    %2201 = vmatpush1.xpose.msra.mxu0 0.0
    %2202 = vmatprep.subr.mxu0 0.0
    %2203 = vmatpush1.xpose.msra.mxu0 0.0
    %2204 = vmatprep.subr.mxu0 0.0
    %2205 = vmatpush1.xpose.msra.mxu0 0.0
    %2206 = vmatprep.subr.mxu0 0.0
    %2207 = vmatpush1.xpose.msra.mxu0 0.0
    %2208 = vmatprep.subr.mxu0 0.0
    %2209 = vmatpush1.xpose.msra.mxu0 0.0
    %2210 = vmatprep.mubr.f32.mxu0 0.0
    %2211 = vmatmul.mubr.f32.gmra.mrb[0].mxu0 %v2141
    %v2212 = vpop.f32.mrb[0].mxu0
    %v2213 = vadd.f32 0.0, %v2212
    %v2214 = vpop.f32.mrb[0].mxu0
    %2215 = vdwg.mxu0
    %v2216 = vsub.f32 1.0, %v2213
    %v2217 = vlaneseq
    %v2218 = vshrl.u32 %v2217, 7
    %v2219 = vsub.s32 4, %v2218
    %v2220 = vrot.slane %v540, %v2219
    %v2221 = vmul.f32 %v2108, %v2220
    %v2222 = vsel %vm1872, %v2221, 0.0
    %2223 = vadd.xlane.f32.xlu0 %v2222
    %v2224 = vpop.xlane.xlu0 %2223
    %vm2225 = vcmp.le.f32.partialorder %v2224, 0.0
    %v2226 = vsel %vm2225, 1e-08, %v2224
    %vm2227 = vcmask 1044480
    %v2228 = vsel %vm2227, %v2226, 0.0
    %v2229 = vrot.slane %v2228, 4
    %v2230 = vadd.f32 %v2228, %v2229
    %v2231 = vrot.slane %v2230, 2
    %v2232 = vadd.f32 %v2230, %v2231
    %v2233 = vrot.slane %v2232, 1
    %v2234 = vadd.f32 %v2232, %v2233
    %v2235 = vrcp.pop %v2234
    %v2236 = vmul.f32 %v2226, %v2235
    %v2237 = vrot.slane %v230, 4
    %v2238 = vsel %vm1332, %v2237, 0
    %v2241 = vsel %vm1332, %v2111, 0
    %2243 = vmatprep.subr.mxu0 0.0
    %2244 = vmatpush1.xpose.msra.mxu0 %v2241
    %2245 = vmatprep.subr.mxu0 0.0
    %2246 = vmatpush1.xpose.msra.mxu0 0.0
    %2247 = vmatprep.subr.mxu0 0.0
    %2248 = vmatpush1.xpose.msra.mxu0 0.0
    %2249 = vmatprep.subr.mxu0 0.0
    %2250 = vmatpush1.xpose.msra.mxu0 0.0
    %2251 = vmatprep.subr.mxu0 0.0
    %2252 = vmatpush1.xpose.msra.mxu0 0.0
    %2253 = vmatprep.subr.mxu0 0.0
    %2254 = vmatpush1.xpose.msra.mxu0 0.0
    %2255 = vmatprep.subr.mxu0 0.0
    %2256 = vmatpush1.xpose.msra.mxu0 0.0
    %2257 = vmatprep.subr.mxu0 0.0
    %2258 = vmatpush1.xpose.msra.mxu0 0.0
    %2259 = vmatprep.subr.mxu0 0.0
    %2260 = vmatpush1.xpose.msra.mxu0 0.0
    %2261 = vmatprep.subr.mxu0 0.0
    %2262 = vmatpush1.xpose.msra.mxu0 0.0
    %2263 = vmatprep.subr.mxu0 0.0
    %2264 = vmatpush1.xpose.msra.mxu0 0.0
    %2265 = vmatprep.subr.mxu0 0.0
    %2266 = vmatpush1.xpose.msra.mxu0 0.0
    %2267 = vmatprep.subr.mxu0 0.0
    %2268 = vmatpush1.xpose.msra.mxu0 0.0
    %2269 = vmatprep.subr.mxu0 0.0
    %2270 = vmatpush1.xpose.msra.mxu0 0.0
    %2271 = vmatprep.subr.mxu0 0.0
    %2272 = vmatpush1.xpose.msra.mxu0 0.0
    %2273 = vmatprep.subr.mxu0 0.0
    %2274 = vmatpush1.xpose.msra.mxu0 0.0
    %2275 = vmatprep.subr.mxu0 0.0
    %2276 = vmatpush1.xpose.msra.mxu0 0.0
    %2277 = vmatprep.subr.mxu0 0.0
    %2278 = vmatpush1.xpose.msra.mxu0 0.0
    %2279 = vmatprep.subr.mxu0 0.0
    %2280 = vmatpush1.xpose.msra.mxu0 0.0
    %2281 = vmatprep.subr.mxu0 0.0
    %2282 = vmatpush1.xpose.msra.mxu0 0.0
    %2283 = vmatprep.subr.mxu0 0.0
    %2284 = vmatpush1.xpose.msra.mxu0 0.0
    %2285 = vmatprep.subr.mxu0 0.0
    %2286 = vmatpush1.xpose.msra.mxu0 0.0
    %2287 = vmatprep.subr.mxu0 0.0
    %2288 = vmatpush1.xpose.msra.mxu0 0.0
    %2289 = vmatprep.subr.mxu0 0.0
    %2290 = vmatpush1.xpose.msra.mxu0 0.0
    %2291 = vmatprep.subr.mxu0 0.0
    %2292 = vmatpush1.xpose.msra.mxu0 0.0
    %2293 = vmatprep.subr.mxu0 0.0
    %2294 = vmatpush1.xpose.msra.mxu0 0.0
    %2295 = vmatprep.subr.mxu0 0.0
    %2296 = vmatpush1.xpose.msra.mxu0 0.0
    %2297 = vmatprep.subr.mxu0 0.0
    %2298 = vmatpush1.xpose.msra.mxu0 0.0
    %2299 = vmatprep.subr.mxu0 0.0
    %2300 = vmatpush1.xpose.msra.mxu0 0.0
    %2301 = vmatprep.subr.mxu0 0.0
    %2302 = vmatpush1.xpose.msra.mxu0 0.0
    %2303 = vmatprep.subr.mxu0 0.0
    %2304 = vmatpush1.xpose.msra.mxu0 0.0
    %2305 = vmatprep.subr.mxu0 0.0
    %2306 = vmatpush1.xpose.msra.mxu0 0.0
    %2307 = vmatprep.mubr.f32.mxu0 0.0
    %2308 = vmatmul.mubr.f32.gmra.mrb[0].mxu0 %v2238
    %v2309 = vpop.f32.mrb[0].mxu0
    %v2310 = vadd.f32 0.0, %v2309
    %v2311 = vpop.f32.mrb[0].mxu0
    %2312 = vdwg.mxu0
    %vm2313 = vcmp.le.f32.partialorder %v2310, 0.0
    %v2314 = vsel %vm2313, 1e-08, %v2310
    %vm2315 = vcmask 32768
    %v2316 = vsel %vm2315, %v2314, 0.0
    %2317 = vadd.xlane.f32.xlu0 %v2316
    %v2318 = vpop.xlane.xlu0 %2317
    %v2319 = vrcp.pop %v2318
    %v2320 = vmul.f32 %v2314, %v2319
    %v2321 = vmul.f32 %v2216, -20.0
    %v2322 = vmul.f32 %v2321, 1.442695
    %v2323 = vpow.pop %v2322
    %v2324 = vmul.f32 %v2323, 0.2
    %vm2325 = vcmask 36864
    %v2326 = vsel %vm2325, %v2324, 0.0
    %2327 = vadd.xlane.f32.xlu0 %v2326
    %v2328 = vpop.xlane.xlu0 %2327
    %v2329 = vrcp.pop %v2328
    %v2330 = vmul.f32 %v2236, %v2329
    %v2331 = vmul.f32 %v2323, %v2330
    %v2332 = vsel %vm2325, %v2331, 0.0
    %v2333 = vrot.slane %v2332, 4
    %v2334 = vadd.f32 %v2332, %v2333
    %v2335 = vrot.slane %v2334, 2
    %v2336 = vadd.f32 %v2334, %v2335
    %v2337 = vrot.slane %v2336, 1
    %v2338 = vadd.f32 %v2336, %v2337
    %v2339 = vrcp.pop %v2338
    %v2340 = vmul.f32 %v2320, %v2339
    %v2341 = vlaneseq
    %v2342 = vshrl.u32 %v2341, 7
    %v2343 = vsub.s32 0, %v2342
    %v2344 = vrot.slane %v2340, %v2343
    %v2345 = vmul.f32 %v2323, %v2344
    %v2346 = vsel %vm2325, %v2345, 0.0
    %2347 = vadd.xlane.f32.xlu0 %v2346
    %v2348 = vpop.xlane.xlu0 %2347
    %v2349 = vrcp.pop %v2348
    %v2350 = vmul.f32 %v2236, %v2349
    %v2351 = vmul.f32 %v2323, %v2350
    %v2352 = vsel %vm2325, %v2351, 0.0
    %v2353 = vrot.slane %v2352, 4
    %v2354 = vadd.f32 %v2352, %v2353
    %v2355 = vrot.slane %v2354, 2
    %v2356 = vadd.f32 %v2354, %v2355
    %v2357 = vrot.slane %v2356, 1
    %v2358 = vadd.f32 %v2356, %v2357
    %v2359 = vrcp.pop %v2358
    %v2360 = vmul.f32 %v2320, %v2359
    %v2361 = vlaneseq
    %v2362 = vshrl.u32 %v2361, 7
    %v2363 = vsub.s32 0, %v2362
    %v2364 = vrot.slane %v2360, %v2363
    %v2365 = vmul.f32 %v2323, %v2364
    %v2366 = vsel %vm2325, %v2365, 0.0
    %2367 = vadd.xlane.f32.xlu0 %v2366
    %v2368 = vpop.xlane.xlu0 %2367
    %v2369 = vrcp.pop %v2368
    %v2370 = vmul.f32 %v2236, %v2369
    %v2371 = vmul.f32 %v2323, %v2370
    %v2372 = vsel %vm2325, %v2371, 0.0
    %v2373 = vrot.slane %v2372, 4
    %v2374 = vadd.f32 %v2372, %v2373
    %v2375 = vrot.slane %v2374, 2
    %v2376 = vadd.f32 %v2374, %v2375
    %v2377 = vrot.slane %v2376, 1
    %v2378 = vadd.f32 %v2376, %v2377
    %v2379 = vrcp.pop %v2378
    %v2380 = vmul.f32 %v2320, %v2379
    %v2381 = vlaneseq
    %v2382 = vshrl.u32 %v2381, 7
    %v2383 = vsub.s32 0, %v2382
    %v2384 = vrot.slane %v2380, %v2383
    %v2385 = vmul.f32 %v2323, %v2384
    %v2386 = vsel %vm2325, %v2385, 0.0
    %2387 = vadd.xlane.f32.xlu0 %v2386
    %v2388 = vpop.xlane.xlu0 %2387
    %v2389 = vrcp.pop %v2388
    %v2390 = vmul.f32 %v2236, %v2389
    %v2391 = vmul.f32 %v2323, %v2390
    %v2392 = vsel %vm2325, %v2391, 0.0
    %v2393 = vrot.slane %v2392, 4
    %v2394 = vadd.f32 %v2392, %v2393
    %v2395 = vrot.slane %v2394, 2
    %v2396 = vadd.f32 %v2394, %v2395
    %v2397 = vrot.slane %v2396, 1
    %v2398 = vadd.f32 %v2396, %v2397
    %v2399 = vrcp.pop %v2398
    %v2400 = vmul.f32 %v2320, %v2399
    %v2401 = vlaneseq
    %v2402 = vshrl.u32 %v2401, 7
    %v2403 = vsub.s32 0, %v2402
    %v2404 = vrot.slane %v2400, %v2403
    %v2405 = vmul.f32 %v2323, %v2404
    %v2406 = vsel %vm2325, %v2405, 0.0
    %2407 = vadd.xlane.f32.xlu0 %v2406
    %v2408 = vpop.xlane.xlu0 %2407
    %v2409 = vrcp.pop %v2408
    %v2410 = vmul.f32 %v2236, %v2409
    %v2411 = vmul.f32 %v2323, %v2410
    %v2412 = vsel %vm2325, %v2411, 0.0
    %v2413 = vrot.slane %v2412, 4
    %v2414 = vadd.f32 %v2412, %v2413
    %v2415 = vrot.slane %v2414, 2
    %v2416 = vadd.f32 %v2414, %v2415
    %v2417 = vrot.slane %v2416, 1
    %v2418 = vadd.f32 %v2416, %v2417
    %v2419 = vrcp.pop %v2418
    %v2420 = vmul.f32 %v2320, %v2419
    %v2421 = vsub.f32 1.0, %v2216
    %v2422 = vmul.f32 %v2323, %v2421
    %v2423 = vmul.f32 %v2410, %v2422
    %v2424 = vlaneseq
    %v2425 = vshrl.u32 %v2424, 7
    %v2426 = vsub.s32 0, %v2425
    %v2427 = vrot.slane %v2420, %v2426
    %v2428 = vmul.f32 %v2423, %v2427
    %v2429 = vsel %vm2325, %v2428, 0.0
    %2430 = vadd.xlane.f32.xlu0 %v2429
    %v2431 = vpop.xlane.xlu0 %2430
    %v2432 = vsel %vm2227, %v2431, 0.0
    %v2433 = vrot.slane %v2432, 4
    %v2434 = vadd.f32 %v2432, %v2433
    %v2435 = vrot.slane %v2434, 2
    %v2436 = vadd.f32 %v2434, %v2435
    %v2437 = vrot.slane %v2436, 1
    %v2438 = vadd.f32 %v2436, %v2437
    %2439 = vmatprep.subr.mxu0 0.0
    %2440 = vmatpush1.xpose.msra.mxu0 %v2141
    %2441 = vmatprep.subr.mxu0 0.0
    %2442 = vmatpush1.xpose.msra.mxu0 0.0
    %2443 = vmatprep.subr.mxu0 0.0
    %2444 = vmatpush1.xpose.msra.mxu0 0.0
    %2445 = vmatprep.subr.mxu0 0.0
    %2446 = vmatpush1.xpose.msra.mxu0 0.0
    %2447 = vmatprep.subr.mxu0 0.0
    %2448 = vmatpush1.xpose.msra.mxu0 0.0
    %2449 = vmatprep.subr.mxu0 0.0
    %2450 = vmatpush1.xpose.msra.mxu0 0.0
    %2451 = vmatprep.subr.mxu0 0.0
    %2452 = vmatpush1.xpose.msra.mxu0 0.0
    %2453 = vmatprep.subr.mxu0 0.0
    %2454 = vmatpush1.xpose.msra.mxu0 0.0
    %2455 = vmatprep.subr.mxu0 0.0
    %2456 = vmatpush1.xpose.msra.mxu0 0.0
    %2457 = vmatprep.subr.mxu0 0.0
    %2458 = vmatpush1.xpose.msra.mxu0 0.0
    %2459 = vmatprep.subr.mxu0 0.0
    %2460 = vmatpush1.xpose.msra.mxu0 0.0
    %2461 = vmatprep.subr.mxu0 0.0
    %2462 = vmatpush1.xpose.msra.mxu0 0.0
    %2463 = vmatprep.subr.mxu0 0.0
    %2464 = vmatpush1.xpose.msra.mxu0 0.0
    %2465 = vmatprep.subr.mxu0 0.0
    %2466 = vmatpush1.xpose.msra.mxu0 0.0
    %2467 = vmatprep.subr.mxu0 0.0
    %2468 = vmatpush1.xpose.msra.mxu0 0.0
    %2469 = vmatprep.subr.mxu0 0.0
    %2470 = vmatpush1.xpose.msra.mxu0 0.0
    %2471 = vmatprep.subr.mxu0 0.0
    %2472 = vmatpush1.xpose.msra.mxu0 0.0
    %2473 = vmatprep.subr.mxu0 0.0
    %2474 = vmatpush1.xpose.msra.mxu0 0.0
    %2475 = vmatprep.subr.mxu0 0.0
    %2476 = vmatpush1.xpose.msra.mxu0 0.0
    %2477 = vmatprep.subr.mxu0 0.0
    %2478 = vmatpush1.xpose.msra.mxu0 0.0
    %2479 = vmatprep.subr.mxu0 0.0
    %2480 = vmatpush1.xpose.msra.mxu0 0.0
    %2481 = vmatprep.subr.mxu0 0.0
    %2482 = vmatpush1.xpose.msra.mxu0 0.0
    %2483 = vmatprep.subr.mxu0 0.0
    %2484 = vmatpush1.xpose.msra.mxu0 0.0
    %2485 = vmatprep.subr.mxu0 0.0
    %2486 = vmatpush1.xpose.msra.mxu0 0.0
    %2487 = vmatprep.subr.mxu0 0.0
    %2488 = vmatpush1.xpose.msra.mxu0 0.0
    %2489 = vmatprep.subr.mxu0 0.0
    %2490 = vmatpush1.xpose.msra.mxu0 0.0
    %2491 = vmatprep.subr.mxu0 0.0
    %2492 = vmatpush1.xpose.msra.mxu0 0.0
    %2493 = vmatprep.subr.mxu0 0.0
    %2494 = vmatpush1.xpose.msra.mxu0 0.0
    %2495 = vmatprep.subr.mxu0 0.0
    %2496 = vmatpush1.xpose.msra.mxu0 0.0
    %2497 = vmatprep.subr.mxu0 0.0
    %2498 = vmatpush1.xpose.msra.mxu0 0.0
    %2499 = vmatprep.subr.mxu0 0.0
    %2500 = vmatpush1.xpose.msra.mxu0 0.0
    %2501 = vmatprep.subr.mxu0 0.0
    %2502 = vmatpush1.xpose.msra.mxu0 0.0
    %2503 = vmatprep.mubr.f32.mxu0 0.0
    %2504 = vmatmul.mubr.f32.gmra.mrb[0].mxu0 %v2144
    %v2505 = vpop.f32.mrb[0].mxu0
    %v2506 = vadd.f32 0.0, %v2505
    %v2507 = vpop.f32.mrb[0].mxu0
    %2508 = vdwg.mxu0
    %v2509 = vsub.f32 1.0, %v2506
    %v2510 = vlaneseq
    %v2511 = vshrl.u32 %v2510, 7
    %v2512 = vsub.s32 4, %v2511
    %v2513 = vrot.slane %v230, %v2512
    %v2514 = vmul.f32 %v2111, %v2513
    %v2515 = vsel %vm1872, %v2514, 0.0
    %2516 = vadd.xlane.f32.xlu0 %v2515
    %v2517 = vpop.xlane.xlu0 %2516
    %vm2518 = vcmp.le.f32.partialorder %v2517, 0.0
    %v2519 = vsel %vm2518, 1e-08, %v2517
    %v2520 = vsel %vm2227, %v2519, 0.0
    %v2521 = vrot.slane %v2520, 4
    %v2522 = vadd.f32 %v2520, %v2521
    %v2523 = vrot.slane %v2522, 2
    %v2524 = vadd.f32 %v2522, %v2523
    %v2525 = vrot.slane %v2524, 1
    %v2526 = vadd.f32 %v2524, %v2525
    %v2527 = vrcp.pop %v2526
    %v2528 = vmul.f32 %v2519, %v2527
    %v2529 = vrot.slane %v540, 4
    %v2530 = vsel %vm1332, %v2529, 0
    %v2533 = vsel %vm1332, %v2108, 0
    %2535 = vmatprep.subr.mxu0 0.0
    %2536 = vmatpush1.xpose.msra.mxu0 %v2533
    %2537 = vmatprep.subr.mxu0 0.0
    %2538 = vmatpush1.xpose.msra.mxu0 0.0
    %2539 = vmatprep.subr.mxu0 0.0
    %2540 = vmatpush1.xpose.msra.mxu0 0.0
    %2541 = vmatprep.subr.mxu0 0.0
    %2542 = vmatpush1.xpose.msra.mxu0 0.0
    %2543 = vmatprep.subr.mxu0 0.0
    %2544 = vmatpush1.xpose.msra.mxu0 0.0
    %2545 = vmatprep.subr.mxu0 0.0
    %2546 = vmatpush1.xpose.msra.mxu0 0.0
    %2547 = vmatprep.subr.mxu0 0.0
    %2548 = vmatpush1.xpose.msra.mxu0 0.0
    %2549 = vmatprep.subr.mxu0 0.0
    %2550 = vmatpush1.xpose.msra.mxu0 0.0
    %2551 = vmatprep.subr.mxu0 0.0
    %2552 = vmatpush1.xpose.msra.mxu0 0.0
    %2553 = vmatprep.subr.mxu0 0.0
    %2554 = vmatpush1.xpose.msra.mxu0 0.0
    %2555 = vmatprep.subr.mxu0 0.0
    %2556 = vmatpush1.xpose.msra.mxu0 0.0
    %2557 = vmatprep.subr.mxu0 0.0
    %2558 = vmatpush1.xpose.msra.mxu0 0.0
    %2559 = vmatprep.subr.mxu0 0.0
    %2560 = vmatpush1.xpose.msra.mxu0 0.0
    %2561 = vmatprep.subr.mxu0 0.0
    %2562 = vmatpush1.xpose.msra.mxu0 0.0
    %2563 = vmatprep.subr.mxu0 0.0
    %2564 = vmatpush1.xpose.msra.mxu0 0.0
    %2565 = vmatprep.subr.mxu0 0.0
    %2566 = vmatpush1.xpose.msra.mxu0 0.0
    %2567 = vmatprep.subr.mxu0 0.0
    %2568 = vmatpush1.xpose.msra.mxu0 0.0
    %2569 = vmatprep.subr.mxu0 0.0
    %2570 = vmatpush1.xpose.msra.mxu0 0.0
    %2571 = vmatprep.subr.mxu0 0.0
    %2572 = vmatpush1.xpose.msra.mxu0 0.0
    %2573 = vmatprep.subr.mxu0 0.0
    %2574 = vmatpush1.xpose.msra.mxu0 0.0
    %2575 = vmatprep.subr.mxu0 0.0
    %2576 = vmatpush1.xpose.msra.mxu0 0.0
    %2577 = vmatprep.subr.mxu0 0.0
    %2578 = vmatpush1.xpose.msra.mxu0 0.0
    %2579 = vmatprep.subr.mxu0 0.0
    %2580 = vmatpush1.xpose.msra.mxu0 0.0
    %2581 = vmatprep.subr.mxu0 0.0
    %2582 = vmatpush1.xpose.msra.mxu0 0.0
    %2583 = vmatprep.subr.mxu0 0.0
    %2584 = vmatpush1.xpose.msra.mxu0 0.0
    %2585 = vmatprep.subr.mxu0 0.0
    %2586 = vmatpush1.xpose.msra.mxu0 0.0
    %2587 = vmatprep.subr.mxu0 0.0
    %2588 = vmatpush1.xpose.msra.mxu0 0.0
    %2589 = vmatprep.subr.mxu0 0.0
    %2590 = vmatpush1.xpose.msra.mxu0 0.0
    %2591 = vmatprep.subr.mxu0 0.0
    %2592 = vmatpush1.xpose.msra.mxu0 0.0
    %2593 = vmatprep.subr.mxu0 0.0
    %2594 = vmatpush1.xpose.msra.mxu0 0.0
    %2595 = vmatprep.subr.mxu0 0.0
    %2596 = vmatpush1.xpose.msra.mxu0 0.0
    %2597 = vmatprep.subr.mxu0 0.0
    %2598 = vmatpush1.xpose.msra.mxu0 0.0
    %2599 = vmatprep.mubr.f32.mxu0 0.0
    %2600 = vmatmul.mubr.f32.gmra.mrb[0].mxu0 %v2530
    %v2601 = vpop.f32.mrb[0].mxu0
    %v2602 = vadd.f32 0.0, %v2601
    %v2603 = vpop.f32.mrb[0].mxu0
    %2604 = vdwg.mxu0
    %vm2605 = vcmp.le.f32.partialorder %v2602, 0.0
    %v2606 = vsel %vm2605, 1e-08, %v2602
    %v2607 = vsel %vm2315, %v2606, 0.0
    %2608 = vadd.xlane.f32.xlu0 %v2607
    %v2609 = vpop.xlane.xlu0 %2608
    %v2610 = vrcp.pop %v2609
    %v2611 = vmul.f32 %v2606, %v2610
    %v2612 = vmul.f32 %v2509, -20.0
    %v2613 = vmul.f32 %v2612, 1.442695
    %v2614 = vpow.pop %v2613
    %v2615 = vmul.f32 %v2614, 0.2
    %v2616 = vsel %vm2325, %v2615, 0.0
    %2617 = vadd.xlane.f32.xlu0 %v2616
    %v2618 = vpop.xlane.xlu0 %2617
    %v2619 = vrcp.pop %v2618
    %v2620 = vmul.f32 %v2528, %v2619
    %v2621 = vmul.f32 %v2614, %v2620
    %v2622 = vsel %vm2325, %v2621, 0.0
    %v2623 = vrot.slane %v2622, 4
    %v2624 = vadd.f32 %v2622, %v2623
    %v2625 = vrot.slane %v2624, 2
    %v2626 = vadd.f32 %v2624, %v2625
    %v2627 = vrot.slane %v2626, 1
    %v2628 = vadd.f32 %v2626, %v2627
    %v2629 = vrcp.pop %v2628
    %v2630 = vmul.f32 %v2611, %v2629
    %v2631 = vlaneseq
    %v2632 = vshrl.u32 %v2631, 7
    %v2633 = vsub.s32 0, %v2632
    %v2634 = vrot.slane %v2630, %v2633
    %v2635 = vmul.f32 %v2614, %v2634
    %v2636 = vsel %vm2325, %v2635, 0.0
    %2637 = vadd.xlane.f32.xlu0 %v2636
    %v2638 = vpop.xlane.xlu0 %2637
    %v2639 = vrcp.pop %v2638
    %v2640 = vmul.f32 %v2528, %v2639
    %v2641 = vmul.f32 %v2614, %v2640
    %v2642 = vsel %vm2325, %v2641, 0.0
    %v2643 = vrot.slane %v2642, 4
    %v2644 = vadd.f32 %v2642, %v2643
    %v2645 = vrot.slane %v2644, 2
    %v2646 = vadd.f32 %v2644, %v2645
    %v2647 = vrot.slane %v2646, 1
    %v2648 = vadd.f32 %v2646, %v2647
    %v2649 = vrcp.pop %v2648
    %v2650 = vmul.f32 %v2611, %v2649
    %v2651 = vlaneseq
    %v2652 = vshrl.u32 %v2651, 7
    %v2653 = vsub.s32 0, %v2652
    %v2654 = vrot.slane %v2650, %v2653
    %v2655 = vmul.f32 %v2614, %v2654
    %v2656 = vsel %vm2325, %v2655, 0.0
    %2657 = vadd.xlane.f32.xlu0 %v2656
    %v2658 = vpop.xlane.xlu0 %2657
    %v2659 = vrcp.pop %v2658
    %v2660 = vmul.f32 %v2528, %v2659
    %v2661 = vmul.f32 %v2614, %v2660
    %v2662 = vsel %vm2325, %v2661, 0.0
    %v2663 = vrot.slane %v2662, 4
    %v2664 = vadd.f32 %v2662, %v2663
    %v2665 = vrot.slane %v2664, 2
    %v2666 = vadd.f32 %v2664, %v2665
    %v2667 = vrot.slane %v2666, 1
    %v2668 = vadd.f32 %v2666, %v2667
    %v2669 = vrcp.pop %v2668
    %v2670 = vmul.f32 %v2611, %v2669
    %v2671 = vlaneseq
    %v2672 = vshrl.u32 %v2671, 7
    %v2673 = vsub.s32 0, %v2672
    %v2674 = vrot.slane %v2670, %v2673
    %v2675 = vmul.f32 %v2614, %v2674
    %v2676 = vsel %vm2325, %v2675, 0.0
    %2677 = vadd.xlane.f32.xlu0 %v2676
    %v2678 = vpop.xlane.xlu0 %2677
    %v2679 = vrcp.pop %v2678
    %v2680 = vmul.f32 %v2528, %v2679
    %v2681 = vmul.f32 %v2614, %v2680
    %v2682 = vsel %vm2325, %v2681, 0.0
    %v2683 = vrot.slane %v2682, 4
    %v2684 = vadd.f32 %v2682, %v2683
    %v2685 = vrot.slane %v2684, 2
    %v2686 = vadd.f32 %v2684, %v2685
    %v2687 = vrot.slane %v2686, 1
    %v2688 = vadd.f32 %v2686, %v2687
    %v2689 = vrcp.pop %v2688
    %v2690 = vmul.f32 %v2611, %v2689
    %v2691 = vlaneseq
    %v2692 = vshrl.u32 %v2691, 7
    %v2693 = vsub.s32 0, %v2692
    %v2694 = vrot.slane %v2690, %v2693
    %v2695 = vmul.f32 %v2614, %v2694
    %v2696 = vsel %vm2325, %v2695, 0.0
    %2697 = vadd.xlane.f32.xlu0 %v2696
    %v2698 = vpop.xlane.xlu0 %2697
    %v2699 = vrcp.pop %v2698
    %v2700 = vmul.f32 %v2528, %v2699
    %v2701 = vmul.f32 %v2614, %v2700
    %v2702 = vsel %vm2325, %v2701, 0.0
    %v2703 = vrot.slane %v2702, 4
    %v2704 = vadd.f32 %v2702, %v2703
    %v2705 = vrot.slane %v2704, 2
    %v2706 = vadd.f32 %v2704, %v2705
    %v2707 = vrot.slane %v2706, 1
    %v2708 = vadd.f32 %v2706, %v2707
    %v2709 = vrcp.pop %v2708
    %v2710 = vmul.f32 %v2611, %v2709
    %v2711 = vsub.f32 1.0, %v2509
    %v2712 = vmul.f32 %v2614, %v2711
    %v2713 = vmul.f32 %v2700, %v2712
    %v2714 = vlaneseq
    %v2715 = vshrl.u32 %v2714, 7
    %v2716 = vsub.s32 0, %v2715
    %v2717 = vrot.slane %v2710, %v2716
    %v2718 = vmul.f32 %v2713, %v2717
    %v2719 = vsel %vm2325, %v2718, 0.0
    %2720 = vadd.xlane.f32.xlu0 %v2719
    %v2721 = vpop.xlane.xlu0 %2720
    %v2722 = vsel %vm2227, %v2721, 0.0
    %v2723 = vrot.slane %v2722, 4
    %v2724 = vadd.f32 %v2722, %v2723
    %v2725 = vrot.slane %v2724, 2
    %v2726 = vadd.f32 %v2724, %v2725
    %v2727 = vrot.slane %v2726, 1
    %v2728 = vadd.f32 %v2726, %v2727
    %v2729 = vrot.slane %v386, 1
    %v2731 = vsel %vm2107, %v386, %v2729
    %v2732 = vrot.slane %v696, 1
    %v2734 = vsel %vm2107, %v696, %v2732
    %v2735 = vmul.f32 %v2731, %v2731
    %v2736 = vsel %vm1872, %v2735, 0.0
    %2737 = vadd.xlane.f32.xlu0 %v2736
    %v2738 = vpop.xlane.xlu0 %2737
    %v2739 = vrsqrt.pop %v2738
    %v2740 = vmul.f32 %v2738, %v2739
    %vm2741 = vcmp.eq.f32.partialorder %v2738, inf
    %v2742 = vsel %vm2741, %v2738, %v2740
    %vm2743 = vcmp.eq.f32.partialorder %v2738, 0.0
    %v2744 = vand.u32 %v2738, 2147483648
    %v2745 = vsel %vm2743, %v2744, %v2742
    %v2746 = vmax.f32 %v2745, 1e-12
    %v2747 = vrcp.pop %v2746
    %v2748 = vmul.f32 %v2731, %v2747
    %v2749 = vmul.f32 %v2734, %v2734
    %v2750 = vsel %vm1872, %v2749, 0.0
    %2751 = vadd.xlane.f32.xlu0 %v2750
    %v2752 = vpop.xlane.xlu0 %2751
    %v2753 = vrsqrt.pop %v2752
    %v2754 = vmul.f32 %v2752, %v2753
    %vm2755 = vcmp.eq.f32.partialorder %v2752, inf
    %v2756 = vsel %vm2755, %v2752, %v2754
    %vm2757 = vcmp.eq.f32.partialorder %v2752, 0.0
    %v2758 = vand.u32 %v2752, 2147483648
    %v2759 = vsel %vm2757, %v2758, %v2756
    %v2760 = vmax.f32 %v2759, 1e-12
    %v2761 = vrcp.pop %v2760
    %v2762 = vmul.f32 %v2734, %v2761
    %v2764 = vsel %vm1332, %v2748, 0
    %v2767 = vsel %vm1332, %v2762, 0
    %2769 = vmatprep.subr.mxu0 0.0
    %2770 = vmatpush1.xpose.msra.mxu0 %v2767
    %2771 = vmatprep.subr.mxu0 0.0
    %2772 = vmatpush1.xpose.msra.mxu0 0.0
    %2773 = vmatprep.subr.mxu0 0.0
    %2774 = vmatpush1.xpose.msra.mxu0 0.0
    %2775 = vmatprep.subr.mxu0 0.0
    %2776 = vmatpush1.xpose.msra.mxu0 0.0
    %2777 = vmatprep.subr.mxu0 0.0
    %2778 = vmatpush1.xpose.msra.mxu0 0.0
    %2779 = vmatprep.subr.mxu0 0.0
    %2780 = vmatpush1.xpose.msra.mxu0 0.0
    %2781 = vmatprep.subr.mxu0 0.0
    %2782 = vmatpush1.xpose.msra.mxu0 0.0
    %2783 = vmatprep.subr.mxu0 0.0
    %2784 = vmatpush1.xpose.msra.mxu0 0.0
    %2785 = vmatprep.subr.mxu0 0.0
    %2786 = vmatpush1.xpose.msra.mxu0 0.0
    %2787 = vmatprep.subr.mxu0 0.0
    %2788 = vmatpush1.xpose.msra.mxu0 0.0
    %2789 = vmatprep.subr.mxu0 0.0
    %2790 = vmatpush1.xpose.msra.mxu0 0.0
    %2791 = vmatprep.subr.mxu0 0.0
    %2792 = vmatpush1.xpose.msra.mxu0 0.0
    %2793 = vmatprep.subr.mxu0 0.0
    %2794 = vmatpush1.xpose.msra.mxu0 0.0
    %2795 = vmatprep.subr.mxu0 0.0
    %2796 = vmatpush1.xpose.msra.mxu0 0.0
    %2797 = vmatprep.subr.mxu0 0.0
    %2798 = vmatpush1.xpose.msra.mxu0 0.0
    %2799 = vmatprep.subr.mxu0 0.0
    %2800 = vmatpush1.xpose.msra.mxu0 0.0
    %2801 = vmatprep.subr.mxu0 0.0
    %2802 = vmatpush1.xpose.msra.mxu0 0.0
    %2803 = vmatprep.subr.mxu0 0.0
    %2804 = vmatpush1.xpose.msra.mxu0 0.0
    %2805 = vmatprep.subr.mxu0 0.0
    %2806 = vmatpush1.xpose.msra.mxu0 0.0
    %2807 = vmatprep.subr.mxu0 0.0
    %2808 = vmatpush1.xpose.msra.mxu0 0.0
    %2809 = vmatprep.subr.mxu0 0.0
    %2810 = vmatpush1.xpose.msra.mxu0 0.0
    %2811 = vmatprep.subr.mxu0 0.0
    %2812 = vmatpush1.xpose.msra.mxu0 0.0
    %2813 = vmatprep.subr.mxu0 0.0
    %2814 = vmatpush1.xpose.msra.mxu0 0.0
    %2815 = vmatprep.subr.mxu0 0.0
    %2816 = vmatpush1.xpose.msra.mxu0 0.0
    %2817 = vmatprep.subr.mxu0 0.0
    %2818 = vmatpush1.xpose.msra.mxu0 0.0
    %2819 = vmatprep.subr.mxu0 0.0
    %2820 = vmatpush1.xpose.msra.mxu0 0.0
    %2821 = vmatprep.subr.mxu0 0.0
    %2822 = vmatpush1.xpose.msra.mxu0 0.0
    %2823 = vmatprep.subr.mxu0 0.0
    %2824 = vmatpush1.xpose.msra.mxu0 0.0
    %2825 = vmatprep.subr.mxu0 0.0
    %2826 = vmatpush1.xpose.msra.mxu0 0.0
    %2827 = vmatprep.subr.mxu0 0.0
    %2828 = vmatpush1.xpose.msra.mxu0 0.0
    %2829 = vmatprep.subr.mxu0 0.0
    %2830 = vmatpush1.xpose.msra.mxu0 0.0
    %2831 = vmatprep.subr.mxu0 0.0
    %2832 = vmatpush1.xpose.msra.mxu0 0.0
    %2833 = vmatprep.mubr.f32.mxu0 0.0
    %2834 = vmatmul.mubr.f32.gmra.mrb[0].mxu0 %v2764
    %v2835 = vpop.f32.mrb[0].mxu0
    %v2836 = vadd.f32 0.0, %v2835
    %v2837 = vpop.f32.mrb[0].mxu0
    %2838 = vdwg.mxu0
    %v2839 = vsub.f32 1.0, %v2836
    %v2840 = vlaneseq
    %v2841 = vshrl.u32 %v2840, 7
    %v2842 = vsub.s32 4, %v2841
    %v2843 = vrot.slane %v696, %v2842
    %v2844 = vmul.f32 %v2731, %v2843
    %v2845 = vsel %vm1872, %v2844, 0.0
    %2846 = vadd.xlane.f32.xlu0 %v2845
    %v2847 = vpop.xlane.xlu0 %2846
    %vm2848 = vcmp.le.f32.partialorder %v2847, 0.0
    %v2849 = vsel %vm2848, 1e-08, %v2847
    %v2850 = vsel %vm2227, %v2849, 0.0
    %v2851 = vrot.slane %v2850, 4
    %v2852 = vadd.f32 %v2850, %v2851
    %v2853 = vrot.slane %v2852, 2
    %v2854 = vadd.f32 %v2852, %v2853
    %v2855 = vrot.slane %v2854, 1
    %v2856 = vadd.f32 %v2854, %v2855
    %v2857 = vrcp.pop %v2856
    %v2858 = vmul.f32 %v2849, %v2857
    %v2859 = vsel %vm1332, %v1869, 0
    %v2862 = vsel %vm1332, %v2734, 0
    %2864 = vmatprep.subr.mxu0 0.0
    %2865 = vmatpush1.xpose.msra.mxu0 %v2862
    %2866 = vmatprep.subr.mxu0 0.0
    %2867 = vmatpush1.xpose.msra.mxu0 0.0
    %2868 = vmatprep.subr.mxu0 0.0
    %2869 = vmatpush1.xpose.msra.mxu0 0.0
    %2870 = vmatprep.subr.mxu0 0.0
    %2871 = vmatpush1.xpose.msra.mxu0 0.0
    %2872 = vmatprep.subr.mxu0 0.0
    %2873 = vmatpush1.xpose.msra.mxu0 0.0
    %2874 = vmatprep.subr.mxu0 0.0
    %2875 = vmatpush1.xpose.msra.mxu0 0.0
    %2876 = vmatprep.subr.mxu0 0.0
    %2877 = vmatpush1.xpose.msra.mxu0 0.0
    %2878 = vmatprep.subr.mxu0 0.0
    %2879 = vmatpush1.xpose.msra.mxu0 0.0
    %2880 = vmatprep.subr.mxu0 0.0
    %2881 = vmatpush1.xpose.msra.mxu0 0.0
    %2882 = vmatprep.subr.mxu0 0.0
    %2883 = vmatpush1.xpose.msra.mxu0 0.0
    %2884 = vmatprep.subr.mxu0 0.0
    %2885 = vmatpush1.xpose.msra.mxu0 0.0
    %2886 = vmatprep.subr.mxu0 0.0
    %2887 = vmatpush1.xpose.msra.mxu0 0.0
    %2888 = vmatprep.subr.mxu0 0.0
    %2889 = vmatpush1.xpose.msra.mxu0 0.0
    %2890 = vmatprep.subr.mxu0 0.0
    %2891 = vmatpush1.xpose.msra.mxu0 0.0
    %2892 = vmatprep.subr.mxu0 0.0
    %2893 = vmatpush1.xpose.msra.mxu0 0.0
    %2894 = vmatprep.subr.mxu0 0.0
    %2895 = vmatpush1.xpose.msra.mxu0 0.0
    %2896 = vmatprep.subr.mxu0 0.0
    %2897 = vmatpush1.xpose.msra.mxu0 0.0
    %2898 = vmatprep.subr.mxu0 0.0
    %2899 = vmatpush1.xpose.msra.mxu0 0.0
    %2900 = vmatprep.subr.mxu0 0.0
    %2901 = vmatpush1.xpose.msra.mxu0 0.0
    %2902 = vmatprep.subr.mxu0 0.0
    %2903 = vmatpush1.xpose.msra.mxu0 0.0
    %2904 = vmatprep.subr.mxu0 0.0
    %2905 = vmatpush1.xpose.msra.mxu0 0.0
    %2906 = vmatprep.subr.mxu0 0.0
    %2907 = vmatpush1.xpose.msra.mxu0 0.0
    %2908 = vmatprep.subr.mxu0 0.0
    %2909 = vmatpush1.xpose.msra.mxu0 0.0
    %2910 = vmatprep.subr.mxu0 0.0
    %2911 = vmatpush1.xpose.msra.mxu0 0.0
    %2912 = vmatprep.subr.mxu0 0.0
    %2913 = vmatpush1.xpose.msra.mxu0 0.0
    %2914 = vmatprep.subr.mxu0 0.0
    %2915 = vmatpush1.xpose.msra.mxu0 0.0
    %2916 = vmatprep.subr.mxu0 0.0
    %2917 = vmatpush1.xpose.msra.mxu0 0.0
    %2918 = vmatprep.subr.mxu0 0.0
    %2919 = vmatpush1.xpose.msra.mxu0 0.0
    %2920 = vmatprep.subr.mxu0 0.0
    %2921 = vmatpush1.xpose.msra.mxu0 0.0
    %2922 = vmatprep.subr.mxu0 0.0
    %2923 = vmatpush1.xpose.msra.mxu0 0.0
    %2924 = vmatprep.subr.mxu0 0.0
    %2925 = vmatpush1.xpose.msra.mxu0 0.0
    %2926 = vmatprep.subr.mxu0 0.0
    %2927 = vmatpush1.xpose.msra.mxu0 0.0
    %2928 = vmatprep.mubr.f32.mxu0 0.0
    %2929 = vmatmul.mubr.f32.gmra.mrb[0].mxu0 %v2859
    %v2930 = vpop.f32.mrb[0].mxu0
    %v2931 = vadd.f32 0.0, %v2930
    %v2932 = vpop.f32.mrb[0].mxu0
    %2933 = vdwg.mxu0
    %vm2934 = vcmp.le.f32.partialorder %v2931, 0.0
    %v2935 = vsel %vm2934, 1e-08, %v2931
    %v2936 = vsel %vm2315, %v2935, 0.0
    %2937 = vadd.xlane.f32.xlu0 %v2936
    %v2938 = vpop.xlane.xlu0 %2937
    %v2939 = vrcp.pop %v2938
    %v2940 = vmul.f32 %v2935, %v2939
    %v2941 = vmul.f32 %v2839, -20.0
    %v2942 = vmul.f32 %v2941, 1.442695
    %v2943 = vpow.pop %v2942
    %v2944 = vmul.f32 %v2943, 0.2
    %v2945 = vsel %vm2325, %v2944, 0.0
    %2946 = vadd.xlane.f32.xlu0 %v2945
    %v2947 = vpop.xlane.xlu0 %2946
    %v2948 = vrcp.pop %v2947
    %v2949 = vmul.f32 %v2858, %v2948
    %v2950 = vmul.f32 %v2943, %v2949
    %v2951 = vsel %vm2325, %v2950, 0.0
    %v2952 = vrot.slane %v2951, 4
    %v2953 = vadd.f32 %v2951, %v2952
    %v2954 = vrot.slane %v2953, 2
    %v2955 = vadd.f32 %v2953, %v2954
    %v2956 = vrot.slane %v2955, 1
    %v2957 = vadd.f32 %v2955, %v2956
    %v2958 = vrcp.pop %v2957
    %v2959 = vmul.f32 %v2940, %v2958
    %v2960 = vlaneseq
    %v2961 = vshrl.u32 %v2960, 7
    %v2962 = vsub.s32 0, %v2961
    %v2963 = vrot.slane %v2959, %v2962
    %v2964 = vmul.f32 %v2943, %v2963
    %v2965 = vsel %vm2325, %v2964, 0.0
    %2966 = vadd.xlane.f32.xlu0 %v2965
    %v2967 = vpop.xlane.xlu0 %2966
    %v2968 = vrcp.pop %v2967
    %v2969 = vmul.f32 %v2858, %v2968
    %v2970 = vmul.f32 %v2943, %v2969
    %v2971 = vsel %vm2325, %v2970, 0.0
    %v2972 = vrot.slane %v2971, 4
    %v2973 = vadd.f32 %v2971, %v2972
    %v2974 = vrot.slane %v2973, 2
    %v2975 = vadd.f32 %v2973, %v2974
    %v2976 = vrot.slane %v2975, 1
    %v2977 = vadd.f32 %v2975, %v2976
    %v2978 = vrcp.pop %v2977
    %v2979 = vmul.f32 %v2940, %v2978
    %v2980 = vlaneseq
    %v2981 = vshrl.u32 %v2980, 7
    %v2982 = vsub.s32 0, %v2981
    %v2983 = vrot.slane %v2979, %v2982
    %v2984 = vmul.f32 %v2943, %v2983
    %v2985 = vsel %vm2325, %v2984, 0.0
    %2986 = vadd.xlane.f32.xlu0 %v2985
    %v2987 = vpop.xlane.xlu0 %2986
    %v2988 = vrcp.pop %v2987
    %v2989 = vmul.f32 %v2858, %v2988
    %v2990 = vmul.f32 %v2943, %v2989
    %v2991 = vsel %vm2325, %v2990, 0.0
    %v2992 = vrot.slane %v2991, 4
    %v2993 = vadd.f32 %v2991, %v2992
    %v2994 = vrot.slane %v2993, 2
    %v2995 = vadd.f32 %v2993, %v2994
    %v2996 = vrot.slane %v2995, 1
    %v2997 = vadd.f32 %v2995, %v2996
    %v2998 = vrcp.pop %v2997
    %v2999 = vmul.f32 %v2940, %v2998
    %v3000 = vlaneseq
    %v3001 = vshrl.u32 %v3000, 7
    %v3002 = vsub.s32 0, %v3001
    %v3003 = vrot.slane %v2999, %v3002
    %v3004 = vmul.f32 %v2943, %v3003
    %v3005 = vsel %vm2325, %v3004, 0.0
    %3006 = vadd.xlane.f32.xlu0 %v3005
    %v3007 = vpop.xlane.xlu0 %3006
    %v3008 = vrcp.pop %v3007
    %v3009 = vmul.f32 %v2858, %v3008
    %v3010 = vmul.f32 %v2943, %v3009
    %v3011 = vsel %vm2325, %v3010, 0.0
    %v3012 = vrot.slane %v3011, 4
    %v3013 = vadd.f32 %v3011, %v3012
    %v3014 = vrot.slane %v3013, 2
    %v3015 = vadd.f32 %v3013, %v3014
    %v3016 = vrot.slane %v3015, 1
    %v3017 = vadd.f32 %v3015, %v3016
    %v3018 = vrcp.pop %v3017
    %v3019 = vmul.f32 %v2940, %v3018
    %v3020 = vlaneseq
    %v3021 = vshrl.u32 %v3020, 7
    %v3022 = vsub.s32 0, %v3021
    %v3023 = vrot.slane %v3019, %v3022
    %v3024 = vmul.f32 %v2943, %v3023
    %v3025 = vsel %vm2325, %v3024, 0.0
    %3026 = vadd.xlane.f32.xlu0 %v3025
    %v3027 = vpop.xlane.xlu0 %3026
    %v3028 = vrcp.pop %v3027
    %v3029 = vmul.f32 %v2858, %v3028
    %v3030 = vmul.f32 %v2943, %v3029
    %v3031 = vsel %vm2325, %v3030, 0.0
    %v3032 = vrot.slane %v3031, 4
    %v3033 = vadd.f32 %v3031, %v3032
    %v3034 = vrot.slane %v3033, 2
    %v3035 = vadd.f32 %v3033, %v3034
    %v3036 = vrot.slane %v3035, 1
    %v3037 = vadd.f32 %v3035, %v3036
    %v3038 = vrcp.pop %v3037
    %v3039 = vmul.f32 %v2940, %v3038
    %v3040 = vsub.f32 1.0, %v2839
    %v3041 = vmul.f32 %v2943, %v3040
    %v3042 = vmul.f32 %v3029, %v3041
    %v3043 = vlaneseq
    %v3044 = vshrl.u32 %v3043, 7
    %v3045 = vsub.s32 0, %v3044
    %v3046 = vrot.slane %v3039, %v3045
    %v3047 = vmul.f32 %v3042, %v3046
    %v3048 = vsel %vm2325, %v3047, 0.0
    %3049 = vadd.xlane.f32.xlu0 %v3048
    %v3050 = vpop.xlane.xlu0 %3049
    %v3051 = vsel %vm2227, %v3050, 0.0
    %v3052 = vrot.slane %v3051, 4
    %v3053 = vadd.f32 %v3051, %v3052
    %v3054 = vrot.slane %v3053, 2
    %v3055 = vadd.f32 %v3053, %v3054
    %v3056 = vrot.slane %v3055, 1
    %v3057 = vadd.f32 %v3055, %v3056
    %3058 = vmatprep.subr.mxu0 0.0
    %3059 = vmatpush1.xpose.msra.mxu0 %v2764
    %3060 = vmatprep.subr.mxu0 0.0
    %3061 = vmatpush1.xpose.msra.mxu0 0.0
    %3062 = vmatprep.subr.mxu0 0.0
    %3063 = vmatpush1.xpose.msra.mxu0 0.0
    %3064 = vmatprep.subr.mxu0 0.0
    %3065 = vmatpush1.xpose.msra.mxu0 0.0
    %3066 = vmatprep.subr.mxu0 0.0
    %3067 = vmatpush1.xpose.msra.mxu0 0.0
    %3068 = vmatprep.subr.mxu0 0.0
    %3069 = vmatpush1.xpose.msra.mxu0 0.0
    %3070 = vmatprep.subr.mxu0 0.0
    %3071 = vmatpush1.xpose.msra.mxu0 0.0
    %3072 = vmatprep.subr.mxu0 0.0
    %3073 = vmatpush1.xpose.msra.mxu0 0.0
    %3074 = vmatprep.subr.mxu0 0.0
    %3075 = vmatpush1.xpose.msra.mxu0 0.0
    %3076 = vmatprep.subr.mxu0 0.0
    %3077 = vmatpush1.xpose.msra.mxu0 0.0
    %3078 = vmatprep.subr.mxu0 0.0
    %3079 = vmatpush1.xpose.msra.mxu0 0.0
    %3080 = vmatprep.subr.mxu0 0.0
    %3081 = vmatpush1.xpose.msra.mxu0 0.0
    %3082 = vmatprep.subr.mxu0 0.0
    %3083 = vmatpush1.xpose.msra.mxu0 0.0
    %3084 = vmatprep.subr.mxu0 0.0
    %3085 = vmatpush1.xpose.msra.mxu0 0.0
    %3086 = vmatprep.subr.mxu0 0.0
    %3087 = vmatpush1.xpose.msra.mxu0 0.0
    %3088 = vmatprep.subr.mxu0 0.0
    %3089 = vmatpush1.xpose.msra.mxu0 0.0
    %3090 = vmatprep.subr.mxu0 0.0
    %3091 = vmatpush1.xpose.msra.mxu0 0.0
    %3092 = vmatprep.subr.mxu0 0.0
    %3093 = vmatpush1.xpose.msra.mxu0 0.0
    %3094 = vmatprep.subr.mxu0 0.0
    %3095 = vmatpush1.xpose.msra.mxu0 0.0
    %3096 = vmatprep.subr.mxu0 0.0
    %3097 = vmatpush1.xpose.msra.mxu0 0.0
    %3098 = vmatprep.subr.mxu0 0.0
    %3099 = vmatpush1.xpose.msra.mxu0 0.0
    %3100 = vmatprep.subr.mxu0 0.0
    %3101 = vmatpush1.xpose.msra.mxu0 0.0
    %3102 = vmatprep.subr.mxu0 0.0
    %3103 = vmatpush1.xpose.msra.mxu0 0.0
    %3104 = vmatprep.subr.mxu0 0.0
    %3105 = vmatpush1.xpose.msra.mxu0 0.0
    %3106 = vmatprep.subr.mxu0 0.0
    %3107 = vmatpush1.xpose.msra.mxu0 0.0
    %3108 = vmatprep.subr.mxu0 0.0
    %3109 = vmatpush1.xpose.msra.mxu0 0.0
    %3110 = vmatprep.subr.mxu0 0.0
    %3111 = vmatpush1.xpose.msra.mxu0 0.0
    %3112 = vmatprep.subr.mxu0 0.0
    %3113 = vmatpush1.xpose.msra.mxu0 0.0
    %3114 = vmatprep.subr.mxu0 0.0
    %3115 = vmatpush1.xpose.msra.mxu0 0.0
    %3116 = vmatprep.subr.mxu0 0.0
    %3117 = vmatpush1.xpose.msra.mxu0 0.0
    %3118 = vmatprep.subr.mxu0 0.0
    %3119 = vmatpush1.xpose.msra.mxu0 0.0
    %3120 = vmatprep.subr.mxu0 0.0
    %3121 = vmatpush1.xpose.msra.mxu0 0.0
    %3122 = vmatprep.mubr.f32.mxu0 0.0
    %3123 = vmatmul.mubr.f32.gmra.mrb[0].mxu0 %v2767
    %v3124 = vpop.f32.mrb[0].mxu0
    %v3125 = vadd.f32 0.0, %v3124
    %v3126 = vpop.f32.mrb[0].mxu0
    %3127 = vdwg.mxu0
    %v3128 = vsub.f32 1.0, %v3125
    %v3129 = vlaneseq
    %v3130 = vshrl.u32 %v3129, 7
    %v3131 = vsub.s32 4, %v3130
    %v3132 = vrot.slane %v386, %v3131
    %v3133 = vmul.f32 %v2734, %v3132
    %v3134 = vsel %vm1872, %v3133, 0.0
    %3135 = vadd.xlane.f32.xlu0 %v3134
    %v3136 = vpop.xlane.xlu0 %3135
    %vm3137 = vcmp.le.f32.partialorder %v3136, 0.0
    %v3138 = vsel %vm3137, 1e-08, %v3136
    %v3139 = vsel %vm2227, %v3138, 0.0
    %v3140 = vrot.slane %v3139, 4
    %v3141 = vadd.f32 %v3139, %v3140
    %v3142 = vrot.slane %v3141, 2
    %v3143 = vadd.f32 %v3141, %v3142
    %v3144 = vrot.slane %v3143, 1
    %v3145 = vadd.f32 %v3143, %v3144
    %v3146 = vrcp.pop %v3145
    %v3147 = vmul.f32 %v3138, %v3146
    %v3148 = vsel %vm1332, %v1994, 0
    %v3151 = vsel %vm1332, %v2731, 0
    %3153 = vmatprep.subr.mxu0 0.0
    %3154 = vmatpush1.xpose.msra.mxu0 %v3151
    %3155 = vmatprep.subr.mxu0 0.0
    %3156 = vmatpush1.xpose.msra.mxu0 0.0
    %3157 = vmatprep.subr.mxu0 0.0
    %3158 = vmatpush1.xpose.msra.mxu0 0.0
    %3159 = vmatprep.subr.mxu0 0.0
    %3160 = vmatpush1.xpose.msra.mxu0 0.0
    %3161 = vmatprep.subr.mxu0 0.0
    %3162 = vmatpush1.xpose.msra.mxu0 0.0
    %3163 = vmatprep.subr.mxu0 0.0
    %3164 = vmatpush1.xpose.msra.mxu0 0.0
    %3165 = vmatprep.subr.mxu0 0.0
    %3166 = vmatpush1.xpose.msra.mxu0 0.0
    %3167 = vmatprep.subr.mxu0 0.0
    %3168 = vmatpush1.xpose.msra.mxu0 0.0
    %3169 = vmatprep.subr.mxu0 0.0
    %3170 = vmatpush1.xpose.msra.mxu0 0.0
    %3171 = vmatprep.subr.mxu0 0.0
    %3172 = vmatpush1.xpose.msra.mxu0 0.0
    %3173 = vmatprep.subr.mxu0 0.0
    %3174 = vmatpush1.xpose.msra.mxu0 0.0
    %3175 = vmatprep.subr.mxu0 0.0
    %3176 = vmatpush1.xpose.msra.mxu0 0.0
    %3177 = vmatprep.subr.mxu0 0.0
    %3178 = vmatpush1.xpose.msra.mxu0 0.0
    %3179 = vmatprep.subr.mxu0 0.0
    %3180 = vmatpush1.xpose.msra.mxu0 0.0
    %3181 = vmatprep.subr.mxu0 0.0
    %3182 = vmatpush1.xpose.msra.mxu0 0.0
    %3183 = vmatprep.subr.mxu0 0.0
    %3184 = vmatpush1.xpose.msra.mxu0 0.0
    %3185 = vmatprep.subr.mxu0 0.0
    %3186 = vmatpush1.xpose.msra.mxu0 0.0
    %3187 = vmatprep.subr.mxu0 0.0
    %3188 = vmatpush1.xpose.msra.mxu0 0.0
    %3189 = vmatprep.subr.mxu0 0.0
    %3190 = vmatpush1.xpose.msra.mxu0 0.0
    %3191 = vmatprep.subr.mxu0 0.0
    %3192 = vmatpush1.xpose.msra.mxu0 0.0
    %3193 = vmatprep.subr.mxu0 0.0
    %3194 = vmatpush1.xpose.msra.mxu0 0.0
    %3195 = vmatprep.subr.mxu0 0.0
    %3196 = vmatpush1.xpose.msra.mxu0 0.0
    %3197 = vmatprep.subr.mxu0 0.0
    %3198 = vmatpush1.xpose.msra.mxu0 0.0
    %3199 = vmatprep.subr.mxu0 0.0
    %3200 = vmatpush1.xpose.msra.mxu0 0.0
    %3201 = vmatprep.subr.mxu0 0.0
    %3202 = vmatpush1.xpose.msra.mxu0 0.0
    %3203 = vmatprep.subr.mxu0 0.0
    %3204 = vmatpush1.xpose.msra.mxu0 0.0
    %3205 = vmatprep.subr.mxu0 0.0
    %3206 = vmatpush1.xpose.msra.mxu0 0.0
    %3207 = vmatprep.subr.mxu0 0.0
    %3208 = vmatpush1.xpose.msra.mxu0 0.0
    %3209 = vmatprep.subr.mxu0 0.0
    %3210 = vmatpush1.xpose.msra.mxu0 0.0
    %3211 = vmatprep.subr.mxu0 0.0
    %3212 = vmatpush1.xpose.msra.mxu0 0.0
    %3213 = vmatprep.subr.mxu0 0.0
    %3214 = vmatpush1.xpose.msra.mxu0 0.0
    %3215 = vmatprep.subr.mxu0 0.0
    %3216 = vmatpush1.xpose.msra.mxu0 0.0
    %3217 = vmatprep.mubr.f32.mxu0 0.0
    %3218 = vmatmul.mubr.f32.gmra.mrb[0].mxu0 %v3148
    %v3219 = vpop.f32.mrb[0].mxu0
    %v3220 = vadd.f32 0.0, %v3219
    %v3221 = vpop.f32.mrb[0].mxu0
    %3222 = vdwg.mxu0
    %vm3223 = vcmp.le.f32.partialorder %v3220, 0.0
    %v3224 = vsel %vm3223, 1e-08, %v3220
    %v3225 = vsel %vm2315, %v3224, 0.0
    %3226 = vadd.xlane.f32.xlu0 %v3225
    %v3227 = vpop.xlane.xlu0 %3226
    %v3228 = vrcp.pop %v3227
    %v3229 = vmul.f32 %v3224, %v3228
    %v3230 = vmul.f32 %v3128, -20.0
    %v3231 = vmul.f32 %v3230, 1.442695
    %v3232 = vpow.pop %v3231
    %v3233 = vmul.f32 %v3232, 0.2
    %v3234 = vsel %vm2325, %v3233, 0.0
    %3235 = vadd.xlane.f32.xlu0 %v3234
    %v3236 = vpop.xlane.xlu0 %3235
    %v3237 = vrcp.pop %v3236
    %v3238 = vmul.f32 %v3147, %v3237
    %v3239 = vmul.f32 %v3232, %v3238
    %v3240 = vsel %vm2325, %v3239, 0.0
    %v3241 = vrot.slane %v3240, 4
    %v3242 = vadd.f32 %v3240, %v3241
    %v3243 = vrot.slane %v3242, 2
    %v3244 = vadd.f32 %v3242, %v3243
    %v3245 = vrot.slane %v3244, 1
    %v3246 = vadd.f32 %v3244, %v3245
    %v3247 = vrcp.pop %v3246
    %v3248 = vmul.f32 %v3229, %v3247
    %v3249 = vlaneseq
    %v3250 = vshrl.u32 %v3249, 7
    %v3251 = vsub.s32 0, %v3250
    %v3252 = vrot.slane %v3248, %v3251
    %v3253 = vmul.f32 %v3232, %v3252
    %v3254 = vsel %vm2325, %v3253, 0.0
    %3255 = vadd.xlane.f32.xlu0 %v3254
    %v3256 = vpop.xlane.xlu0 %3255
    %v3257 = vrcp.pop %v3256
    %v3258 = vmul.f32 %v3147, %v3257
    %v3259 = vmul.f32 %v3232, %v3258
    %v3260 = vsel %vm2325, %v3259, 0.0
    %v3261 = vrot.slane %v3260, 4
    %v3262 = vadd.f32 %v3260, %v3261
    %v3263 = vrot.slane %v3262, 2
    %v3264 = vadd.f32 %v3262, %v3263
    %v3265 = vrot.slane %v3264, 1
    %v3266 = vadd.f32 %v3264, %v3265
    %v3267 = vrcp.pop %v3266
    %v3268 = vmul.f32 %v3229, %v3267
    %v3269 = vlaneseq
    %v3270 = vshrl.u32 %v3269, 7
    %v3271 = vsub.s32 0, %v3270
    %v3272 = vrot.slane %v3268, %v3271
    %v3273 = vmul.f32 %v3232, %v3272
    %v3274 = vsel %vm2325, %v3273, 0.0
    %3275 = vadd.xlane.f32.xlu0 %v3274
    %v3276 = vpop.xlane.xlu0 %3275
    %v3277 = vrcp.pop %v3276
    %v3278 = vmul.f32 %v3147, %v3277
    %v3279 = vmul.f32 %v3232, %v3278
    %v3280 = vsel %vm2325, %v3279, 0.0
    %v3281 = vrot.slane %v3280, 4
    %v3282 = vadd.f32 %v3280, %v3281
    %v3283 = vrot.slane %v3282, 2
    %v3284 = vadd.f32 %v3282, %v3283
    %v3285 = vrot.slane %v3284, 1
    %v3286 = vadd.f32 %v3284, %v3285
    %v3287 = vrcp.pop %v3286
    %v3288 = vmul.f32 %v3229, %v3287
    %v3289 = vlaneseq
    %v3290 = vshrl.u32 %v3289, 7
    %v3291 = vsub.s32 0, %v3290
    %v3292 = vrot.slane %v3288, %v3291
    %v3293 = vmul.f32 %v3232, %v3292
    %v3294 = vsel %vm2325, %v3293, 0.0
    %3295 = vadd.xlane.f32.xlu0 %v3294
    %v3296 = vpop.xlane.xlu0 %3295
    %v3297 = vrcp.pop %v3296
    %v3298 = vmul.f32 %v3147, %v3297
    %v3299 = vmul.f32 %v3232, %v3298
    %v3300 = vsel %vm2325, %v3299, 0.0
    %v3301 = vrot.slane %v3300, 4
    %v3302 = vadd.f32 %v3300, %v3301
    %v3303 = vrot.slane %v3302, 2
    %v3304 = vadd.f32 %v3302, %v3303
    %v3305 = vrot.slane %v3304, 1
    %v3306 = vadd.f32 %v3304, %v3305
    %v3307 = vrcp.pop %v3306
    %v3308 = vmul.f32 %v3229, %v3307
    %v3309 = vlaneseq
    %v3310 = vshrl.u32 %v3309, 7
    %v3311 = vsub.s32 0, %v3310
    %v3312 = vrot.slane %v3308, %v3311
    %v3313 = vmul.f32 %v3232, %v3312
    %v3314 = vsel %vm2325, %v3313, 0.0
    %3315 = vadd.xlane.f32.xlu0 %v3314
    %v3316 = vpop.xlane.xlu0 %3315
    %v3317 = vrcp.pop %v3316
    %v3318 = vmul.f32 %v3147, %v3317
    %v3319 = vmul.f32 %v3232, %v3318
    %v3320 = vsel %vm2325, %v3319, 0.0
    %v3321 = vrot.slane %v3320, 4
    %v3322 = vadd.f32 %v3320, %v3321
    %v3323 = vrot.slane %v3322, 2
    %v3324 = vadd.f32 %v3322, %v3323
    %v3325 = vrot.slane %v3324, 1
    %v3326 = vadd.f32 %v3324, %v3325
    %v3327 = vrcp.pop %v3326
    %v3328 = vmul.f32 %v3229, %v3327
    %v3329 = vsub.f32 1.0, %v3128
    %v3330 = vmul.f32 %v3232, %v3329
    %v3331 = vmul.f32 %v3318, %v3330
    %v3332 = vlaneseq
    %v3333 = vshrl.u32 %v3332, 7
    %v3334 = vsub.s32 0, %v3333
    %v3335 = vrot.slane %v3328, %v3334
    %v3336 = vmul.f32 %v3331, %v3335
    %v3337 = vsel %vm2325, %v3336, 0.0
    %3338 = vadd.xlane.f32.xlu0 %v3337
    %v3339 = vpop.xlane.xlu0 %3338
    %v3340 = vsel %vm2227, %v3339, 0.0
    %v3341 = vrot.slane %v3340, 4
    %v3342 = vadd.f32 %v3340, %v3341
    %v3343 = vrot.slane %v3342, 2
    %v3344 = vadd.f32 %v3342, %v3343
    %v3345 = vrot.slane %v3344, 1
    %v3346 = vadd.f32 %v3344, %v3345
    %v3347 = vsel %vm1308, %v2438, %v3057
    %v3348 = vsel %vm1308, %v2728, %v3346
    %vm3349 = vcmask 1024
    %3350 = vst.msk [vmem:[%s22] sm:$0x3] %vm3349, %v3347
    %3351 = vst.msk [vmem:[%s23] sm:$0x3] %vm3349, %v3348
    %v3352 = vmul.f32 %v3347, 2.5
    %v3353 = vmul.f32 %v3352, 1.442695
    %v3354 = vpow.pop %v3353
    %v3355 = vlog2.pop %v3354
    %v3356 = vmul.f32 %v3355, 0.6931472
    %v3357 = vsub.f32 0.0, %v3356
    %3358 = vst.msk [vmem:[%s20] sm:$0x3] %vm3349, %v3357
    %v3359 = vmul.f32 %v3348, 2.5
    %v3360 = vmul.f32 %v3359, 1.442695
    %v3361 = vpow.pop %v3360
    %v3362 = vlog2.pop %v3361
    %v3363 = vmul.f32 %v3362, 0.6931472
    %v3364 = vsub.f32 0.0, %v3363
    %3365 = vst.msk [vmem:[%s21] sm:$0x3] %vm3349, %v3364
    // Predicated region
    $region66: #{tpu_custom_call.1} parent=1 // pred_check
      _
    $region67: #{tpu_custom_call.1} parent=1 // pred_check_branch
      %3367 = sbr.rel (0) target = $region69
    $region68: #{tpu_custom_call.1} parent=1 // pred_region
      %s3369 = ssub.s32 32, 32
      %3370 = vsyncadd [#allocation4], %s3369
      %s3372 = sshll.u32 [#allocation3], 4
      %s3373 = int_to_ptr.vmem [resolvable:$true] %s3372
      %3375 = dma.vmem_to_hbm [thread:$0]  %s3373, 32, %s16, [#allocation4]
    $region69: #{tpu_custom_call.1} parent=1 // pred_fallthru
      _
    // Predicated region
    $region70: #{tpu_custom_call.1} parent=1 // pred_check
      _
    $region71: #{tpu_custom_call.1} parent=1 // pred_check_branch
      %3377 = sbr.rel (0) target = $region73
    $region72: #{tpu_custom_call.1} parent=1 // pred_region
      %s3379 = ssub.s32 32, 32
      %3380 = vsyncadd [#allocation6], %s3379
      %s3382 = sshll.u32 [#allocation5], 4
      %s3383 = int_to_ptr.vmem [resolvable:$true] %s3382
      %3385 = dma.vmem_to_hbm [thread:$0]  %s3383, 32, %s17, [#allocation6]
    $region73: #{tpu_custom_call.1} parent=1 // pred_fallthru
      _
    // Predicated region
    $region74: #{tpu_custom_call.1} parent=1 // pred_check
      _
    $region75: #{tpu_custom_call.1} parent=1 // pred_check_branch
      %3387 = sbr.rel (0) target = $region77
    $region76: #{tpu_custom_call.1} parent=1 // pred_region
      _
    $region77: #{tpu_custom_call.1} parent=1 // pred_fallthru
      _
    // Predicated region
    $region78: #{tpu_custom_call.1} parent=1 // pred_check
      _
    $region79: #{tpu_custom_call.1} parent=1 // pred_check_branch
      %3389 = sbr.rel (0) target = $region81
    $region80: #{tpu_custom_call.1} parent=1 // pred_region
      _
    $region81: #{tpu_custom_call.1} parent=1 // pred_fallthru
      _
    // Predicated region
    $region82: #{tpu_custom_call.1} parent=1 // pred_check
      _
    $region83: #{tpu_custom_call.1} parent=1 // pred_check_branch
      %3391 = sbr.rel (0) target = $region85
    $region84: #{tpu_custom_call.1} parent=1 // pred_region
      _
    $region85: #{tpu_custom_call.1} parent=1 // pred_fallthru
      _
    // Predicated region
    $region86: #{tpu_custom_call.1} parent=1 // pred_check
      _
    $region87: #{tpu_custom_call.1} parent=1 // pred_check_branch
      %3393 = sbr.rel (0) target = $region89
    $region88: #{tpu_custom_call.1} parent=1 // pred_region
      _
    $region89: #{tpu_custom_call.1} parent=1 // pred_fallthru
      _
    // Predicated region
    $region90: #{tpu_custom_call.1} parent=1 // pred_check
      _
    $region91: #{tpu_custom_call.1} parent=1 // pred_check_branch
      %3395 = sbr.rel (0) target = $region93
    $region92: #{tpu_custom_call.1} parent=1 // pred_region
      _
    $region93: #{tpu_custom_call.1} parent=1 // pred_fallthru
      _
    // Predicated region
    $region94: #{tpu_custom_call.1} parent=1 // pred_check
      _
    $region95: #{tpu_custom_call.1} parent=1 // pred_check_branch
      %3397 = sbr.rel (0) target = $region97
    $region96: #{tpu_custom_call.1} parent=1 // pred_region
      _
    $region97: #{tpu_custom_call.1} parent=1 // pred_fallthru
      _
    // Predicated region
    $region98: #{tpu_custom_call.1} parent=1 // pred_check
      _
    $region99: #{tpu_custom_call.1} parent=1 // pred_check_branch
      %3399 = sbr.rel (0) target = $region101
    $region100: #{tpu_custom_call.1} parent=1 // pred_region
      %3400 = dma.done [#allocation4], 32
    $region101: #{tpu_custom_call.1} parent=1 // pred_fallthru
      _
    // Predicated region
    $region102: #{tpu_custom_call.1} parent=1 // pred_check
      _
    $region103: #{tpu_custom_call.1} parent=1 // pred_check_branch
      %3402 = sbr.rel (0) target = $region105
    $region104: #{tpu_custom_call.1} parent=1 // pred_region
      %3403 = dma.done [#allocation6], 32
    $region105: #{tpu_custom_call.1} parent=1 // pred_fallthru
      _
    // Predicated region
    $region106: #{tpu_custom_call.1} parent=1 // pred_check
      _
    $region107: #{tpu_custom_call.1} parent=1 // pred_check_branch
      %3405 = sbr.rel (0) target = $region109
    $region108: #{tpu_custom_call.1} parent=1 // pred_region
      _
    $region109: #{tpu_custom_call.1} parent=1 // pred_fallthru
      _
    // Predicated region
    $region110: #{tpu_custom_call.1} parent=1 // pred_check
      _
    $region111: #{tpu_custom_call.1} parent=1 // pred_check_branch
      %3407 = sbr.rel (0) target = $region113
    $region112: #{tpu_custom_call.1} parent=1 // pred_region
      _
    $region113: #{tpu_custom_call.1} parent=1 // pred_fallthru
      _
    // Predicated region
    $region114: #{tpu_custom_call.1} parent=1 // pred_check
      _
    $region115: #{tpu_custom_call.1} parent=1 // pred_check_branch
      %3409 = sbr.rel (0) target = $region117
    $region116: #{tpu_custom_call.1} parent=1 // pred_region
      _
    $region117: #{tpu_custom_call.1} parent=1 // pred_fallthru
      _
    // Predicated region
    $region118: #{tpu_custom_call.1} parent=1 // pred_check
      _
    $region119: #{tpu_custom_call.1} parent=1 // pred_check_branch
      %3411 = sbr.rel (0) target = $region121
    $region120: #{tpu_custom_call.1} parent=1 // pred_region
      _
    $region121: #{tpu_custom_call.1} parent=1 // pred_fallthru
      _
    // Predicated region
    $region122: #{tpu_custom_call.1} parent=1 // pred_check
      _
    $region123: #{tpu_custom_call.1} parent=1 // pred_check_branch
      %3413 = sbr.rel (0) target = $region125
    $region124: #{tpu_custom_call.1} parent=1 // pred_region
      _
    $region125: #{tpu_custom_call.1} parent=1 // pred_fallthru
      _
    // Predicated region
    $region126: #{tpu_custom_call.1} parent=1 // pred_check
      _
    $region127: #{tpu_custom_call.1} parent=1 // pred_check_branch
      %3415 = sbr.rel (0) target = $region129
    $region128: #{tpu_custom_call.1} parent=1 // pred_region
      _
    $region129: #{tpu_custom_call.1} parent=1 // pred_fallthru
      _
    %3416 = vsyncpa [#allocation4], 1
    %3417 = vsyncpa [#allocation6], 1

</llo_original>
